<compile_context>
chip_gen: v6e
topology: v6e:2x2x1
jax: 0.10.0
libtpu: 0.0.40
codegen_flags: <defaults>
</compile_context>

<pallas_src>
import jax
import jax.numpy as jnp
from jax import lax
from jax.experimental import pallas as pl
from jax.experimental.pallas import tpu as pltpu

# Model hyper-parameters (input_shape must be divisible by 6, as in the module)
L_IN = 48                  # input_shape
K1, C1 = 7, 32             # conv1: Conv1d(1, 32, kernel_size=7, padding=3)
K2, C2 = 5, 64             # conv2: Conv1d(32, 64, kernel_size=5, padding=2)
P2 = K2 // 2               # conv2 padding (= 2)
L1 = L_IN // 3             # after MaxPool1d(3)  -> 16
L2 = L1 // 2               # after MaxPool1d(2)  -> 8   (== L_IN // 6)
H1, H2, H3 = 128, 64, 32   # fc1 / fc2 / fc3 widths, fc4 -> 1
LPAD1 = 64                 # zero-padded input length (3 + 48 + 3 -> pad to 64)


def _cnn_kernel(x_ref, w1_ref, b1_ref, w2_ref, b2_ref,
                wf1_ref, bf1_ref, wf2_ref, bf2_ref,
                wf3_ref, bf3_ref, wf4_ref, bf4_ref, out_ref):
    bf16, f32 = jnp.bfloat16, jnp.float32
    NQ1 = L1 * C1          # 512: one pool-phase group of conv1 output columns
    NQ2 = L2 * C2          # 512: one pool-phase group of conv2 output columns

    # ---- conv1 + ReLU + MaxPool1d(3) ----------------------------------------
    # Dense (tb, 64) @ (64, 1536) matmul; output columns grouped (q, p, ci) with
    # q = position-within-pool-window, so the pool is a max of three aligned
    # 512-lane slices (no strided sublane gathers, no h1 staging scratch).
    h1 = jnp.dot(x_ref[...].astype(bf16), w1_ref[...], preferred_element_type=f32)
    h1 = jnp.maximum(h1 + b1_ref[...], 0.0)                       # (tb, 1536)
    p1 = jnp.maximum(jnp.maximum(h1[:, :NQ1], h1[:, NQ1:2 * NQ1]), h1[:, 2 * NQ1:])

    # ---- conv2 + ReLU + MaxPool1d(2) + Flatten -------------------------------
    # Halo taps are zero columns folded into the (512, 1024) dense weight, so no
    # per-sample zero-padded scratch or masked stores.  Columns grouped (q, l, co)
    # so pool2+flatten is a max of the two aligned 512-lane halves; the resulting
    # (l, co) lane order is folded into wf1 (torch's channel-major flatten).
    h2 = jnp.dot(p1.astype(bf16), w2_ref[...], preferred_element_type=f32)
    h2 = jnp.maximum(h2 + b2_ref[...], 0.0)                       # (tb, 1024)
    p2 = jnp.maximum(h2[:, :NQ2], h2[:, NQ2:])                    # (tb, 512)

    # ---- fc1..fc3 (bf16 MXU operands, f32 accumulate) ------------------------
    z = jnp.maximum(jnp.dot(p2.astype(bf16), wf1_ref[...],
                            preferred_element_type=f32) + bf1_ref[...], 0.0)
    z = jnp.maximum(jnp.dot(z.astype(bf16), wf2_ref[...],
                            preferred_element_type=f32) + bf2_ref[...], 0.0)
    z = jnp.maximum(jnp.dot(z.astype(bf16), wf3_ref[...],
                            preferred_element_type=f32) + bf3_ref[...], 0.0)

    # ---- fc4: N=1, so do it on the VPU/XLU (broadcast mul + lane reduction) ---
    out_ref[...] = jnp.sum(z * wf4_ref[...], axis=-1, keepdims=True) + bf4_ref[...]


def init_params(key):
    """PyTorch-shaped parameters with deterministic uniform(-1/sqrt(fan_in)) init."""
    ks = jax.random.split(key, 12)

    def u(k, shape, fan_in):
        bound = 1.0 / float(fan_in) ** 0.5
        return jax.random.uniform(k, shape, jnp.float32, -bound, bound)

    return dict(
        conv1_w=u(ks[0], (C1, 1, K1), 1 * K1),   conv1_b=u(ks[1], (C1,), 1 * K1),
        conv2_w=u(ks[2], (C2, C1, K2), C1 * K2), conv2_b=u(ks[3], (C2,), C1 * K2),
        fc1_w=u(ks[4], (H1, C2 * L2), C2 * L2),  fc1_b=u(ks[5], (H1,), C2 * L2),
        fc2_w=u(ks[6], (H2, H1), H1),            fc2_b=u(ks[7], (H2,), H1),
        fc3_w=u(ks[8], (H3, H2), H2),            fc3_b=u(ks[9], (H3,), H2),
        fc4_w=u(ks[10], (1, H3), H3),            fc4_b=u(ks[11], (1,), H3),
    )


def to_kernel_layout(p):
    """Fold conv+pool structure into dense bf16 matmul weights (f32 biases)."""
    f32, bf16 = jnp.float32, jnp.bfloat16

    # conv1 (+MaxPool1d(3) phase grouping) as one dense (64, 1536) weight.
    # Row j indexes the zero-padded input x_pad[j] = x[j-3]; column (q, p, ci) is
    # conv1 output channel ci at position t = 3p + q.  Tap index k = j - t.
    j = jnp.arange(LPAD1)
    t1 = 3 * jnp.arange(L1)[None, :] + jnp.arange(3)[:, None]      # (3, L1)
    k1 = j[:, None, None] - t1[None, :, :]                         # (64, 3, L1)
    v1 = (k1 >= 0) & (k1 < K1)
    w1_taps = jnp.transpose(p['conv1_w'][:, 0, :], (1, 0))         # (K1, C1)
    w1d = jnp.where(v1[..., None], w1_taps[jnp.clip(k1, 0, K1 - 1)], 0.0)
    w1d = w1d.reshape(LPAD1, 3 * L1 * C1).astype(bf16)             # (64, 1536)
    b1d = jnp.tile(p['conv1_b'], 3 * L1)[None, :].astype(f32)      # (1, 1536)

    # conv2 (+MaxPool1d(2) phase grouping) as one dense (512, 1024) weight.
    # Row (p, ci) = pooled-1 map; column (q, l, co) = conv2 out at t2 = 2l + q.
    # Tap index k = p - t2 + 2; out-of-range taps (halo) are zero columns.
    pp = jnp.arange(L1)
    t2 = 2 * jnp.arange(L2)[None, :] + jnp.arange(2)[:, None]      # (2, L2)
    k2 = pp[:, None, None] - t2[None, :, :] + P2                   # (L1, 2, L2)
    v2 = (k2 >= 0) & (k2 < K2)
    w2_taps = jnp.transpose(p['conv2_w'], (2, 1, 0))               # (K2, C1, C2)
    w2d = jnp.where(v2[..., None, None], w2_taps[jnp.clip(k2, 0, K2 - 1)], 0.0)
    w2d = jnp.transpose(w2d, (0, 3, 1, 2, 4)).reshape(L1 * C1, 2 * L2 * C2).astype(bf16)
    b2d = jnp.tile(p['conv2_b'], 2 * L2)[None, :].astype(f32)      # (1, 1024)

    # torch.Flatten on (N, C2, L2) is channel-major (co, l); the kernel's pooled
    # slab is (l, co)-ordered, so fold the permutation into wf1.
    wf1 = jnp.transpose(p['fc1_w'].reshape(H1, C2, L2), (2, 1, 0)).reshape(L2 * C2, H1)
    wf1, bf1 = wf1.astype(bf16), p['fc1_b'][None, :].astype(f32)
    wf2, bf2 = p['fc2_w'].T.astype(bf16), p['fc2_b'][None, :].astype(f32)
    wf3, bf3 = p['fc3_w'].T.astype(bf16), p['fc3_b'][None, :].astype(f32)
    wf4, bf4 = p['fc4_w'].astype(f32), p['fc4_b'][None, :].astype(f32)   # (1,32),(1,1)
    return (w1d, b1d, w2d, b2d, wf1, bf1, wf2, bf2, wf3, bf3, wf4, bf4)


def cnn_forward(x, params, *, tb=256):
    """x: (N, 1, L_IN) float32 (PyTorch NCL). Returns (N, 1) float32."""
    N = x.shape[0]
    n_up = ((max(N, 1) + 7) // 8) * 8
    tb = max(8, min((tb // 8) * 8, n_up))        # samples per grid block (mult. of 8)
    # Keep >= 2 grid blocks when the batch allows so v7x's second TensorCore
    # (grid axis is "parallel") is not left idle by a single-block launch.
    if tb >= n_up and N >= 16:
        half = (N + 1) // 2
        tb = max(8, ((half + 7) // 8) * 8)
    G = (N + tb - 1) // tb
    Npad = G * tb

    # Host glue: drop channel dim, add conv1 zero padding (3 each side) and pad the
    # lane axis to 64; pad batch to a whole number of blocks.  Raw data only
    # (~256 B/sample of HBM read), no host-side im2col expansion.
    x2d = jnp.pad(x[:, 0, :].astype(jnp.float32),
                  ((0, Npad - N), (K1 // 2, LPAD1 - L_IN - K1 // 2)))   # (Npad, 64)

    kp = to_kernel_layout(params)

    def const_spec(a):                           # resident (never re-fetched) weights
        return pl.BlockSpec(a.shape, lambda g: (0, 0))

    in_specs = [pl.BlockSpec((tb, LPAD1), lambda g: (g, 0))] + \
               [const_spec(a) for a in kp]

    out = pl.pallas_call(
        _cnn_kernel,
        out_shape=jax.ShapeDtypeStruct((Npad, 1), jnp.float32),
        grid_spec=pltpu.PrefetchScalarGridSpec(
            num_scalar_prefetch=0,
            grid=(G,),
            in_specs=in_specs,
            out_specs=pl.BlockSpec((tb, 1), lambda g: (g, 0)),
        ),
        compiler_params=pltpu.CompilerParams(
            dimension_semantics=("parallel",),
            vmem_limit_bytes=32 * 1024 * 1024),   # raise v5e's 16 MiB scoped default
    )(x2d, *kp)
    return out[:N]


def reference_forward(x, p):
    """Independent pure-JAX f32 reference in the original PyTorch NCL layout."""
    N = x.shape[0]
    h = lax.conv_general_dilated(
        x, p['conv1_w'], window_strides=(1,), padding=[(3, 3)],
        dimension_numbers=('NCH', 'OIH', 'NCH'), precision=lax.Precision.HIGHEST)
    h = jnp.maximum(h + p['conv1_b'][None, :, None], 0.0)
    h = h.reshape(N, C1, L1, 3).max(axis=-1)                       # MaxPool1d(3)
    h = lax.conv_general_dilated(
        h, p['conv2_w'], window_strides=(1,), padding=[(2, 2)],
        dimension_numbers=('NCH', 'OIH', 'NCH'), precision=lax.Precision.HIGHEST)
    h = jnp.maximum(h + p['conv2_b'][None, :, None], 0.0)
    h = h.reshape(N, C2, L2, 2).max(axis=-1)                       # MaxPool1d(2)
    h = h.reshape(N, C2 * L2)                                      # Flatten (NCL)
    h = jnp.maximum(h @ p['fc1_w'].T + p['fc1_b'], 0.0)
    h = jnp.maximum(h @ p['fc2_w'].T + p['fc2_b'], 0.0)
    h = jnp.maximum(h @ p['fc3_w'].T + p['fc3_b'], 0.0)
    return h @ p['fc4_w'].T + p['fc4_b']


if __name__ == "__main__":
    key = jax.random.PRNGKey(0)
    kp_key, kx_key = jax.random.split(key)
    params = init_params(kp_key)

    N = 20
    x = jax.random.normal(kx_key, (N, 1, L_IN), jnp.float32)       # batch=20, seq=48

    ref = reference_forward(x, params)

    # Small block size -> 3-step grid plus batch padding (20 -> 24).
    out_multi = jax.block_until_ready(cnn_forward(x, params, tb=8))
    # Default path -> splits into 2 blocks of 16 (keeps a second TC busy on v7x).
    out_dflt = jax.block_until_ready(cnn_forward(x, params))

    assert out_multi.shape == (N, 1) and out_dflt.shape == (N, 1)
    assert bool(jnp.all(jnp.isfinite(out_multi)))
    # bf16 MXU operands vs f32 HIGHEST reference -> 2e-2 tolerance.
    assert bool(jnp.allclose(out_multi, ref, rtol=2e-2, atol=2e-2)), (out_multi, ref)
    assert bool(jnp.allclose(out_dflt, ref, rtol=2e-2, atol=2e-2)), (out_dflt, ref)
    print("KERNEL_OK")
</pallas_src>

<mosaic_0001>
module attributes {stable_mosaic.version = 11 : i64} {
  func.func @_cnn_kernel(%arg0: i32, %arg1: memref<8x64xf32, #tpu.memory_space<vmem>>, %arg2: memref<64x1536xbf16, #tpu.memory_space<vmem>>, %arg3: memref<1x1536xf32, #tpu.memory_space<vmem>>, %arg4: memref<512x1024xbf16, #tpu.memory_space<vmem>>, %arg5: memref<1x1024xf32, #tpu.memory_space<vmem>>, %arg6: memref<512x128xbf16, #tpu.memory_space<vmem>>, %arg7: memref<1x128xf32, #tpu.memory_space<vmem>>, %arg8: memref<128x64xbf16, #tpu.memory_space<vmem>>, %arg9: memref<1x64xf32, #tpu.memory_space<vmem>>, %arg10: memref<64x32xbf16, #tpu.memory_space<vmem>>, %arg11: memref<1x32xf32, #tpu.memory_space<vmem>>, %arg12: memref<1x32xf32, #tpu.memory_space<vmem>>, %arg13: memref<1x1xf32, #tpu.memory_space<vmem>>, %arg14: memref<8x1xf32, #tpu.memory_space<vmem>>) attributes {dimension_semantics = [#tpu.dimension_semantics<parallel>], iteration_bounds = array<i64: 3>, scalar_prefetch = 0 : i64, scratch_operands = 0 : i64, tpu.core_type = #tpu.core_type<tc>, window_params = [{transform_indices = @transform_0, window_bounds = array<i64: 8, 64>}, {pipeline_mode = #tpu.pipeline_mode<synchronous>, transform_indices = @transform_1, window_bounds = array<i64: 64, 1536>}, {pipeline_mode = #tpu.pipeline_mode<synchronous>, transform_indices = @transform_2, window_bounds = array<i64: 1, 1536>}, {pipeline_mode = #tpu.pipeline_mode<synchronous>, transform_indices = @transform_3, window_bounds = array<i64: 512, 1024>}, {pipeline_mode = #tpu.pipeline_mode<synchronous>, transform_indices = @transform_4, window_bounds = array<i64: 1, 1024>}, {pipeline_mode = #tpu.pipeline_mode<synchronous>, transform_indices = @transform_5, window_bounds = array<i64: 512, 128>}, {pipeline_mode = #tpu.pipeline_mode<synchronous>, transform_indices = @transform_6, window_bounds = array<i64: 1, 128>}, {pipeline_mode = #tpu.pipeline_mode<synchronous>, transform_indices = @transform_7, window_bounds = array<i64: 128, 64>}, {pipeline_mode = #tpu.pipeline_mode<synchronous>, transform_indices = @transform_8, window_bounds = array<i64: 1, 64>}, {pipeline_mode = #tpu.pipeline_mode<synchronous>, transform_indices = @transform_9, window_bounds = array<i64: 64, 32>}, {pipeline_mode = #tpu.pipeline_mode<synchronous>, transform_indices = @transform_10, window_bounds = array<i64: 1, 32>}, {pipeline_mode = #tpu.pipeline_mode<synchronous>, transform_indices = @transform_11, window_bounds = array<i64: 1, 32>}, {pipeline_mode = #tpu.pipeline_mode<synchronous>, transform_indices = @transform_12, window_bounds = array<i64: 1, 1>}, {transform_indices = @transform_13, window_bounds = array<i64: 8, 1>}]} {
    %c0 = arith.constant 0 : index
    %c0_0 = arith.constant 0 : index
    %0 = vector.load %arg1[%c0, %c0_0] : memref<8x64xf32, #tpu.memory_space<vmem>>, vector<8x64xf32>
    %1 = arith.truncf %0 : vector<8x64xf32> to vector<8x64xbf16>
    %c0_1 = arith.constant 0 : index
    %c0_2 = arith.constant 0 : index
    %2 = vector.load %arg2[%c0_1, %c0_2] : memref<64x1536xbf16, #tpu.memory_space<vmem>>, vector<64x1536xbf16>
    %cst = arith.constant dense<0.000000e+00> : vector<8x1536xf32>
    %3 = tpu.matmul %1, %2, %cst {dimension_numbers = #tpu.dot_dimension_numbers<[1], [0], [0], [1], [0, 0, 1, 1], [], []>} : vector<8x64xbf16>, vector<64x1536xbf16>, vector<8x1536xf32> -> vector<8x1536xf32>
    %c0_3 = arith.constant 0 : index
    %c0_4 = arith.constant 0 : index
    %4 = vector.load %arg3[%c0_3, %c0_4] : memref<1x1536xf32, #tpu.memory_space<vmem>>, vector<1x1536xf32>
    %5 = vector.broadcast %4 : vector<1x1536xf32> to vector<8x1536xf32>
    %6 = arith.addf %3, %5 : vector<8x1536xf32>
    %cst_5 = arith.constant 0.000000e+00 : f32
    %7 = vector.broadcast %cst_5 : f32 to vector<8x1536xf32>
    %8 = arith.maximumf %6, %7 : vector<8x1536xf32>
    %9 = vector.extract_strided_slice %8 {offsets = [0, 0], sizes = [8, 512], strides = [1, 1]} : vector<8x1536xf32> to vector<8x512xf32>
    %10 = vector.extract_strided_slice %8 {offsets = [0, 512], sizes = [8, 512], strides = [1, 1]} : vector<8x1536xf32> to vector<8x512xf32>
    %11 = arith.maximumf %9, %10 : vector<8x512xf32>
    %12 = vector.extract_strided_slice %8 {offsets = [0, 1024], sizes = [8, 512], strides = [1, 1]} : vector<8x1536xf32> to vector<8x512xf32>
    %13 = arith.maximumf %11, %12 : vector<8x512xf32>
    %14 = arith.truncf %13 : vector<8x512xf32> to vector<8x512xbf16>
    %c0_6 = arith.constant 0 : index
    %c0_7 = arith.constant 0 : index
    %15 = vector.load %arg4[%c0_6, %c0_7] : memref<512x1024xbf16, #tpu.memory_space<vmem>>, vector<512x1024xbf16>
    %cst_8 = arith.constant dense<0.000000e+00> : vector<8x1024xf32>
    %16 = tpu.matmul %14, %15, %cst_8 {dimension_numbers = #tpu.dot_dimension_numbers<[1], [0], [0], [1], [0, 0, 1, 1], [], []>} : vector<8x512xbf16>, vector<512x1024xbf16>, vector<8x1024xf32> -> vector<8x1024xf32>
    %c0_9 = arith.constant 0 : index
    %c0_10 = arith.constant 0 : index
    %17 = vector.load %arg5[%c0_9, %c0_10] : memref<1x1024xf32, #tpu.memory_space<vmem>>, vector<1x1024xf32>
    %18 = vector.broadcast %17 : vector<1x1024xf32> to vector<8x1024xf32>
    %19 = arith.addf %16, %18 : vector<8x1024xf32>
    %cst_11 = arith.constant 0.000000e+00 : f32
    %20 = vector.broadcast %cst_11 : f32 to vector<8x1024xf32>
    %21 = arith.maximumf %19, %20 : vector<8x1024xf32>
    %22 = vector.extract_strided_slice %21 {offsets = [0, 0], sizes = [8, 512], strides = [1, 1]} : vector<8x1024xf32> to vector<8x512xf32>
    %23 = vector.extract_strided_slice %21 {offsets = [0, 512], sizes = [8, 512], strides = [1, 1]} : vector<8x1024xf32> to vector<8x512xf32>
    %24 = arith.maximumf %22, %23 : vector<8x512xf32>
    %25 = arith.truncf %24 : vector<8x512xf32> to vector<8x512xbf16>
    %c0_12 = arith.constant 0 : index
    %c0_13 = arith.constant 0 : index
    %26 = vector.load %arg6[%c0_12, %c0_13] : memref<512x128xbf16, #tpu.memory_space<vmem>>, vector<512x128xbf16>
    %cst_14 = arith.constant dense<0.000000e+00> : vector<8x128xf32>
    %27 = tpu.matmul %25, %26, %cst_14 {dimension_numbers = #tpu.dot_dimension_numbers<[1], [0], [0], [1], [0, 0, 1, 1], [], []>} : vector<8x512xbf16>, vector<512x128xbf16>, vector<8x128xf32> -> vector<8x128xf32>
    %c0_15 = arith.constant 0 : index
    %c0_16 = arith.constant 0 : index
    %28 = vector.load %arg7[%c0_15, %c0_16] : memref<1x128xf32, #tpu.memory_space<vmem>>, vector<1x128xf32>
    %29 = vector.broadcast %28 : vector<1x128xf32> to vector<8x128xf32>
    %30 = arith.addf %27, %29 : vector<8x128xf32>
    %cst_17 = arith.constant 0.000000e+00 : f32
    %31 = vector.broadcast %cst_17 : f32 to vector<8x128xf32>
    %32 = arith.maximumf %30, %31 : vector<8x128xf32>
    %33 = arith.truncf %32 : vector<8x128xf32> to vector<8x128xbf16>
    %c0_18 = arith.constant 0 : index
    %c0_19 = arith.constant 0 : index
    %34 = vector.load %arg8[%c0_18, %c0_19] : memref<128x64xbf16, #tpu.memory_space<vmem>>, vector<128x64xbf16>
    %cst_20 = arith.constant dense<0.000000e+00> : vector<8x64xf32>
    %35 = tpu.matmul %33, %34, %cst_20 {dimension_numbers = #tpu.dot_dimension_numbers<[1], [0], [0], [1], [0, 0, 1, 1], [], []>} : vector<8x128xbf16>, vector<128x64xbf16>, vector<8x64xf32> -> vector<8x64xf32>
    %c0_21 = arith.constant 0 : index
    %c0_22 = arith.constant 0 : index
    %36 = vector.load %arg9[%c0_21, %c0_22] : memref<1x64xf32, #tpu.memory_space<vmem>>, vector<1x64xf32>
    %37 = vector.broadcast %36 : vector<1x64xf32> to vector<8x64xf32>
    %38 = arith.addf %35, %37 : vector<8x64xf32>
    %cst_23 = arith.constant 0.000000e+00 : f32
    %39 = vector.broadcast %cst_23 : f32 to vector<8x64xf32>
    %40 = arith.maximumf %38, %39 : vector<8x64xf32>
    %41 = arith.truncf %40 : vector<8x64xf32> to vector<8x64xbf16>
    %c0_24 = arith.constant 0 : index
    %c0_25 = arith.constant 0 : index
    %42 = vector.load %arg10[%c0_24, %c0_25] : memref<64x32xbf16, #tpu.memory_space<vmem>>, vector<64x32xbf16>
    %cst_26 = arith.constant dense<0.000000e+00> : vector<8x32xf32>
    %43 = tpu.matmul %41, %42, %cst_26 {dimension_numbers = #tpu.dot_dimension_numbers<[1], [0], [0], [1], [0, 0, 1, 1], [], []>} : vector<8x64xbf16>, vector<64x32xbf16>, vector<8x32xf32> -> vector<8x32xf32>
    %c0_27 = arith.constant 0 : index
    %c0_28 = arith.constant 0 : index
    %44 = vector.load %arg11[%c0_27, %c0_28] : memref<1x32xf32, #tpu.memory_space<vmem>>, vector<1x32xf32>
    %45 = vector.broadcast %44 : vector<1x32xf32> to vector<8x32xf32>
    %46 = arith.addf %43, %45 : vector<8x32xf32>
    %cst_29 = arith.constant 0.000000e+00 : f32
    %47 = vector.broadcast %cst_29 : f32 to vector<8x32xf32>
    %48 = arith.maximumf %46, %47 : vector<8x32xf32>
    %c0_30 = arith.constant 0 : index
    %c0_31 = arith.constant 0 : index
    %49 = vector.load %arg12[%c0_30, %c0_31] : memref<1x32xf32, #tpu.memory_space<vmem>>, vector<1x32xf32>
    %50 = vector.broadcast %49 : vector<1x32xf32> to vector<8x32xf32>
    %51 = arith.mulf %48, %50 : vector<8x32xf32>
    %cst_32 = arith.constant dense<0.000000e+00> : vector<8xf32>
    %52 = vector.multi_reduction <add>, %51, %cst_32 [1] : vector<8x32xf32> to vector<8xf32>
    %53 = vector.shape_cast %52 : vector<8xf32> to vector<8x1xf32>
    %c0_33 = arith.constant 0 : index
    %c0_34 = arith.constant 0 : index
    %54 = vector.load %arg13[%c0_33, %c0_34] : memref<1x1xf32, #tpu.memory_space<vmem>>, vector<1x1xf32>
    %55 = vector.broadcast %54 : vector<1x1xf32> to vector<8x1xf32>
    %56 = arith.addf %53, %55 : vector<8x1xf32>
    %c0_35 = arith.constant 0 : index
    %c0_36 = arith.constant 0 : index
    %57 = vector.load %arg14[%c0_35, %c0_36] : memref<8x1xf32, #tpu.memory_space<vmem>>, vector<8x1xf32>
    tpu.vector_store %arg14[%c0_35, %c0_36], %56 {strides = array<i32>} : memref<8x1xf32, #tpu.memory_space<vmem>>, vector<8x1xf32>,
    return
  }
  func.func @transform_0(%arg0: i32) -> (i32, i32) {
    %c0_i32 = arith.constant 0 : i32
    %c0_i32_0 = arith.constant 0 : i32
    return %arg0, %c0_i32 : i32, i32
  }
  func.func @transform_1(%arg0: i32) -> (i32, i32) {
    %c0_i32 = arith.constant 0 : i32
    %c0_i32_0 = arith.constant 0 : i32
    %c0_i32_1 = arith.constant 0 : i32
    return %c0_i32, %c0_i32_0 : i32, i32
  }
  func.func @transform_2(%arg0: i32) -> (i32, i32) {
    %c0_i32 = arith.constant 0 : i32
    %c0_i32_0 = arith.constant 0 : i32
    %c0_i32_1 = arith.constant 0 : i32
    return %c0_i32, %c0_i32_0 : i32, i32
  }
  func.func @transform_3(%arg0: i32) -> (i32, i32) {
    %c0_i32 = arith.constant 0 : i32
    %c0_i32_0 = arith.constant 0 : i32
    %c0_i32_1 = arith.constant 0 : i32
    return %c0_i32, %c0_i32_0 : i32, i32
  }
  func.func @transform_4(%arg0: i32) -> (i32, i32) {
    %c0_i32 = arith.constant 0 : i32
    %c0_i32_0 = arith.constant 0 : i32
    %c0_i32_1 = arith.constant 0 : i32
    return %c0_i32, %c0_i32_0 : i32, i32
  }
  func.func @transform_5(%arg0: i32) -> (i32, i32) {
    %c0_i32 = arith.constant 0 : i32
    %c0_i32_0 = arith.constant 0 : i32
    %c0_i32_1 = arith.constant 0 : i32
    return %c0_i32, %c0_i32_0 : i32, i32
  }
  func.func @transform_6(%arg0: i32) -> (i32, i32) {
    %c0_i32 = arith.constant 0 : i32
    %c0_i32_0 = arith.constant 0 : i32
    %c0_i32_1 = arith.constant 0 : i32
    return %c0_i32, %c0_i32_0 : i32, i32
  }
  func.func @transform_7(%arg0: i32) -> (i32, i32) {
    %c0_i32 = arith.constant 0 : i32
    %c0_i32_0 = arith.constant 0 : i32
    %c0_i32_1 = arith.constant 0 : i32
    return %c0_i32, %c0_i32_0 : i32, i32
  }
  func.func @transform_8(%arg0: i32) -> (i32, i32) {
    %c0_i32 = arith.constant 0 : i32
    %c0_i32_0 = arith.constant 0 : i32
    %c0_i32_1 = arith.constant 0 : i32
    return %c0_i32, %c0_i32_0 : i32, i32
  }
  func.func @transform_9(%arg0: i32) -> (i32, i32) {
    %c0_i32 = arith.constant 0 : i32
    %c0_i32_0 = arith.constant 0 : i32
    %c0_i32_1 = arith.constant 0 : i32
    return %c0_i32, %c0_i32_0 : i32, i32
  }
  func.func @transform_10(%arg0: i32) -> (i32, i32) {
    %c0_i32 = arith.constant 0 : i32
    %c0_i32_0 = arith.constant 0 : i32
    %c0_i32_1 = arith.constant 0 : i32
    return %c0_i32, %c0_i32_0 : i32, i32
  }
  func.func @transform_11(%arg0: i32) -> (i32, i32) {
    %c0_i32 = arith.constant 0 : i32
    %c0_i32_0 = arith.constant 0 : i32
    %c0_i32_1 = arith.constant 0 : i32
    return %c0_i32, %c0_i32_0 : i32, i32
  }
  func.func @transform_12(%arg0: i32) -> (i32, i32) {
    %c0_i32 = arith.constant 0 : i32
    %c0_i32_0 = arith.constant 0 : i32
    %c0_i32_1 = arith.constant 0 : i32
    return %c0_i32, %c0_i32_0 : i32, i32
  }
  func.func @transform_13(%arg0: i32) -> (i32, i32) {
    %c0_i32 = arith.constant 0 : i32
    %c0_i32_0 = arith.constant 0 : i32
    return %arg0, %c0_i32 : i32, i32
  }
}

</mosaic_0001>

<llo_original>
// kernel: tpu_custom_call.1
$region0: #{tpu_custom_call.1}
  #allocation0 [shape = 'u32[]', space=smem, size = 0x4, offset = 0x4, fixed_abs, tag = 'smem constant byte address 0x4 - core index']
  #allocation1 [shape = 'u32[144,128]{1,0:T(1,128)}', space=vmem, size = 0x12000, scoped, tag = 'internal scratch']
  #allocation2 [shape = 'f32[1,1]{1,0:T(1,128)S(1)}', space=vmem, size = 0x200, scoped, tag = 'scoped memory for tpu_custom_call.1']
  %s0 = inlined_call_operand.vmem [shape: f32[24,64], index: 0, kind: input, shape index: {}]
  %s1 = inlined_call_operand.hbm [shape: bf16[64,1536], index: 1, kind: input, shape index: {}]
  %s2 = inlined_call_operand.vmem [shape: f32[1,1536], index: 2, kind: input, shape index: {}]
  %s3 = inlined_call_operand.hbm [shape: bf16[512,1024], index: 3, kind: input, shape index: {}]
  %s4 = inlined_call_operand.vmem [shape: f32[1,1024], index: 4, kind: input, shape index: {}]
  %s5 = inlined_call_operand.hbm [shape: bf16[512,128], index: 5, kind: input, shape index: {}]
  %s6 = inlined_call_operand.vmem [shape: f32[1,128], index: 6, kind: input, shape index: {}]
  %s7 = inlined_call_operand.vmem [shape: bf16[128,64], index: 7, kind: input, shape index: {}]
  %s8 = inlined_call_operand.vmem [shape: f32[1,64], index: 8, kind: input, shape index: {}]
  %s9 = inlined_call_operand.vmem [shape: bf16[64,32], index: 9, kind: input, shape index: {}]
  %s10 = inlined_call_operand.vmem [shape: f32[1,32], index: 10, kind: input, shape index: {}]
  %s11 = inlined_call_operand.vmem [shape: f32[1,32], index: 11, kind: input, shape index: {}]
  %s12 = inlined_call_operand.<no memory space> [shape: f32[1,1], index: 12, kind: input, shape index: {}]
  %s13 = inlined_call_operand.vmem [shape: f32[24,1], index: 13, kind: output, shape index: {}]
  %s14 = sld [smem:[#allocation0]]
  $region97: #{tpu_custom_call.1} parent=0
    _
  %s16 = ssub.s32 1, %s14
  %s17 = scalar_select 0, %s16, %s14
  %v18 = vstv %s12
  %19 = vst [vmem:[#allocation2] sm:$0x1] %v18
  $region1: #{tpu_custom_call.1} parent=0
    #allocation3 [shape = 'u8[196608]{0}', space=vmem, size = 0x30000, scoped, tag = 'input window, operand 1, single buffered']
    #allocation4 [shape = 's32[2]{0}', space=sflag, size = 0x8, scoped, tag = 'scoped memory for tpu_custom_call.1']
    #allocation5 [shape = 'u8[1048576]{0}', space=vmem, size = 0x100000, scoped, tag = 'input window, operand 3, single buffered']
    #allocation6 [shape = 's32[1]{0}', space=sflag, size = 0x4, scoped, tag = 'scoped memory for tpu_custom_call.1']
    #allocation7 [shape = 'u8[131072]{0}', space=vmem, size = 0x20000, scoped, tag = 'input window, operand 5, single buffered']
    %20 = vsyncpa [#allocation4], 0
    %21 = vsyncpa [#allocation6], 0
    loop: start=0, step=1, limit=5
    $region2: #{tpu_custom_call.1} parent=1 // loop_pre_header
      _
    $region3: #{tpu_custom_call.1} parent=1 // loop_header
      %s23 = sphi 0, %s27
      %p24 = scmp.ge.s32.totalorder %s23, 5
      %s33 = sphi 0, %s35
      %s36 = sphi 0, %s33
      %s37 = sphi 0, %s36
      %s53 = sphi 0, %s37
      %s57 = sphi 0, %s57
      %s59 = sphi 0, %s57
      %s60 = sphi 0, %s59
      %s74 = sphi 0, %s60
      %s78 = sphi 0, %s78
      %s80 = sphi 0, %s78
      %s81 = sphi 0, %s80
      %s95 = sphi 0, %s81
      %s99 = sphi 0, %s99
      %s101 = sphi 0, %s99
      %s102 = sphi 0, %s101
      %s116 = sphi 0, %s102
      %s120 = sphi 0, %s120
      %s122 = sphi 0, %s120
      %s123 = sphi 0, %s122
      %s137 = sphi 0, %s123
      %s141 = sphi 0, %s141
      %s143 = sphi 0, %s141
      %s144 = sphi 0, %s143
      %s158 = sphi 0, %s144
      %s162 = sphi 0, %s162
      %s164 = sphi 0, %s162
      %s165 = sphi 0, %s164
      %s179 = sphi 0, %s165
      %s183 = sphi 0, %s183
      %s185 = sphi 0, %s183
      %s186 = sphi 0, %s185
      %s200 = sphi 0, %s186
      %s204 = sphi 0, %s204
      %s206 = sphi 0, %s204
      %s207 = sphi 0, %s206
      %s221 = sphi 0, %s207
      %s225 = sphi 0, %s225
      %s227 = sphi 0, %s225
      %s228 = sphi 0, %s227
      %s242 = sphi 0, %s228
      %s246 = sphi 0, %s246
      %s248 = sphi 0, %s246
      %s249 = sphi 0, %s248
      %s263 = sphi 0, %s249
      %s267 = sphi 0, %s267
      %s269 = sphi 0, %s267
      %s270 = sphi 0, %s269
      %s284 = sphi 0, %s270
      %s288 = sphi 0, %s288
      %s290 = sphi 0, %s288
      %s291 = sphi 0, %s290
      %s305 = sphi 0, %s291
      %s311 = sphi 0, %s313
      %s314 = sphi 0, %s311
      %s315 = sphi 0, %s314
      %s331 = sphi 0, %s315
    $region4: #{tpu_custom_call.1} parent=1 // loop_header_branch
      %26 = sbr.rel (%p24) target = $region8
    $region5: #{tpu_custom_call.1} parent=1 // loop_body
      %s28 = ssub.s32 %s23, 1
      %s29 = ssub.s32 %s23, 2
      %s30 = sadd.s32 %s23, 1
      %s31 = ssub.s32 %s23, %s30
      %p32 = scmp.eq.s32.totalorder %s31, 0
      %s34 = sadd.s32 %s33, 1
      %s35 = scalar_select %p32, %s33, %s34
      %p38 = pneg %p32
      %p39 = scmp.eq.s32.totalorder %s23, 2
      %p40 = por %p38, %p39
      %p41 = scmp.ne.s32.totalorder %s33, %s36
      %p42 = scmp.eq.s32.totalorder %s23, 0
      %p43 = por %p41, %p42
      %p44 = scmp.ne.s32.totalorder %s33, %s36
      %p45 = scmp.eq.s32.totalorder %s28, 2
      %p46 = por %p44, %p45
      %p47 = scmp.ne.s32.totalorder %s36, %s37
      %p48 = scmp.eq.s32.totalorder %s28, 0
      %p49 = por %p47, %p48
      %p50 = scmp.ne.s32.totalorder %s36, %s37
      %p51 = scmp.eq.s32.totalorder %s29, 2
      %p52 = por %p50, %p51
      %p54 = scmp.ne.s32.totalorder %s37, %s53
      %p55 = scmp.eq.s32.totalorder %s29, 0
      %p56 = por %p54, %p55
      %s58 = sadd.s32 %s57, 1
      %p61 = scmp.eq.s32.totalorder %s23, 2
      %p62 = scmp.ne.s32.totalorder %s57, %s59
      %p63 = scmp.eq.s32.totalorder %s23, 0
      %p64 = por %p62, %p63
      %p65 = scmp.ne.s32.totalorder %s57, %s59
      %p66 = scmp.eq.s32.totalorder %s28, 2
      %p67 = por %p65, %p66
      %p68 = scmp.ne.s32.totalorder %s59, %s60
      %p69 = scmp.eq.s32.totalorder %s28, 0
      %p70 = por %p68, %p69
      %p71 = scmp.ne.s32.totalorder %s59, %s60
      %p72 = scmp.eq.s32.totalorder %s29, 2
      %p73 = por %p71, %p72
      %p75 = scmp.ne.s32.totalorder %s60, %s74
      %p76 = scmp.eq.s32.totalorder %s29, 0
      %p77 = por %p75, %p76
      %s79 = sadd.s32 %s78, 1
      %p82 = scmp.eq.s32.totalorder %s23, 2
      %p83 = scmp.ne.s32.totalorder %s78, %s80
      %p84 = scmp.eq.s32.totalorder %s23, 0
      %p85 = por %p83, %p84
      %p86 = scmp.ne.s32.totalorder %s78, %s80
      %p87 = scmp.eq.s32.totalorder %s28, 2
      %p88 = por %p86, %p87
      %p89 = scmp.ne.s32.totalorder %s80, %s81
      %p90 = scmp.eq.s32.totalorder %s28, 0
      %p91 = por %p89, %p90
      %p92 = scmp.ne.s32.totalorder %s80, %s81
      %p93 = scmp.eq.s32.totalorder %s29, 2
      %p94 = por %p92, %p93
      %p96 = scmp.ne.s32.totalorder %s81, %s95
      %p97 = scmp.eq.s32.totalorder %s29, 0
      %p98 = por %p96, %p97
      %s100 = sadd.s32 %s99, 1
      %p103 = scmp.eq.s32.totalorder %s23, 2
      %p104 = scmp.ne.s32.totalorder %s99, %s101
      %p105 = scmp.eq.s32.totalorder %s23, 0
      %p106 = por %p104, %p105
      %p107 = scmp.ne.s32.totalorder %s99, %s101
      %p108 = scmp.eq.s32.totalorder %s28, 2
      %p109 = por %p107, %p108
      %p110 = scmp.ne.s32.totalorder %s101, %s102
      %p111 = scmp.eq.s32.totalorder %s28, 0
      %p112 = por %p110, %p111
      %p113 = scmp.ne.s32.totalorder %s101, %s102
      %p114 = scmp.eq.s32.totalorder %s29, 2
      %p115 = por %p113, %p114
      %p117 = scmp.ne.s32.totalorder %s102, %s116
      %p118 = scmp.eq.s32.totalorder %s29, 0
      %p119 = por %p117, %p118
      %s121 = sadd.s32 %s120, 1
      %p124 = scmp.eq.s32.totalorder %s23, 2
      %p125 = scmp.ne.s32.totalorder %s120, %s122
      %p126 = scmp.eq.s32.totalorder %s23, 0
      %p127 = por %p125, %p126
      %p128 = scmp.ne.s32.totalorder %s120, %s122
      %p129 = scmp.eq.s32.totalorder %s28, 2
      %p130 = por %p128, %p129
      %p131 = scmp.ne.s32.totalorder %s122, %s123
      %p132 = scmp.eq.s32.totalorder %s28, 0
      %p133 = por %p131, %p132
      %p134 = scmp.ne.s32.totalorder %s122, %s123
      %p135 = scmp.eq.s32.totalorder %s29, 2
      %p136 = por %p134, %p135
      %p138 = scmp.ne.s32.totalorder %s123, %s137
      %p139 = scmp.eq.s32.totalorder %s29, 0
      %p140 = por %p138, %p139
      %s142 = sadd.s32 %s141, 1
      %p145 = scmp.eq.s32.totalorder %s23, 2
      %p146 = scmp.ne.s32.totalorder %s141, %s143
      %p147 = scmp.eq.s32.totalorder %s23, 0
      %p148 = por %p146, %p147
      %p149 = scmp.ne.s32.totalorder %s141, %s143
      %p150 = scmp.eq.s32.totalorder %s28, 2
      %p151 = por %p149, %p150
      %p152 = scmp.ne.s32.totalorder %s143, %s144
      %p153 = scmp.eq.s32.totalorder %s28, 0
      %p154 = por %p152, %p153
      %p155 = scmp.ne.s32.totalorder %s143, %s144
      %p156 = scmp.eq.s32.totalorder %s29, 2
      %p157 = por %p155, %p156
      %p159 = scmp.ne.s32.totalorder %s144, %s158
      %p160 = scmp.eq.s32.totalorder %s29, 0
      %p161 = por %p159, %p160
      %s163 = sadd.s32 %s162, 1
      %p166 = scmp.eq.s32.totalorder %s23, 2
      %p167 = scmp.ne.s32.totalorder %s162, %s164
      %p168 = scmp.eq.s32.totalorder %s23, 0
      %p169 = por %p167, %p168
      %p170 = scmp.ne.s32.totalorder %s162, %s164
      %p171 = scmp.eq.s32.totalorder %s28, 2
      %p172 = por %p170, %p171
      %p173 = scmp.ne.s32.totalorder %s164, %s165
      %p174 = scmp.eq.s32.totalorder %s28, 0
      %p175 = por %p173, %p174
      %p176 = scmp.ne.s32.totalorder %s164, %s165
      %p177 = scmp.eq.s32.totalorder %s29, 2
      %p178 = por %p176, %p177
      %p180 = scmp.ne.s32.totalorder %s165, %s179
      %p181 = scmp.eq.s32.totalorder %s29, 0
      %p182 = por %p180, %p181
      %s184 = sadd.s32 %s183, 1
      %p187 = scmp.eq.s32.totalorder %s23, 2
      %p188 = scmp.ne.s32.totalorder %s183, %s185
      %p189 = scmp.eq.s32.totalorder %s23, 0
      %p190 = por %p188, %p189
      %p191 = scmp.ne.s32.totalorder %s183, %s185
      %p192 = scmp.eq.s32.totalorder %s28, 2
      %p193 = por %p191, %p192
      %p194 = scmp.ne.s32.totalorder %s185, %s186
      %p195 = scmp.eq.s32.totalorder %s28, 0
      %p196 = por %p194, %p195
      %p197 = scmp.ne.s32.totalorder %s185, %s186
      %p198 = scmp.eq.s32.totalorder %s29, 2
      %p199 = por %p197, %p198
      %p201 = scmp.ne.s32.totalorder %s186, %s200
      %p202 = scmp.eq.s32.totalorder %s29, 0
      %p203 = por %p201, %p202
      %s205 = sadd.s32 %s204, 1
      %p208 = scmp.eq.s32.totalorder %s23, 2
      %p209 = scmp.ne.s32.totalorder %s204, %s206
      %p210 = scmp.eq.s32.totalorder %s23, 0
      %p211 = por %p209, %p210
      %p212 = scmp.ne.s32.totalorder %s204, %s206
      %p213 = scmp.eq.s32.totalorder %s28, 2
      %p214 = por %p212, %p213
      %p215 = scmp.ne.s32.totalorder %s206, %s207
      %p216 = scmp.eq.s32.totalorder %s28, 0
      %p217 = por %p215, %p216
      %p218 = scmp.ne.s32.totalorder %s206, %s207
      %p219 = scmp.eq.s32.totalorder %s29, 2
      %p220 = por %p218, %p219
      %p222 = scmp.ne.s32.totalorder %s207, %s221
      %p223 = scmp.eq.s32.totalorder %s29, 0
      %p224 = por %p222, %p223
      %s226 = sadd.s32 %s225, 1
      %p229 = scmp.eq.s32.totalorder %s23, 2
      %p230 = scmp.ne.s32.totalorder %s225, %s227
      %p231 = scmp.eq.s32.totalorder %s23, 0
      %p232 = por %p230, %p231
      %p233 = scmp.ne.s32.totalorder %s225, %s227
      %p234 = scmp.eq.s32.totalorder %s28, 2
      %p235 = por %p233, %p234
      %p236 = scmp.ne.s32.totalorder %s227, %s228
      %p237 = scmp.eq.s32.totalorder %s28, 0
      %p238 = por %p236, %p237
      %p239 = scmp.ne.s32.totalorder %s227, %s228
      %p240 = scmp.eq.s32.totalorder %s29, 2
      %p241 = por %p239, %p240
      %p243 = scmp.ne.s32.totalorder %s228, %s242
      %p244 = scmp.eq.s32.totalorder %s29, 0
      %p245 = por %p243, %p244
      %s247 = sadd.s32 %s246, 1
      %p250 = scmp.eq.s32.totalorder %s23, 2
      %p251 = scmp.ne.s32.totalorder %s246, %s248
      %p252 = scmp.eq.s32.totalorder %s23, 0
      %p253 = por %p251, %p252
      %p254 = scmp.ne.s32.totalorder %s246, %s248
      %p255 = scmp.eq.s32.totalorder %s28, 2
      %p256 = por %p254, %p255
      %p257 = scmp.ne.s32.totalorder %s248, %s249
      %p258 = scmp.eq.s32.totalorder %s28, 0
      %p259 = por %p257, %p258
      %p260 = scmp.ne.s32.totalorder %s248, %s249
      %p261 = scmp.eq.s32.totalorder %s29, 2
      %p262 = por %p260, %p261
      %p264 = scmp.ne.s32.totalorder %s249, %s263
      %p265 = scmp.eq.s32.totalorder %s29, 0
      %p266 = por %p264, %p265
      %s268 = sadd.s32 %s267, 1
      %p271 = scmp.eq.s32.totalorder %s23, 2
      %p272 = scmp.ne.s32.totalorder %s267, %s269
      %p273 = scmp.eq.s32.totalorder %s23, 0
      %p274 = por %p272, %p273
      %p275 = scmp.ne.s32.totalorder %s267, %s269
      %p276 = scmp.eq.s32.totalorder %s28, 2
      %p277 = por %p275, %p276
      %p278 = scmp.ne.s32.totalorder %s269, %s270
      %p279 = scmp.eq.s32.totalorder %s28, 0
      %p280 = por %p278, %p279
      %p281 = scmp.ne.s32.totalorder %s269, %s270
      %p282 = scmp.eq.s32.totalorder %s29, 2
      %p283 = por %p281, %p282
      %p285 = scmp.ne.s32.totalorder %s270, %s284
      %p286 = scmp.eq.s32.totalorder %s29, 0
      %p287 = por %p285, %p286
      %s289 = sadd.s32 %s288, 1
      %p292 = scmp.eq.s32.totalorder %s23, 2
      %p293 = scmp.ne.s32.totalorder %s288, %s290
      %p294 = scmp.eq.s32.totalorder %s23, 0
      %p295 = por %p293, %p294
      %p296 = scmp.ne.s32.totalorder %s288, %s290
      %p297 = scmp.eq.s32.totalorder %s28, 2
      %p298 = por %p296, %p297
      %p299 = scmp.ne.s32.totalorder %s290, %s291
      %p300 = scmp.eq.s32.totalorder %s28, 0
      %p301 = por %p299, %p300
      %p302 = scmp.ne.s32.totalorder %s290, %s291
      %p303 = scmp.eq.s32.totalorder %s29, 2
      %p304 = por %p302, %p303
      %p306 = scmp.ne.s32.totalorder %s291, %s305
      %p307 = scmp.eq.s32.totalorder %s29, 0
      %p308 = por %p306, %p307
      %s309 = ssub.s32 %s23, %s30
      %p310 = scmp.eq.s32.totalorder %s309, 0
      %s312 = sadd.s32 %s311, 1
      %s313 = scalar_select %p310, %s311, %s312
      %p316 = pneg %p310
      %p317 = scmp.eq.s32.totalorder %s23, 2
      %p318 = por %p316, %p317
      %p319 = scmp.ne.s32.totalorder %s311, %s314
      %p320 = scmp.eq.s32.totalorder %s23, 0
      %p321 = por %p319, %p320
      %p322 = scmp.ne.s32.totalorder %s311, %s314
      %p323 = scmp.eq.s32.totalorder %s28, 2
      %p324 = por %p322, %p323
      %p325 = scmp.ne.s32.totalorder %s314, %s315
      %p326 = scmp.eq.s32.totalorder %s28, 0
      %p327 = por %p325, %p326
      %p328 = scmp.ne.s32.totalorder %s314, %s315
      %p329 = scmp.eq.s32.totalorder %s29, 2
      %p330 = por %p328, %p329
      %p332 = scmp.ne.s32.totalorder %s315, %s331
      %p333 = scmp.eq.s32.totalorder %s29, 0
      %p334 = por %p332, %p333
      %p335 = scmp.le.s32.totalorder 1, %s23
      %p336 = scmp.lt.s32.totalorder %s23, 4
      %p337 = pnand %p335, %p336
      %p338 = pneg %p337
      // Predicated region
      $region9: #{tpu_custom_call.1} parent=5 // pred_check
        _
      $region10: #{tpu_custom_call.1} parent=5 // pred_check_branch
        %340 = sbr.rel (%p337) target = $region12
      $region11: #{tpu_custom_call.1} parent=5 // pred_region
        %s341 = ssub.s32 %s23, 1
        // Predicated region
        $region13: #{tpu_custom_call.1} parent=11 // pred_check
          %p342 = pneg %p70
        $region14: #{tpu_custom_call.1} parent=11 // pred_check_branch
          %344 = sbr.rel (%p342) target = $region16
        $region15: #{tpu_custom_call.1} parent=11 // pred_region
          %s346 = ssub.s32 6144, 6144
          %347 = vsyncadd [#allocation4], %s346
          %s348 = sshll.u32 [#allocation3], 4
          %s349 = int_to_ptr.vmem [resolvable:$true] %s348
          %354 = dma.hbm_to_vmem [thread:$0]  %s1, 6144, %s349, [#allocation4], 768, 768, 48
        $region16: #{tpu_custom_call.1} parent=11 // pred_fallthru
          _
        // Predicated region
        $region17: #{tpu_custom_call.1} parent=11 // pred_check
          %p355 = pneg %p91
        $region18: #{tpu_custom_call.1} parent=11 // pred_check_branch
          %357 = sbr.rel (%p355) target = $region20
        $region19: #{tpu_custom_call.1} parent=11 // pred_region
          _
        $region20: #{tpu_custom_call.1} parent=11 // pred_fallthru
          _
        // Predicated region
        $region21: #{tpu_custom_call.1} parent=11 // pred_check
          %p358 = pneg %p112
        $region22: #{tpu_custom_call.1} parent=11 // pred_check_branch
          %360 = sbr.rel (%p358) target = $region24
        $region23: #{tpu_custom_call.1} parent=11 // pred_region
          %s362 = ssub.s32 32768, 32768
          %363 = vsyncadd [#allocation6], %s362
          %s364 = sshll.u32 [#allocation5], 4
          %s365 = int_to_ptr.vmem [resolvable:$true] %s364
          %370 = dma.hbm_to_vmem [thread:$0]  %s3, 32768, %s365, [#allocation6], 512, 512, 32
        $region24: #{tpu_custom_call.1} parent=11 // pred_fallthru
          _
        // Predicated region
        $region25: #{tpu_custom_call.1} parent=11 // pred_check
          %p371 = pneg %p133
        $region26: #{tpu_custom_call.1} parent=11 // pred_check_branch
          %373 = sbr.rel (%p371) target = $region28
        $region27: #{tpu_custom_call.1} parent=11 // pred_region
          _
        $region28: #{tpu_custom_call.1} parent=11 // pred_fallthru
          _
        // Predicated region
        $region29: #{tpu_custom_call.1} parent=11 // pred_check
          %p374 = pneg %p154
        $region30: #{tpu_custom_call.1} parent=11 // pred_check_branch
          %376 = sbr.rel (%p374) target = $region32
        $region31: #{tpu_custom_call.1} parent=11 // pred_region
          %s378 = ssub.s32 4096, 4096
          %379 = vsyncadd [#allocation6], %s378
          %s380 = sshll.u32 [#allocation7], 4
          %s381 = int_to_ptr.vmem [resolvable:$true] %s380
          %386 = dma.hbm_to_vmem [thread:$0]  %s5, 4096, %s381, [#allocation6], 64, 64, 4
        $region32: #{tpu_custom_call.1} parent=11 // pred_fallthru
          _
        // Predicated region
        $region33: #{tpu_custom_call.1} parent=11 // pred_check
          %p387 = pneg %p175
        $region34: #{tpu_custom_call.1} parent=11 // pred_check_branch
          %389 = sbr.rel (%p387) target = $region36
        $region35: #{tpu_custom_call.1} parent=11 // pred_region
          _
        $region36: #{tpu_custom_call.1} parent=11 // pred_fallthru
          _
        // Predicated region
        $region37: #{tpu_custom_call.1} parent=11 // pred_check
          %p390 = pneg %p196
        $region38: #{tpu_custom_call.1} parent=11 // pred_check_branch
          %392 = sbr.rel (%p390) target = $region40
        $region39: #{tpu_custom_call.1} parent=11 // pred_region
          _
        $region40: #{tpu_custom_call.1} parent=11 // pred_fallthru
          _
        // Predicated region
        $region41: #{tpu_custom_call.1} parent=11 // pred_check
          %p393 = pneg %p217
        $region42: #{tpu_custom_call.1} parent=11 // pred_check_branch
          %395 = sbr.rel (%p393) target = $region44
        $region43: #{tpu_custom_call.1} parent=11 // pred_region
          _
        $region44: #{tpu_custom_call.1} parent=11 // pred_fallthru
          _
        // Predicated region
        $region45: #{tpu_custom_call.1} parent=11 // pred_check
          %p396 = pneg %p238
        $region46: #{tpu_custom_call.1} parent=11 // pred_check_branch
          %398 = sbr.rel (%p396) target = $region48
        $region47: #{tpu_custom_call.1} parent=11 // pred_region
          _
        $region48: #{tpu_custom_call.1} parent=11 // pred_fallthru
          _
        // Predicated region
        $region49: #{tpu_custom_call.1} parent=11 // pred_check
          %p399 = pneg %p259
        $region50: #{tpu_custom_call.1} parent=11 // pred_check_branch
          %401 = sbr.rel (%p399) target = $region52
        $region51: #{tpu_custom_call.1} parent=11 // pred_region
          _
        $region52: #{tpu_custom_call.1} parent=11 // pred_fallthru
          _
        // Predicated region
        $region53: #{tpu_custom_call.1} parent=11 // pred_check
          %p402 = pneg %p280
        $region54: #{tpu_custom_call.1} parent=11 // pred_check_branch
          %404 = sbr.rel (%p402) target = $region56
        $region55: #{tpu_custom_call.1} parent=11 // pred_region
          _
        $region56: #{tpu_custom_call.1} parent=11 // pred_fallthru
          _
        // Predicated region
        $region57: #{tpu_custom_call.1} parent=11 // pred_check
          %p405 = pneg %p301
        $region58: #{tpu_custom_call.1} parent=11 // pred_check_branch
          %407 = sbr.rel (%p405) target = $region60
        $region59: #{tpu_custom_call.1} parent=11 // pred_region
          _
        $region60: #{tpu_custom_call.1} parent=11 // pred_fallthru
          _
      $region12: #{tpu_custom_call.1} parent=5 // pred_fallthru
        _
      %p408 = scmp.lt.s32.totalorder %s23, 3
      // Predicated region
      $region61: #{tpu_custom_call.1} parent=5 // pred_check
        %p409 = pneg %p408
      $region62: #{tpu_custom_call.1} parent=5 // pred_check_branch
        %411 = sbr.rel (%p409) target = $region64
      $region63: #{tpu_custom_call.1} parent=5 // pred_region
        // Predicated region
        $region65: #{tpu_custom_call.1} parent=63 // pred_check
          %p412 = pneg %p43
        $region66: #{tpu_custom_call.1} parent=63 // pred_check_branch
          %414 = sbr.rel (%p412) target = $region68
        $region67: #{tpu_custom_call.1} parent=63 // pred_region
          %p415 = scmp.lt.s32.totalorder %s23, 2
          %s416 = scalar_select %p415, %s23, 2
          %s417 = smul.addr %s416, 8
          %s418 = scalar_lea.vmem %s0, %s417
        $region68: #{tpu_custom_call.1} parent=63 // pred_fallthru
          _
      $region64: #{tpu_custom_call.1} parent=5 // pred_fallthru
        _
      %p419 = scmp.le.s32.totalorder 1, %s23
      %p420 = scmp.lt.s32.totalorder %s23, 4
      %p421 = pnand %p419, %p420
      %p422 = pneg %p421
      // Predicated region
      $region69: #{tpu_custom_call.1} parent=5 // pred_check
        _
      $region70: #{tpu_custom_call.1} parent=5 // pred_check_branch
        %424 = sbr.rel (%p421) target = $region72
      $region71: #{tpu_custom_call.1} parent=5 // pred_region
        %s425 = ssub.s32 %s23, 1
        // Predicated region
        $region73: #{tpu_custom_call.1} parent=71 // pred_check
          %p426 = pneg %p70
        $region74: #{tpu_custom_call.1} parent=71 // pred_check_branch
          %428 = sbr.rel (%p426) target = $region76
        $region75: #{tpu_custom_call.1} parent=71 // pred_region
          %429 = dma.done [#allocation4], 6144
        $region76: #{tpu_custom_call.1} parent=71 // pred_fallthru
          _
        // Predicated region
        $region77: #{tpu_custom_call.1} parent=71 // pred_check
          %p430 = pneg %p112
        $region78: #{tpu_custom_call.1} parent=71 // pred_check_branch
          %432 = sbr.rel (%p430) target = $region80
        $region79: #{tpu_custom_call.1} parent=71 // pred_region
          %433 = dma.done [#allocation6], 32768
        $region80: #{tpu_custom_call.1} parent=71 // pred_fallthru
          _
        // Predicated region
        $region81: #{tpu_custom_call.1} parent=71 // pred_check
          %p434 = pneg %p154
        $region82: #{tpu_custom_call.1} parent=71 // pred_check_branch
          %436 = sbr.rel (%p434) target = $region84
        $region83: #{tpu_custom_call.1} parent=71 // pred_region
          %437 = dma.done [#allocation6], 4096
        $region84: #{tpu_custom_call.1} parent=71 // pred_fallthru
          _
        %p438 = scmp.lt.s32.totalorder %s28, 2
        %s439 = scalar_select %p438, %s28, 2
        %s440 = smul.addr %s439, 8
        %s441 = scalar_lea.vmem %s0, %s440
        %p442 = pneg %p49
        %p443 = pneg %p46
        %p444 = pneg %p70
        %p445 = pneg %p67
        %p446 = pneg %p91
        %p447 = pneg %p88
        %p448 = pneg %p112
        %p449 = pneg %p109
        %p450 = pneg %p133
        %p451 = pneg %p130
        %p452 = pneg %p154
        %p453 = pneg %p151
        %p454 = pneg %p175
        %p455 = pneg %p172
        %p456 = pneg %p196
        %p457 = pneg %p193
        %p458 = pneg %p217
        %p459 = pneg %p214
        %p460 = pneg %p238
        %p461 = pneg %p235
        %p462 = pneg %p259
        %p463 = pneg %p256
        %p464 = pneg %p280
        %p465 = pneg %p277
        %p466 = pneg %p301
        %p467 = pneg %p298
        %p468 = pneg %p327
        %p469 = pneg %p324
        %p470 = scmp.lt.s32.totalorder %s28, 2
        %s471 = scalar_select %p470, %s28, 2
        %s472 = smul.addr %s471, 8
        %s473 = scalar_lea.vmem %s13, %s472
        %p474 = scmp.lt.s32.totalorder %s28, 2
        %s475 = scalar_select %p474, %s28, 2
        %s476 = smul.addr %s475, 8
        %s477 = scalar_lea.vmem %s0, %s476
        %p478 = scmp.lt.s32.totalorder %s28, 2
        %s479 = scalar_select %p478, %s28, 2
        %s480 = smul.addr %s479, 8
        %s481 = scalar_lea.vmem %s13, %s480
        %v483 = vld [vmem:[%s477] sm:$0xff]
        %v484 = vpack.c.bf16 %v483, %v483
        %v485 = vld [vmem:[#allocation3] sm:$0xff]
        %v486 = vld [vmem:[#allocation3 + $0x8] sm:$0xff]
        %v487 = vld [vmem:[#allocation3 + $0x10] sm:$0xff]
        %v488 = vld [vmem:[#allocation3 + $0x18] sm:$0xff]
        %v489 = vld [vmem:[#allocation3 + $0x20] sm:$0xff]
        %v490 = vld [vmem:[#allocation3 + $0x28] sm:$0xff]
        %v491 = vld [vmem:[#allocation3 + $0x30] sm:$0xff]
        %v492 = vld [vmem:[#allocation3 + $0x38] sm:$0xff]
        %v493 = vld [vmem:[#allocation3 + $0x40] sm:$0xff]
        %v494 = vld [vmem:[#allocation3 + $0x48] sm:$0xff]
        %v495 = vld [vmem:[#allocation3 + $0x50] sm:$0xff]
        %v496 = vld [vmem:[#allocation3 + $0x58] sm:$0xff]
        %v497 = vld [vmem:[#allocation3 + $0x60] sm:$0xff]
        %v498 = vld [vmem:[#allocation3 + $0x68] sm:$0xff]
        %v499 = vld [vmem:[#allocation3 + $0x70] sm:$0xff]
        %v500 = vld [vmem:[#allocation3 + $0x78] sm:$0xff]
        %v501 = vld [vmem:[#allocation3 + $0x80] sm:$0xff]
        %v502 = vld [vmem:[#allocation3 + $0x88] sm:$0xff]
        %v503 = vld [vmem:[#allocation3 + $0x90] sm:$0xff]
        %v504 = vld [vmem:[#allocation3 + $0x98] sm:$0xff]
        %v505 = vld [vmem:[#allocation3 + $0xa0] sm:$0xff]
        %v506 = vld [vmem:[#allocation3 + $0xa8] sm:$0xff]
        %v507 = vld [vmem:[#allocation3 + $0xb0] sm:$0xff]
        %v508 = vld [vmem:[#allocation3 + $0xb8] sm:$0xff]
        %v509 = vld [vmem:[#allocation3 + $0xc0] sm:$0xff]
        %v510 = vld [vmem:[#allocation3 + $0xc8] sm:$0xff]
        %v511 = vld [vmem:[#allocation3 + $0xd0] sm:$0xff]
        %v512 = vld [vmem:[#allocation3 + $0xd8] sm:$0xff]
        %v513 = vld [vmem:[#allocation3 + $0xe0] sm:$0xff]
        %v514 = vld [vmem:[#allocation3 + $0xe8] sm:$0xff]
        %v515 = vld [vmem:[#allocation3 + $0xf0] sm:$0xff]
        %v516 = vld [vmem:[#allocation3 + $0xf8] sm:$0xff]
        %v517 = vld [vmem:[#allocation3 + $0x100] sm:$0xff]
        %v518 = vld [vmem:[#allocation3 + $0x108] sm:$0xff]
        %v519 = vld [vmem:[#allocation3 + $0x110] sm:$0xff]
        %v520 = vld [vmem:[#allocation3 + $0x118] sm:$0xff]
        %v521 = vld [vmem:[#allocation3 + $0x120] sm:$0xff]
        %v522 = vld [vmem:[#allocation3 + $0x128] sm:$0xff]
        %v523 = vld [vmem:[#allocation3 + $0x130] sm:$0xff]
        %v524 = vld [vmem:[#allocation3 + $0x138] sm:$0xff]
        %v525 = vld [vmem:[#allocation3 + $0x140] sm:$0xff]
        %v526 = vld [vmem:[#allocation3 + $0x148] sm:$0xff]
        %v527 = vld [vmem:[#allocation3 + $0x150] sm:$0xff]
        %v528 = vld [vmem:[#allocation3 + $0x158] sm:$0xff]
        %v529 = vld [vmem:[#allocation3 + $0x160] sm:$0xff]
        %v530 = vld [vmem:[#allocation3 + $0x168] sm:$0xff]
        %v531 = vld [vmem:[#allocation3 + $0x170] sm:$0xff]
        %v532 = vld [vmem:[#allocation3 + $0x178] sm:$0xff]
        %v533 = vld [vmem:[%s2] sm:$0xff]
        %v534 = vld [vmem:[%s2 + $0x8] sm:$0xf]
        %v537 = vlaneseq
        %v538 = vshrl.u32 %v537, 7
        %v539 = vsub.s32 0, %v538
        %v540 = vrot.slane %v533, %v539
        %v541 = vlaneseq
        %v542 = vshrl.u32 %v541, 7
        %v543 = vsub.s32 1, %v542
        %v544 = vrot.slane %v533, %v543
        %v545 = vlaneseq
        %v546 = vshrl.u32 %v545, 7
        %v547 = vsub.s32 2, %v546
        %v548 = vrot.slane %v533, %v547
        %v549 = vlaneseq
        %v550 = vshrl.u32 %v549, 7
        %v551 = vsub.s32 3, %v550
        %v552 = vrot.slane %v533, %v551
        %v553 = vlaneseq
        %v554 = vshrl.u32 %v553, 7
        %v555 = vsub.s32 4, %v554
        %v556 = vrot.slane %v533, %v555
        %v557 = vlaneseq
        %v558 = vshrl.u32 %v557, 7
        %v559 = vsub.s32 5, %v558
        %v560 = vrot.slane %v533, %v559
        %v561 = vlaneseq
        %v562 = vshrl.u32 %v561, 7
        %v563 = vsub.s32 6, %v562
        %v564 = vrot.slane %v533, %v563
        %v565 = vlaneseq
        %v566 = vshrl.u32 %v565, 7
        %v567 = vsub.s32 7, %v566
        %v568 = vrot.slane %v533, %v567
        %v569 = vlaneseq
        %v570 = vshrl.u32 %v569, 7
        %v571 = vsub.s32 0, %v570
        %v572 = vrot.slane %v534, %v571
        %v573 = vlaneseq
        %v574 = vshrl.u32 %v573, 7
        %v575 = vsub.s32 1, %v574
        %v576 = vrot.slane %v534, %v575
        %v577 = vlaneseq
        %v578 = vshrl.u32 %v577, 7
        %v579 = vsub.s32 2, %v578
        %v580 = vrot.slane %v534, %v579
        %v581 = vlaneseq
        %v582 = vshrl.u32 %v581, 7
        %v583 = vsub.s32 3, %v582
        %v584 = vrot.slane %v534, %v583
        %v645 = vunpack.c.l.b16 %v485
        %v646 = vunpack.c.h.b16 %v485
        %v647 = vunpack.c.l.b16 %v486
        %v648 = vunpack.c.h.b16 %v486
        %v649 = vunpack.c.l.b16 %v487
        %v650 = vunpack.c.h.b16 %v487
        %v651 = vunpack.c.l.b16 %v488
        %v652 = vunpack.c.h.b16 %v488
        %v653 = vunpack.c.l.b16 %v489
        %v654 = vunpack.c.h.b16 %v489
        %v655 = vunpack.c.l.b16 %v490
        %v656 = vunpack.c.h.b16 %v490
        %v657 = vunpack.c.l.b16 %v491
        %v658 = vunpack.c.h.b16 %v491
        %v659 = vunpack.c.l.b16 %v492
        %v660 = vunpack.c.h.b16 %v492
        %v661 = vunpack.c.l.b16 %v493
        %v662 = vunpack.c.h.b16 %v493
        %v663 = vunpack.c.l.b16 %v494
        %v664 = vunpack.c.h.b16 %v494
        %v665 = vunpack.c.l.b16 %v495
        %v666 = vunpack.c.h.b16 %v495
        %v667 = vunpack.c.l.b16 %v496
        %v668 = vunpack.c.h.b16 %v496
        %v669 = vunpack.c.l.b16 %v497
        %v670 = vunpack.c.h.b16 %v497
        %v671 = vunpack.c.l.b16 %v498
        %v672 = vunpack.c.h.b16 %v498
        %v673 = vunpack.c.l.b16 %v499
        %v674 = vunpack.c.h.b16 %v499
        %v675 = vunpack.c.l.b16 %v500
        %v676 = vunpack.c.h.b16 %v500
        %v677 = vunpack.c.l.b16 %v501
        %v678 = vunpack.c.h.b16 %v501
        %v679 = vunpack.c.l.b16 %v502
        %v680 = vunpack.c.h.b16 %v502
        %v681 = vunpack.c.l.b16 %v503
        %v682 = vunpack.c.h.b16 %v503
        %v683 = vunpack.c.l.b16 %v504
        %v684 = vunpack.c.h.b16 %v504
        %v685 = vunpack.c.l.b16 %v505
        %v686 = vunpack.c.h.b16 %v505
        %v687 = vunpack.c.l.b16 %v506
        %v688 = vunpack.c.h.b16 %v506
        %v689 = vunpack.c.l.b16 %v507
        %v690 = vunpack.c.h.b16 %v507
        %v691 = vunpack.c.l.b16 %v508
        %v692 = vunpack.c.h.b16 %v508
        %v693 = vunpack.c.l.b16 %v509
        %v694 = vunpack.c.h.b16 %v509
        %v695 = vunpack.c.l.b16 %v510
        %v696 = vunpack.c.h.b16 %v510
        %v697 = vunpack.c.l.b16 %v511
        %v698 = vunpack.c.h.b16 %v511
        %v699 = vunpack.c.l.b16 %v512
        %v700 = vunpack.c.h.b16 %v512
        %v701 = vunpack.c.l.b16 %v513
        %v702 = vunpack.c.h.b16 %v513
        %v703 = vunpack.c.l.b16 %v514
        %v704 = vunpack.c.h.b16 %v514
        %v705 = vunpack.c.l.b16 %v515
        %v706 = vunpack.c.h.b16 %v515
        %v707 = vunpack.c.l.b16 %v516
        %v708 = vunpack.c.h.b16 %v516
        %v709 = vunpack.c.l.b16 %v517
        %v710 = vunpack.c.h.b16 %v517
        %v711 = vunpack.c.l.b16 %v518
        %v712 = vunpack.c.h.b16 %v518
        %v713 = vunpack.c.l.b16 %v519
        %v714 = vunpack.c.h.b16 %v519
        %v715 = vunpack.c.l.b16 %v520
        %v716 = vunpack.c.h.b16 %v520
        %v717 = vunpack.c.l.b16 %v521
        %v718 = vunpack.c.h.b16 %v521
        %v719 = vunpack.c.l.b16 %v522
        %v720 = vunpack.c.h.b16 %v522
        %v721 = vunpack.c.l.b16 %v523
        %v722 = vunpack.c.h.b16 %v523
        %v723 = vunpack.c.l.b16 %v524
        %v724 = vunpack.c.h.b16 %v524
        %v725 = vunpack.c.l.b16 %v525
        %v726 = vunpack.c.h.b16 %v525
        %v727 = vunpack.c.l.b16 %v526
        %v728 = vunpack.c.h.b16 %v526
        %v729 = vunpack.c.l.b16 %v527
        %v730 = vunpack.c.h.b16 %v527
        %v731 = vunpack.c.l.b16 %v528
        %v732 = vunpack.c.h.b16 %v528
        %v733 = vunpack.c.l.b16 %v529
        %v734 = vunpack.c.h.b16 %v529
        %v735 = vunpack.c.l.b16 %v530
        %v736 = vunpack.c.h.b16 %v530
        %v737 = vunpack.c.l.b16 %v531
        %v738 = vunpack.c.h.b16 %v531
        %v739 = vunpack.c.l.b16 %v532
        %v740 = vunpack.c.h.b16 %v532
        %v741 = vpack.c.b16 %v657, %v645
        %v742 = vpack.c.b16 %v658, %v646
        %v743 = vpack.c.b16 %v659, %v647
        %v744 = vpack.c.b16 %v660, %v648
        %v745 = vpack.c.b16 %v661, %v649
        %v746 = vpack.c.b16 %v662, %v650
        %v747 = vpack.c.b16 %v663, %v651
        %v748 = vpack.c.b16 %v664, %v652
        %v749 = vpack.c.b16 %v665, %v653
        %v750 = vpack.c.b16 %v666, %v654
        %v751 = vpack.c.b16 %v667, %v655
        %v752 = vpack.c.b16 %v668, %v656
        %v753 = vpack.c.b16 %v681, %v669
        %v754 = vpack.c.b16 %v682, %v670
        %v755 = vpack.c.b16 %v683, %v671
        %v756 = vpack.c.b16 %v684, %v672
        %v757 = vpack.c.b16 %v685, %v673
        %v758 = vpack.c.b16 %v686, %v674
        %v759 = vpack.c.b16 %v687, %v675
        %v760 = vpack.c.b16 %v688, %v676
        %v761 = vpack.c.b16 %v689, %v677
        %v762 = vpack.c.b16 %v690, %v678
        %v763 = vpack.c.b16 %v691, %v679
        %v764 = vpack.c.b16 %v692, %v680
        %v765 = vpack.c.b16 %v705, %v693
        %v766 = vpack.c.b16 %v706, %v694
        %v767 = vpack.c.b16 %v707, %v695
        %v768 = vpack.c.b16 %v708, %v696
        %v769 = vpack.c.b16 %v709, %v697
        %v770 = vpack.c.b16 %v710, %v698
        %v771 = vpack.c.b16 %v711, %v699
        %v772 = vpack.c.b16 %v712, %v700
        %v773 = vpack.c.b16 %v713, %v701
        %v774 = vpack.c.b16 %v714, %v702
        %v775 = vpack.c.b16 %v715, %v703
        %v776 = vpack.c.b16 %v716, %v704
        %v777 = vpack.c.b16 %v729, %v717
        %v778 = vpack.c.b16 %v730, %v718
        %v779 = vpack.c.b16 %v731, %v719
        %v780 = vpack.c.b16 %v732, %v720
        %v781 = vpack.c.b16 %v733, %v721
        %v782 = vpack.c.b16 %v734, %v722
        %v783 = vpack.c.b16 %v735, %v723
        %v784 = vpack.c.b16 %v736, %v724
        %v785 = vpack.c.b16 %v737, %v725
        %v786 = vpack.c.b16 %v738, %v726
        %v787 = vpack.c.b16 %v739, %v727
        %v788 = vpack.c.b16 %v740, %v728
        %vm837 = vcmask 523264
        %v839 = vsel %vm837, %v484, 0
        %841 = vmatprep.subr.bf16.mxu0 0
        %842 = vmatpush1.bf16.msra.mxu0 0
        %843 = vmatprep.subr.bf16.mxu0 0
        %844 = vmatpush1.bf16.msra.mxu0 0
        %845 = vmatprep.subr.bf16.mxu0 0
        %846 = vmatpush1.bf16.msra.mxu0 0
        %847 = vmatprep.subr.bf16.mxu0 0
        %848 = vmatpush1.bf16.msra.mxu0 0
        %849 = vmatprep.subr.bf16.mxu0 %v778
        %850 = vmatpush1.bf16.msra.mxu0 %v777
        %851 = vmatprep.subr.bf16.mxu0 %v766
        %852 = vmatpush1.bf16.msra.mxu0 %v765
        %853 = vmatprep.subr.bf16.mxu0 %v754
        %854 = vmatpush1.bf16.msra.mxu0 %v753
        %855 = vmatprep.subr.bf16.mxu0 %v742
        %856 = vmatpush1.bf16.msra.mxu0 %v741
        %857 = vmatprep.subr.bf16.mxu0 0
        %858 = vmatpush2.bf16.msra.mxu0 0
        %859 = vmatprep.subr.bf16.mxu0 0
        %860 = vmatpush2.bf16.msra.mxu0 0
        %861 = vmatprep.subr.bf16.mxu0 0
        %862 = vmatpush2.bf16.msra.mxu0 0
        %863 = vmatprep.subr.bf16.mxu0 0
        %864 = vmatpush2.bf16.msra.mxu0 0
        %865 = vmatprep.subr.bf16.mxu0 0
        %866 = vmatpush2.bf16.msra.mxu0 0
        %867 = vmatprep.subr.bf16.mxu0 0
        %868 = vmatpush2.bf16.msra.mxu0 0
        %869 = vmatprep.subr.bf16.mxu0 0
        %870 = vmatpush2.bf16.msra.mxu0 0
        %871 = vmatprep.subr.bf16.mxu0 0
        %872 = vmatpush2.bf16.msra.mxu0 0
        %873 = vmatprep.mubr.bf16.mxu0 0
        %874 = vmatmul.mubr.bf16.gmra.mxu0 %v839
        %v875 = vpop.f32.mrf.mxu0
        %v876 = vadd.f32 %v540, %v875
        %v877 = vpop.f32.mrf.mxu0
        %v878 = vadd.f32 %v544, %v877
        %v879 = vpop.f32.mrf.mxu0
        %v880 = vpop.f32.mrf.mxu0
        %881 = vdwg.mxu0
        %882 = vmatprep.subr.bf16.mxu0 0
        %883 = vmatpush1.bf16.msra.mxu0 0
        %884 = vmatprep.subr.bf16.mxu0 0
        %885 = vmatpush1.bf16.msra.mxu0 0
        %886 = vmatprep.subr.bf16.mxu0 0
        %887 = vmatpush1.bf16.msra.mxu0 0
        %888 = vmatprep.subr.bf16.mxu0 0
        %889 = vmatpush1.bf16.msra.mxu0 0
        %890 = vmatprep.subr.bf16.mxu0 %v780
        %891 = vmatpush1.bf16.msra.mxu0 %v779
        %892 = vmatprep.subr.bf16.mxu0 %v768
        %893 = vmatpush1.bf16.msra.mxu0 %v767
        %894 = vmatprep.subr.bf16.mxu0 %v756
        %895 = vmatpush1.bf16.msra.mxu0 %v755
        %896 = vmatprep.subr.bf16.mxu0 %v744
        %897 = vmatpush1.bf16.msra.mxu0 %v743
        %898 = vmatprep.subr.bf16.mxu0 0
        %899 = vmatpush2.bf16.msra.mxu0 0
        %900 = vmatprep.subr.bf16.mxu0 0
        %901 = vmatpush2.bf16.msra.mxu0 0
        %902 = vmatprep.subr.bf16.mxu0 0
        %903 = vmatpush2.bf16.msra.mxu0 0
        %904 = vmatprep.subr.bf16.mxu0 0
        %905 = vmatpush2.bf16.msra.mxu0 0
        %906 = vmatprep.subr.bf16.mxu0 0
        %907 = vmatpush2.bf16.msra.mxu0 0
        %908 = vmatprep.subr.bf16.mxu0 0
        %909 = vmatpush2.bf16.msra.mxu0 0
        %910 = vmatprep.subr.bf16.mxu0 0
        %911 = vmatpush2.bf16.msra.mxu0 0
        %912 = vmatprep.subr.bf16.mxu0 0
        %913 = vmatpush2.bf16.msra.mxu0 0
        %914 = vmatprep.mubr.bf16.mxu0 0
        %915 = vmatmul.mubr.bf16.gmra.mxu0 %v839
        %v916 = vpop.f32.mrf.mxu0
        %v917 = vadd.f32 %v548, %v916
        %v918 = vpop.f32.mrf.mxu0
        %v919 = vadd.f32 %v552, %v918
        %v920 = vpop.f32.mrf.mxu0
        %v921 = vpop.f32.mrf.mxu0
        %922 = vdwg.mxu0
        %923 = vmatprep.subr.bf16.mxu0 0
        %924 = vmatpush1.bf16.msra.mxu0 0
        %925 = vmatprep.subr.bf16.mxu0 0
        %926 = vmatpush1.bf16.msra.mxu0 0
        %927 = vmatprep.subr.bf16.mxu0 0
        %928 = vmatpush1.bf16.msra.mxu0 0
        %929 = vmatprep.subr.bf16.mxu0 0
        %930 = vmatpush1.bf16.msra.mxu0 0
        %931 = vmatprep.subr.bf16.mxu0 %v782
        %932 = vmatpush1.bf16.msra.mxu0 %v781
        %933 = vmatprep.subr.bf16.mxu0 %v770
        %934 = vmatpush1.bf16.msra.mxu0 %v769
        %935 = vmatprep.subr.bf16.mxu0 %v758
        %936 = vmatpush1.bf16.msra.mxu0 %v757
        %937 = vmatprep.subr.bf16.mxu0 %v746
        %938 = vmatpush1.bf16.msra.mxu0 %v745
        %939 = vmatprep.subr.bf16.mxu0 0
        %940 = vmatpush2.bf16.msra.mxu0 0
        %941 = vmatprep.subr.bf16.mxu0 0
        %942 = vmatpush2.bf16.msra.mxu0 0
        %943 = vmatprep.subr.bf16.mxu0 0
        %944 = vmatpush2.bf16.msra.mxu0 0
        %945 = vmatprep.subr.bf16.mxu0 0
        %946 = vmatpush2.bf16.msra.mxu0 0
        %947 = vmatprep.subr.bf16.mxu0 0
        %948 = vmatpush2.bf16.msra.mxu0 0
        %949 = vmatprep.subr.bf16.mxu0 0
        %950 = vmatpush2.bf16.msra.mxu0 0
        %951 = vmatprep.subr.bf16.mxu0 0
        %952 = vmatpush2.bf16.msra.mxu0 0
        %953 = vmatprep.subr.bf16.mxu0 0
        %954 = vmatpush2.bf16.msra.mxu0 0
        %955 = vmatprep.mubr.bf16.mxu0 0
        %956 = vmatmul.mubr.bf16.gmra.mxu0 %v839
        %v957 = vpop.f32.mrf.mxu0
        %v958 = vadd.f32 %v556, %v957
        %v959 = vpop.f32.mrf.mxu0
        %v960 = vadd.f32 %v560, %v959
        %v961 = vpop.f32.mrf.mxu0
        %v962 = vpop.f32.mrf.mxu0
        %963 = vdwg.mxu0
        %964 = vmatprep.subr.bf16.mxu0 0
        %965 = vmatpush1.bf16.msra.mxu0 0
        %966 = vmatprep.subr.bf16.mxu0 0
        %967 = vmatpush1.bf16.msra.mxu0 0
        %968 = vmatprep.subr.bf16.mxu0 0
        %969 = vmatpush1.bf16.msra.mxu0 0
        %970 = vmatprep.subr.bf16.mxu0 0
        %971 = vmatpush1.bf16.msra.mxu0 0
        %972 = vmatprep.subr.bf16.mxu0 %v784
        %973 = vmatpush1.bf16.msra.mxu0 %v783
        %974 = vmatprep.subr.bf16.mxu0 %v772
        %975 = vmatpush1.bf16.msra.mxu0 %v771
        %976 = vmatprep.subr.bf16.mxu0 %v760
        %977 = vmatpush1.bf16.msra.mxu0 %v759
        %978 = vmatprep.subr.bf16.mxu0 %v748
        %979 = vmatpush1.bf16.msra.mxu0 %v747
        %980 = vmatprep.subr.bf16.mxu0 0
        %981 = vmatpush2.bf16.msra.mxu0 0
        %982 = vmatprep.subr.bf16.mxu0 0
        %983 = vmatpush2.bf16.msra.mxu0 0
        %984 = vmatprep.subr.bf16.mxu0 0
        %985 = vmatpush2.bf16.msra.mxu0 0
        %986 = vmatprep.subr.bf16.mxu0 0
        %987 = vmatpush2.bf16.msra.mxu0 0
        %988 = vmatprep.subr.bf16.mxu0 0
        %989 = vmatpush2.bf16.msra.mxu0 0
        %990 = vmatprep.subr.bf16.mxu0 0
        %991 = vmatpush2.bf16.msra.mxu0 0
        %992 = vmatprep.subr.bf16.mxu0 0
        %993 = vmatpush2.bf16.msra.mxu0 0
        %994 = vmatprep.subr.bf16.mxu0 0
        %995 = vmatpush2.bf16.msra.mxu0 0
        %996 = vmatprep.mubr.bf16.mxu0 0
        %997 = vmatmul.mubr.bf16.gmra.mxu0 %v839
        %v998 = vpop.f32.mrf.mxu0
        %v999 = vadd.f32 %v564, %v998
        %v1000 = vpop.f32.mrf.mxu0
        %v1001 = vadd.f32 %v568, %v1000
        %v1002 = vpop.f32.mrf.mxu0
        %v1003 = vpop.f32.mrf.mxu0
        %1004 = vdwg.mxu0
        %1005 = vmatprep.subr.bf16.mxu0 0
        %1006 = vmatpush1.bf16.msra.mxu0 0
        %1007 = vmatprep.subr.bf16.mxu0 0
        %1008 = vmatpush1.bf16.msra.mxu0 0
        %1009 = vmatprep.subr.bf16.mxu0 0
        %1010 = vmatpush1.bf16.msra.mxu0 0
        %1011 = vmatprep.subr.bf16.mxu0 0
        %1012 = vmatpush1.bf16.msra.mxu0 0
        %1013 = vmatprep.subr.bf16.mxu0 %v786
        %1014 = vmatpush1.bf16.msra.mxu0 %v785
        %1015 = vmatprep.subr.bf16.mxu0 %v774
        %1016 = vmatpush1.bf16.msra.mxu0 %v773
        %1017 = vmatprep.subr.bf16.mxu0 %v762
        %1018 = vmatpush1.bf16.msra.mxu0 %v761
        %1019 = vmatprep.subr.bf16.mxu0 %v750
        %1020 = vmatpush1.bf16.msra.mxu0 %v749
        %1021 = vmatprep.subr.bf16.mxu0 0
        %1022 = vmatpush2.bf16.msra.mxu0 0
        %1023 = vmatprep.subr.bf16.mxu0 0
        %1024 = vmatpush2.bf16.msra.mxu0 0
        %1025 = vmatprep.subr.bf16.mxu0 0
        %1026 = vmatpush2.bf16.msra.mxu0 0
        %1027 = vmatprep.subr.bf16.mxu0 0
        %1028 = vmatpush2.bf16.msra.mxu0 0
        %1029 = vmatprep.subr.bf16.mxu0 0
        %1030 = vmatpush2.bf16.msra.mxu0 0
        %1031 = vmatprep.subr.bf16.mxu0 0
        %1032 = vmatpush2.bf16.msra.mxu0 0
        %1033 = vmatprep.subr.bf16.mxu0 0
        %1034 = vmatpush2.bf16.msra.mxu0 0
        %1035 = vmatprep.subr.bf16.mxu0 0
        %1036 = vmatpush2.bf16.msra.mxu0 0
        %1037 = vmatprep.mubr.bf16.mxu0 0
        %1038 = vmatmul.mubr.bf16.gmra.mxu0 %v839
        %v1039 = vpop.f32.mrf.mxu0
        %v1040 = vadd.f32 %v572, %v1039
        %v1041 = vpop.f32.mrf.mxu0
        %v1042 = vadd.f32 %v576, %v1041
        %v1043 = vpop.f32.mrf.mxu0
        %v1044 = vpop.f32.mrf.mxu0
        %1045 = vdwg.mxu0
        %1046 = vmatprep.subr.bf16.mxu0 0
        %1047 = vmatpush1.bf16.msra.mxu0 0
        %1048 = vmatprep.subr.bf16.mxu0 0
        %1049 = vmatpush1.bf16.msra.mxu0 0
        %1050 = vmatprep.subr.bf16.mxu0 0
        %1051 = vmatpush1.bf16.msra.mxu0 0
        %1052 = vmatprep.subr.bf16.mxu0 0
        %1053 = vmatpush1.bf16.msra.mxu0 0
        %1054 = vmatprep.subr.bf16.mxu0 %v788
        %1055 = vmatpush1.bf16.msra.mxu0 %v787
        %1056 = vmatprep.subr.bf16.mxu0 %v776
        %1057 = vmatpush1.bf16.msra.mxu0 %v775
        %1058 = vmatprep.subr.bf16.mxu0 %v764
        %1059 = vmatpush1.bf16.msra.mxu0 %v763
        %1060 = vmatprep.subr.bf16.mxu0 %v752
        %1061 = vmatpush1.bf16.msra.mxu0 %v751
        %1062 = vmatprep.subr.bf16.mxu0 0
        %1063 = vmatpush2.bf16.msra.mxu0 0
        %1064 = vmatprep.subr.bf16.mxu0 0
        %1065 = vmatpush2.bf16.msra.mxu0 0
        %1066 = vmatprep.subr.bf16.mxu0 0
        %1067 = vmatpush2.bf16.msra.mxu0 0
        %1068 = vmatprep.subr.bf16.mxu0 0
        %1069 = vmatpush2.bf16.msra.mxu0 0
        %1070 = vmatprep.subr.bf16.mxu0 0
        %1071 = vmatpush2.bf16.msra.mxu0 0
        %1072 = vmatprep.subr.bf16.mxu0 0
        %1073 = vmatpush2.bf16.msra.mxu0 0
        %1074 = vmatprep.subr.bf16.mxu0 0
        %1075 = vmatpush2.bf16.msra.mxu0 0
        %1076 = vmatprep.subr.bf16.mxu0 0
        %1077 = vmatpush2.bf16.msra.mxu0 0
        %1078 = vmatprep.mubr.bf16.mxu0 0
        %1079 = vmatmul.mubr.bf16.gmra.mxu0 %v839
        %v1080 = vpop.f32.mrf.mxu0
        %v1081 = vadd.f32 %v580, %v1080
        %v1082 = vpop.f32.mrf.mxu0
        %v1083 = vadd.f32 %v584, %v1082
        %v1084 = vpop.f32.mrf.mxu0
        %v1085 = vpop.f32.mrf.mxu0
        %1086 = vdwg.mxu0
        %v1087 = vmax.f32 %v876, 0.0
        %v1088 = vmax.f32 %v878, 0.0
        %v1089 = vmax.f32 %v917, 0.0
        %v1090 = vmax.f32 %v919, 0.0
        %v1091 = vmax.f32 %v958, 0.0
        %v1092 = vmax.f32 %v960, 0.0
        %v1093 = vmax.f32 %v999, 0.0
        %v1094 = vmax.f32 %v1001, 0.0
        %v1095 = vmax.f32 %v1040, 0.0
        %v1096 = vmax.f32 %v1042, 0.0
        %v1097 = vmax.f32 %v1081, 0.0
        %v1098 = vmax.f32 %v1083, 0.0
        %v1099 = vmax.f32 %v1087, %v1091
        %v1100 = vmax.f32 %v1088, %v1092
        %v1101 = vmax.f32 %v1089, %v1093
        %v1102 = vmax.f32 %v1090, %v1094
        %v1103 = vmax.f32 %v1099, %v1095
        %v1104 = vmax.f32 %v1100, %v1096
        %v1105 = vmax.f32 %v1101, %v1097
        %v1106 = vmax.f32 %v1102, %v1098
        %v1107 = vpack.c.bf16 %v1103, %v1103
        %v1108 = vpack.c.bf16 %v1104, %v1104
        %v1109 = vpack.c.bf16 %v1105, %v1105
        %v1110 = vpack.c.bf16 %v1106, %v1106
        %v1111 = vld [vmem:[#allocation5] sm:$0xff]
        %v1112 = vld [vmem:[#allocation5 + $0x8] sm:$0xff]
        %v1113 = vld [vmem:[#allocation5 + $0x10] sm:$0xff]
        %v1114 = vld [vmem:[#allocation5 + $0x18] sm:$0xff]
        %v1115 = vld [vmem:[#allocation5 + $0x20] sm:$0xff]
        %v1116 = vld [vmem:[#allocation5 + $0x28] sm:$0xff]
        %v1117 = vld [vmem:[#allocation5 + $0x30] sm:$0xff]
        %v1118 = vld [vmem:[#allocation5 + $0x38] sm:$0xff]
        %v1119 = vld [vmem:[#allocation5 + $0x40] sm:$0xff]
        %v1120 = vld [vmem:[#allocation5 + $0x48] sm:$0xff]
        %v1121 = vld [vmem:[#allocation5 + $0x50] sm:$0xff]
        %v1122 = vld [vmem:[#allocation5 + $0x58] sm:$0xff]
        %v1123 = vld [vmem:[#allocation5 + $0x60] sm:$0xff]
        %v1124 = vld [vmem:[#allocation5 + $0x68] sm:$0xff]
        %v1125 = vld [vmem:[#allocation5 + $0x70] sm:$0xff]
        %v1126 = vld [vmem:[#allocation5 + $0x78] sm:$0xff]
        %v1127 = vld [vmem:[#allocation5 + $0x80] sm:$0xff]
        %v1128 = vld [vmem:[#allocation5 + $0x88] sm:$0xff]
        %v1129 = vld [vmem:[#allocation5 + $0x90] sm:$0xff]
        %v1130 = vld [vmem:[#allocation5 + $0x98] sm:$0xff]
        %v1131 = vld [vmem:[#allocation5 + $0xa0] sm:$0xff]
        %v1132 = vld [vmem:[#allocation5 + $0xa8] sm:$0xff]
        %v1133 = vld [vmem:[#allocation5 + $0xb0] sm:$0xff]
        %v1134 = vld [vmem:[#allocation5 + $0xb8] sm:$0xff]
        %v1135 = vld [vmem:[#allocation5 + $0xc0] sm:$0xff]
        %v1136 = vld [vmem:[#allocation5 + $0xc8] sm:$0xff]
        %v1137 = vld [vmem:[#allocation5 + $0xd0] sm:$0xff]
        %v1138 = vld [vmem:[#allocation5 + $0xd8] sm:$0xff]
        %v1139 = vld [vmem:[#allocation5 + $0xe0] sm:$0xff]
        %v1140 = vld [vmem:[#allocation5 + $0xe8] sm:$0xff]
        %v1141 = vld [vmem:[#allocation5 + $0xf0] sm:$0xff]
        %v1142 = vld [vmem:[#allocation5 + $0xf8] sm:$0xff]
        %v1143 = vld [vmem:[#allocation5 + $0x100] sm:$0xff]
        %v1144 = vld [vmem:[#allocation5 + $0x108] sm:$0xff]
        %v1145 = vld [vmem:[#allocation5 + $0x110] sm:$0xff]
        %v1146 = vld [vmem:[#allocation5 + $0x118] sm:$0xff]
        %v1147 = vld [vmem:[#allocation5 + $0x120] sm:$0xff]
        %v1148 = vld [vmem:[#allocation5 + $0x128] sm:$0xff]
        %v1149 = vld [vmem:[#allocation5 + $0x130] sm:$0xff]
        %v1150 = vld [vmem:[#allocation5 + $0x138] sm:$0xff]
        %v1151 = vld [vmem:[#allocation5 + $0x140] sm:$0xff]
        %v1152 = vld [vmem:[#allocation5 + $0x148] sm:$0xff]
        %v1153 = vld [vmem:[#allocation5 + $0x150] sm:$0xff]
        %v1154 = vld [vmem:[#allocation5 + $0x158] sm:$0xff]
        %v1155 = vld [vmem:[#allocation5 + $0x160] sm:$0xff]
        %v1156 = vld [vmem:[#allocation5 + $0x168] sm:$0xff]
        %v1157 = vld [vmem:[#allocation5 + $0x170] sm:$0xff]
        %v1158 = vld [vmem:[#allocation5 + $0x178] sm:$0xff]
        %v1159 = vld [vmem:[#allocation5 + $0x180] sm:$0xff]
        %v1160 = vld [vmem:[#allocation5 + $0x188] sm:$0xff]
        %v1161 = vld [vmem:[#allocation5 + $0x190] sm:$0xff]
        %v1162 = vld [vmem:[#allocation5 + $0x198] sm:$0xff]
        %v1163 = vld [vmem:[#allocation5 + $0x1a0] sm:$0xff]
        %v1164 = vld [vmem:[#allocation5 + $0x1a8] sm:$0xff]
        %v1165 = vld [vmem:[#allocation5 + $0x1b0] sm:$0xff]
        %v1166 = vld [vmem:[#allocation5 + $0x1b8] sm:$0xff]
        %v1167 = vld [vmem:[#allocation5 + $0x1c0] sm:$0xff]
        %v1168 = vld [vmem:[#allocation5 + $0x1c8] sm:$0xff]
        %v1169 = vld [vmem:[#allocation5 + $0x1d0] sm:$0xff]
        %v1170 = vld [vmem:[#allocation5 + $0x1d8] sm:$0xff]
        %v1171 = vld [vmem:[#allocation5 + $0x1e0] sm:$0xff]
        %v1172 = vld [vmem:[#allocation5 + $0x1e8] sm:$0xff]
        %v1173 = vld [vmem:[#allocation5 + $0x1f0] sm:$0xff]
        %v1174 = vld [vmem:[#allocation5 + $0x1f8] sm:$0xff]
        %v1175 = vld [vmem:[#allocation5 + $0x200] sm:$0xff]
        %v1176 = vld [vmem:[#allocation5 + $0x208] sm:$0xff]
        %v1177 = vld [vmem:[#allocation5 + $0x210] sm:$0xff]
        %v1178 = vld [vmem:[#allocation5 + $0x218] sm:$0xff]
        %v1179 = vld [vmem:[#allocation5 + $0x220] sm:$0xff]
        %v1180 = vld [vmem:[#allocation5 + $0x228] sm:$0xff]
        %v1181 = vld [vmem:[#allocation5 + $0x230] sm:$0xff]
        %v1182 = vld [vmem:[#allocation5 + $0x238] sm:$0xff]
        %v1183 = vld [vmem:[#allocation5 + $0x240] sm:$0xff]
        %v1184 = vld [vmem:[#allocation5 + $0x248] sm:$0xff]
        %v1185 = vld [vmem:[#allocation5 + $0x250] sm:$0xff]
        %v1186 = vld [vmem:[#allocation5 + $0x258] sm:$0xff]
        %v1187 = vld [vmem:[#allocation5 + $0x260] sm:$0xff]
        %v1188 = vld [vmem:[#allocation5 + $0x268] sm:$0xff]
        %v1189 = vld [vmem:[#allocation5 + $0x270] sm:$0xff]
        %v1190 = vld [vmem:[#allocation5 + $0x278] sm:$0xff]
        %v1191 = vld [vmem:[#allocation5 + $0x280] sm:$0xff]
        %v1192 = vld [vmem:[#allocation5 + $0x288] sm:$0xff]
        %v1193 = vld [vmem:[#allocation5 + $0x290] sm:$0xff]
        %v1194 = vld [vmem:[#allocation5 + $0x298] sm:$0xff]
        %v1195 = vld [vmem:[#allocation5 + $0x2a0] sm:$0xff]
        %v1196 = vld [vmem:[#allocation5 + $0x2a8] sm:$0xff]
        %v1197 = vld [vmem:[#allocation5 + $0x2b0] sm:$0xff]
        %v1198 = vld [vmem:[#allocation5 + $0x2b8] sm:$0xff]
        %v1199 = vld [vmem:[#allocation5 + $0x2c0] sm:$0xff]
        %v1200 = vld [vmem:[#allocation5 + $0x2c8] sm:$0xff]
        %v1201 = vld [vmem:[#allocation5 + $0x2d0] sm:$0xff]
        %v1202 = vld [vmem:[#allocation5 + $0x2d8] sm:$0xff]
        %v1203 = vld [vmem:[#allocation5 + $0x2e0] sm:$0xff]
        %v1204 = vld [vmem:[#allocation5 + $0x2e8] sm:$0xff]
        %v1205 = vld [vmem:[#allocation5 + $0x2f0] sm:$0xff]
        %v1206 = vld [vmem:[#allocation5 + $0x2f8] sm:$0xff]
        %v1207 = vld [vmem:[#allocation5 + $0x300] sm:$0xff]
        %v1208 = vld [vmem:[#allocation5 + $0x308] sm:$0xff]
        %v1209 = vld [vmem:[#allocation5 + $0x310] sm:$0xff]
        %v1210 = vld [vmem:[#allocation5 + $0x318] sm:$0xff]
        %v1211 = vld [vmem:[#allocation5 + $0x320] sm:$0xff]
        %v1212 = vld [vmem:[#allocation5 + $0x328] sm:$0xff]
        %v1213 = vld [vmem:[#allocation5 + $0x330] sm:$0xff]
        %v1214 = vld [vmem:[#allocation5 + $0x338] sm:$0xff]
        %v1215 = vld [vmem:[#allocation5 + $0x340] sm:$0xff]
        %v1216 = vld [vmem:[#allocation5 + $0x348] sm:$0xff]
        %v1217 = vld [vmem:[#allocation5 + $0x350] sm:$0xff]
        %v1218 = vld [vmem:[#allocation5 + $0x358] sm:$0xff]
        %v1219 = vld [vmem:[#allocation5 + $0x360] sm:$0xff]
        %v1220 = vld [vmem:[#allocation5 + $0x368] sm:$0xff]
        %v1221 = vld [vmem:[#allocation5 + $0x370] sm:$0xff]
        %v1222 = vld [vmem:[#allocation5 + $0x378] sm:$0xff]
        %v1223 = vld [vmem:[#allocation5 + $0x380] sm:$0xff]
        %v1224 = vld [vmem:[#allocation5 + $0x388] sm:$0xff]
        %v1225 = vld [vmem:[#allocation5 + $0x390] sm:$0xff]
        %v1226 = vld [vmem:[#allocation5 + $0x398] sm:$0xff]
        %v1227 = vld [vmem:[#allocation5 + $0x3a0] sm:$0xff]
        %v1228 = vld [vmem:[#allocation5 + $0x3a8] sm:$0xff]
        %v1229 = vld [vmem:[#allocation5 + $0x3b0] sm:$0xff]
        %v1230 = vld [vmem:[#allocation5 + $0x3b8] sm:$0xff]
        %v1231 = vld [vmem:[#allocation5 + $0x3c0] sm:$0xff]
        %v1232 = vld [vmem:[#allocation5 + $0x3c8] sm:$0xff]
        %v1233 = vld [vmem:[#allocation5 + $0x3d0] sm:$0xff]
        %v1234 = vld [vmem:[#allocation5 + $0x3d8] sm:$0xff]
        %v1235 = vld [vmem:[#allocation5 + $0x3e0] sm:$0xff]
        %v1236 = vld [vmem:[#allocation5 + $0x3e8] sm:$0xff]
        %v1237 = vld [vmem:[#allocation5 + $0x3f0] sm:$0xff]
        %v1238 = vld [vmem:[#allocation5 + $0x3f8] sm:$0xff]
        %v1239 = vld [vmem:[#allocation5 + $0x400] sm:$0xff]
        %v1240 = vld [vmem:[#allocation5 + $0x408] sm:$0xff]
        %v1241 = vld [vmem:[#allocation5 + $0x410] sm:$0xff]
        %v1242 = vld [vmem:[#allocation5 + $0x418] sm:$0xff]
        %v1243 = vld [vmem:[#allocation5 + $0x420] sm:$0xff]
        %v1244 = vld [vmem:[#allocation5 + $0x428] sm:$0xff]
        %v1245 = vld [vmem:[#allocation5 + $0x430] sm:$0xff]
        %v1246 = vld [vmem:[#allocation5 + $0x438] sm:$0xff]
        %v1247 = vld [vmem:[#allocation5 + $0x440] sm:$0xff]
        %v1248 = vld [vmem:[#allocation5 + $0x448] sm:$0xff]
        %v1249 = vld [vmem:[#allocation5 + $0x450] sm:$0xff]
        %v1250 = vld [vmem:[#allocation5 + $0x458] sm:$0xff]
        %v1251 = vld [vmem:[#allocation5 + $0x460] sm:$0xff]
        %v1252 = vld [vmem:[#allocation5 + $0x468] sm:$0xff]
        %v1253 = vld [vmem:[#allocation5 + $0x470] sm:$0xff]
        %v1254 = vld [vmem:[#allocation5 + $0x478] sm:$0xff]
        %v1255 = vld [vmem:[#allocation5 + $0x480] sm:$0xff]
        %v1256 = vld [vmem:[#allocation5 + $0x488] sm:$0xff]
        %v1257 = vld [vmem:[#allocation5 + $0x490] sm:$0xff]
        %v1258 = vld [vmem:[#allocation5 + $0x498] sm:$0xff]
        %v1259 = vld [vmem:[#allocation5 + $0x4a0] sm:$0xff]
        %v1260 = vld [vmem:[#allocation5 + $0x4a8] sm:$0xff]
        %v1261 = vld [vmem:[#allocation5 + $0x4b0] sm:$0xff]
        %v1262 = vld [vmem:[#allocation5 + $0x4b8] sm:$0xff]
        %v1263 = vld [vmem:[#allocation5 + $0x4c0] sm:$0xff]
        %v1264 = vld [vmem:[#allocation5 + $0x4c8] sm:$0xff]
        %v1265 = vld [vmem:[#allocation5 + $0x4d0] sm:$0xff]
        %v1266 = vld [vmem:[#allocation5 + $0x4d8] sm:$0xff]
        %v1267 = vld [vmem:[#allocation5 + $0x4e0] sm:$0xff]
        %v1268 = vld [vmem:[#allocation5 + $0x4e8] sm:$0xff]
        %v1269 = vld [vmem:[#allocation5 + $0x4f0] sm:$0xff]
        %v1270 = vld [vmem:[#allocation5 + $0x4f8] sm:$0xff]
        %v1271 = vld [vmem:[#allocation5 + $0x500] sm:$0xff]
        %v1272 = vld [vmem:[#allocation5 + $0x508] sm:$0xff]
        %v1273 = vld [vmem:[#allocation5 + $0x510] sm:$0xff]
        %v1274 = vld [vmem:[#allocation5 + $0x518] sm:$0xff]
        %v1275 = vld [vmem:[#allocation5 + $0x520] sm:$0xff]
        %v1276 = vld [vmem:[#allocation5 + $0x528] sm:$0xff]
        %v1277 = vld [vmem:[#allocation5 + $0x530] sm:$0xff]
        %v1278 = vld [vmem:[#allocation5 + $0x538] sm:$0xff]
        %v1279 = vld [vmem:[#allocation5 + $0x540] sm:$0xff]
        %v1280 = vld [vmem:[#allocation5 + $0x548] sm:$0xff]
        %v1281 = vld [vmem:[#allocation5 + $0x550] sm:$0xff]
        %v1282 = vld [vmem:[#allocation5 + $0x558] sm:$0xff]
        %v1283 = vld [vmem:[#allocation5 + $0x560] sm:$0xff]
        %v1284 = vld [vmem:[#allocation5 + $0x568] sm:$0xff]
        %v1285 = vld [vmem:[#allocation5 + $0x570] sm:$0xff]
        %v1286 = vld [vmem:[#allocation5 + $0x578] sm:$0xff]
        %v1287 = vld [vmem:[#allocation5 + $0x580] sm:$0xff]
        %v1288 = vld [vmem:[#allocation5 + $0x588] sm:$0xff]
        %v1289 = vld [vmem:[#allocation5 + $0x590] sm:$0xff]
        %v1290 = vld [vmem:[#allocation5 + $0x598] sm:$0xff]
        %v1291 = vld [vmem:[#allocation5 + $0x5a0] sm:$0xff]
        %v1292 = vld [vmem:[#allocation5 + $0x5a8] sm:$0xff]
        %v1293 = vld [vmem:[#allocation5 + $0x5b0] sm:$0xff]
        %v1294 = vld [vmem:[#allocation5 + $0x5b8] sm:$0xff]
        %v1295 = vld [vmem:[#allocation5 + $0x5c0] sm:$0xff]
        %v1296 = vld [vmem:[#allocation5 + $0x5c8] sm:$0xff]
        %v1297 = vld [vmem:[#allocation5 + $0x5d0] sm:$0xff]
        %v1298 = vld [vmem:[#allocation5 + $0x5d8] sm:$0xff]
        %v1299 = vld [vmem:[#allocation5 + $0x5e0] sm:$0xff]
        %v1300 = vld [vmem:[#allocation5 + $0x5e8] sm:$0xff]
        %v1301 = vld [vmem:[#allocation5 + $0x5f0] sm:$0xff]
        %v1302 = vld [vmem:[#allocation5 + $0x5f8] sm:$0xff]
        %v1303 = vld [vmem:[#allocation5 + $0x600] sm:$0xff]
        %v1304 = vld [vmem:[#allocation5 + $0x608] sm:$0xff]
        %v1305 = vld [vmem:[#allocation5 + $0x610] sm:$0xff]
        %v1306 = vld [vmem:[#allocation5 + $0x618] sm:$0xff]
        %v1307 = vld [vmem:[#allocation5 + $0x620] sm:$0xff]
        %v1308 = vld [vmem:[#allocation5 + $0x628] sm:$0xff]
        %v1309 = vld [vmem:[#allocation5 + $0x630] sm:$0xff]
        %v1310 = vld [vmem:[#allocation5 + $0x638] sm:$0xff]
        %v1311 = vld [vmem:[#allocation5 + $0x640] sm:$0xff]
        %v1312 = vld [vmem:[#allocation5 + $0x648] sm:$0xff]
        %v1313 = vld [vmem:[#allocation5 + $0x650] sm:$0xff]
        %v1314 = vld [vmem:[#allocation5 + $0x658] sm:$0xff]
        %v1315 = vld [vmem:[#allocation5 + $0x660] sm:$0xff]
        %v1316 = vld [vmem:[#allocation5 + $0x668] sm:$0xff]
        %v1317 = vld [vmem:[#allocation5 + $0x670] sm:$0xff]
        %v1318 = vld [vmem:[#allocation5 + $0x678] sm:$0xff]
        %v1319 = vld [vmem:[#allocation5 + $0x680] sm:$0xff]
        %v1320 = vld [vmem:[#allocation5 + $0x688] sm:$0xff]
        %v1321 = vld [vmem:[#allocation5 + $0x690] sm:$0xff]
        %v1322 = vld [vmem:[#allocation5 + $0x698] sm:$0xff]
        %v1323 = vld [vmem:[#allocation5 + $0x6a0] sm:$0xff]
        %v1324 = vld [vmem:[#allocation5 + $0x6a8] sm:$0xff]
        %v1325 = vld [vmem:[#allocation5 + $0x6b0] sm:$0xff]
        %v1326 = vld [vmem:[#allocation5 + $0x6b8] sm:$0xff]
        %v1327 = vld [vmem:[#allocation5 + $0x6c0] sm:$0xff]
        %v1328 = vld [vmem:[#allocation5 + $0x6c8] sm:$0xff]
        %v1329 = vld [vmem:[#allocation5 + $0x6d0] sm:$0xff]
        %v1330 = vld [vmem:[#allocation5 + $0x6d8] sm:$0xff]
        %v1331 = vld [vmem:[#allocation5 + $0x6e0] sm:$0xff]
        %v1332 = vld [vmem:[#allocation5 + $0x6e8] sm:$0xff]
        %v1333 = vld [vmem:[#allocation5 + $0x6f0] sm:$0xff]
        %v1334 = vld [vmem:[#allocation5 + $0x6f8] sm:$0xff]
        %v1335 = vld [vmem:[#allocation5 + $0x700] sm:$0xff]
        %v1336 = vld [vmem:[#allocation5 + $0x708] sm:$0xff]
        %v1337 = vld [vmem:[#allocation5 + $0x710] sm:$0xff]
        %v1338 = vld [vmem:[#allocation5 + $0x718] sm:$0xff]
        %v1339 = vld [vmem:[#allocation5 + $0x720] sm:$0xff]
        %v1340 = vld [vmem:[#allocation5 + $0x728] sm:$0xff]
        %v1341 = vld [vmem:[#allocation5 + $0x730] sm:$0xff]
        %v1342 = vld [vmem:[#allocation5 + $0x738] sm:$0xff]
        %v1343 = vld [vmem:[#allocation5 + $0x740] sm:$0xff]
        %v1344 = vld [vmem:[#allocation5 + $0x748] sm:$0xff]
        %v1345 = vld [vmem:[#allocation5 + $0x750] sm:$0xff]
        %v1346 = vld [vmem:[#allocation5 + $0x758] sm:$0xff]
        %v1347 = vld [vmem:[#allocation5 + $0x760] sm:$0xff]
        %v1348 = vld [vmem:[#allocation5 + $0x768] sm:$0xff]
        %v1349 = vld [vmem:[#allocation5 + $0x770] sm:$0xff]
        %v1350 = vld [vmem:[#allocation5 + $0x778] sm:$0xff]
        %v1351 = vld [vmem:[#allocation5 + $0x780] sm:$0xff]
        %v1352 = vld [vmem:[#allocation5 + $0x788] sm:$0xff]
        %v1353 = vld [vmem:[#allocation5 + $0x790] sm:$0xff]
        %v1354 = vld [vmem:[#allocation5 + $0x798] sm:$0xff]
        %v1355 = vld [vmem:[#allocation5 + $0x7a0] sm:$0xff]
        %v1356 = vld [vmem:[#allocation5 + $0x7a8] sm:$0xff]
        %v1357 = vld [vmem:[#allocation5 + $0x7b0] sm:$0xff]
        %v1358 = vld [vmem:[#allocation5 + $0x7b8] sm:$0xff]
        %v1359 = vld [vmem:[#allocation5 + $0x7c0] sm:$0xff]
        %v1360 = vld [vmem:[#allocation5 + $0x7c8] sm:$0xff]
        %v1361 = vld [vmem:[#allocation5 + $0x7d0] sm:$0xff]
        %v1362 = vld [vmem:[#allocation5 + $0x7d8] sm:$0xff]
        %v1363 = vld [vmem:[#allocation5 + $0x7e0] sm:$0xff]
        %v1364 = vld [vmem:[#allocation5 + $0x7e8] sm:$0xff]
        %v1365 = vld [vmem:[#allocation5 + $0x7f0] sm:$0xff]
        %v1366 = vld [vmem:[#allocation5 + $0x7f8] sm:$0xff]
        %v1367 = vld [vmem:[%s4] sm:$0xff]
        %v1369 = vlaneseq
        %v1370 = vshrl.u32 %v1369, 7
        %v1371 = vsub.s32 0, %v1370
        %v1372 = vrot.slane %v1367, %v1371
        %v1373 = vlaneseq
        %v1374 = vshrl.u32 %v1373, 7
        %v1375 = vsub.s32 1, %v1374
        %v1376 = vrot.slane %v1367, %v1375
        %v1377 = vlaneseq
        %v1378 = vshrl.u32 %v1377, 7
        %v1379 = vsub.s32 2, %v1378
        %v1380 = vrot.slane %v1367, %v1379
        %v1381 = vlaneseq
        %v1382 = vshrl.u32 %v1381, 7
        %v1383 = vsub.s32 3, %v1382
        %v1384 = vrot.slane %v1367, %v1383
        %v1385 = vlaneseq
        %v1386 = vshrl.u32 %v1385, 7
        %v1387 = vsub.s32 4, %v1386
        %v1388 = vrot.slane %v1367, %v1387
        %v1389 = vlaneseq
        %v1390 = vshrl.u32 %v1389, 7
        %v1391 = vsub.s32 5, %v1390
        %v1392 = vrot.slane %v1367, %v1391
        %v1393 = vlaneseq
        %v1394 = vshrl.u32 %v1393, 7
        %v1395 = vsub.s32 6, %v1394
        %v1396 = vrot.slane %v1367, %v1395
        %v1397 = vlaneseq
        %v1398 = vshrl.u32 %v1397, 7
        %v1399 = vsub.s32 7, %v1398
        %v1400 = vrot.slane %v1367, %v1399
        %v1665 = vunpack.c.l.b16 %v1111
        %v1666 = vunpack.c.h.b16 %v1111
        %v1667 = vunpack.c.l.b16 %v1112
        %v1668 = vunpack.c.h.b16 %v1112
        %v1669 = vunpack.c.l.b16 %v1113
        %v1670 = vunpack.c.h.b16 %v1113
        %v1671 = vunpack.c.l.b16 %v1114
        %v1672 = vunpack.c.h.b16 %v1114
        %v1673 = vunpack.c.l.b16 %v1115
        %v1674 = vunpack.c.h.b16 %v1115
        %v1675 = vunpack.c.l.b16 %v1116
        %v1676 = vunpack.c.h.b16 %v1116
        %v1677 = vunpack.c.l.b16 %v1117
        %v1678 = vunpack.c.h.b16 %v1117
        %v1679 = vunpack.c.l.b16 %v1118
        %v1680 = vunpack.c.h.b16 %v1118
        %v1681 = vunpack.c.l.b16 %v1119
        %v1682 = vunpack.c.h.b16 %v1119
        %v1683 = vunpack.c.l.b16 %v1120
        %v1684 = vunpack.c.h.b16 %v1120
        %v1685 = vunpack.c.l.b16 %v1121
        %v1686 = vunpack.c.h.b16 %v1121
        %v1687 = vunpack.c.l.b16 %v1122
        %v1688 = vunpack.c.h.b16 %v1122
        %v1689 = vunpack.c.l.b16 %v1123
        %v1690 = vunpack.c.h.b16 %v1123
        %v1691 = vunpack.c.l.b16 %v1124
        %v1692 = vunpack.c.h.b16 %v1124
        %v1693 = vunpack.c.l.b16 %v1125
        %v1694 = vunpack.c.h.b16 %v1125
        %v1695 = vunpack.c.l.b16 %v1126
        %v1696 = vunpack.c.h.b16 %v1126
        %v1697 = vunpack.c.l.b16 %v1127
        %v1698 = vunpack.c.h.b16 %v1127
        %v1699 = vunpack.c.l.b16 %v1128
        %v1700 = vunpack.c.h.b16 %v1128
        %v1701 = vunpack.c.l.b16 %v1129
        %v1702 = vunpack.c.h.b16 %v1129
        %v1703 = vunpack.c.l.b16 %v1130
        %v1704 = vunpack.c.h.b16 %v1130
        %v1705 = vunpack.c.l.b16 %v1131
        %v1706 = vunpack.c.h.b16 %v1131
        %v1707 = vunpack.c.l.b16 %v1132
        %v1708 = vunpack.c.h.b16 %v1132
        %v1709 = vunpack.c.l.b16 %v1133
        %v1710 = vunpack.c.h.b16 %v1133
        %v1711 = vunpack.c.l.b16 %v1134
        %v1712 = vunpack.c.h.b16 %v1134
        %v1713 = vunpack.c.l.b16 %v1135
        %v1714 = vunpack.c.h.b16 %v1135
        %v1715 = vunpack.c.l.b16 %v1136
        %v1716 = vunpack.c.h.b16 %v1136
        %v1717 = vunpack.c.l.b16 %v1137
        %v1718 = vunpack.c.h.b16 %v1137
        %v1719 = vunpack.c.l.b16 %v1138
        %v1720 = vunpack.c.h.b16 %v1138
        %v1721 = vunpack.c.l.b16 %v1139
        %v1722 = vunpack.c.h.b16 %v1139
        %v1723 = vunpack.c.l.b16 %v1140
        %v1724 = vunpack.c.h.b16 %v1140
        %v1725 = vunpack.c.l.b16 %v1141
        %v1726 = vunpack.c.h.b16 %v1141
        %v1727 = vunpack.c.l.b16 %v1142
        %v1728 = vunpack.c.h.b16 %v1142
        %v1729 = vunpack.c.l.b16 %v1143
        %v1730 = vunpack.c.h.b16 %v1143
        %v1731 = vunpack.c.l.b16 %v1144
        %v1732 = vunpack.c.h.b16 %v1144
        %v1733 = vunpack.c.l.b16 %v1145
        %v1734 = vunpack.c.h.b16 %v1145
        %v1735 = vunpack.c.l.b16 %v1146
        %v1736 = vunpack.c.h.b16 %v1146
        %v1737 = vunpack.c.l.b16 %v1147
        %v1738 = vunpack.c.h.b16 %v1147
        %v1739 = vunpack.c.l.b16 %v1148
        %v1740 = vunpack.c.h.b16 %v1148
        %v1741 = vunpack.c.l.b16 %v1149
        %v1742 = vunpack.c.h.b16 %v1149
        %v1743 = vunpack.c.l.b16 %v1150
        %v1744 = vunpack.c.h.b16 %v1150
        %v1745 = vunpack.c.l.b16 %v1151
        %v1746 = vunpack.c.h.b16 %v1151
        %v1747 = vunpack.c.l.b16 %v1152
        %v1748 = vunpack.c.h.b16 %v1152
        %v1749 = vunpack.c.l.b16 %v1153
        %v1750 = vunpack.c.h.b16 %v1153
        %v1751 = vunpack.c.l.b16 %v1154
        %v1752 = vunpack.c.h.b16 %v1154
        %v1753 = vunpack.c.l.b16 %v1155
        %v1754 = vunpack.c.h.b16 %v1155
        %v1755 = vunpack.c.l.b16 %v1156
        %v1756 = vunpack.c.h.b16 %v1156
        %v1757 = vunpack.c.l.b16 %v1157
        %v1758 = vunpack.c.h.b16 %v1157
        %v1759 = vunpack.c.l.b16 %v1158
        %v1760 = vunpack.c.h.b16 %v1158
        %v1761 = vunpack.c.l.b16 %v1159
        %v1762 = vunpack.c.h.b16 %v1159
        %v1763 = vunpack.c.l.b16 %v1160
        %v1764 = vunpack.c.h.b16 %v1160
        %v1765 = vunpack.c.l.b16 %v1161
        %v1766 = vunpack.c.h.b16 %v1161
        %v1767 = vunpack.c.l.b16 %v1162
        %v1768 = vunpack.c.h.b16 %v1162
        %v1769 = vunpack.c.l.b16 %v1163
        %v1770 = vunpack.c.h.b16 %v1163
        %v1771 = vunpack.c.l.b16 %v1164
        %v1772 = vunpack.c.h.b16 %v1164
        %v1773 = vunpack.c.l.b16 %v1165
        %v1774 = vunpack.c.h.b16 %v1165
        %v1775 = vunpack.c.l.b16 %v1166
        %v1776 = vunpack.c.h.b16 %v1166
        %v1777 = vunpack.c.l.b16 %v1167
        %v1778 = vunpack.c.h.b16 %v1167
        %v1779 = vunpack.c.l.b16 %v1168
        %v1780 = vunpack.c.h.b16 %v1168
        %v1781 = vunpack.c.l.b16 %v1169
        %v1782 = vunpack.c.h.b16 %v1169
        %v1783 = vunpack.c.l.b16 %v1170
        %v1784 = vunpack.c.h.b16 %v1170
        %v1785 = vunpack.c.l.b16 %v1171
        %v1786 = vunpack.c.h.b16 %v1171
        %v1787 = vunpack.c.l.b16 %v1172
        %v1788 = vunpack.c.h.b16 %v1172
        %v1789 = vunpack.c.l.b16 %v1173
        %v1790 = vunpack.c.h.b16 %v1173
        %v1791 = vunpack.c.l.b16 %v1174
        %v1792 = vunpack.c.h.b16 %v1174
        %v1793 = vunpack.c.l.b16 %v1175
        %v1794 = vunpack.c.h.b16 %v1175
        %v1795 = vunpack.c.l.b16 %v1176
        %v1796 = vunpack.c.h.b16 %v1176
        %v1797 = vunpack.c.l.b16 %v1177
        %v1798 = vunpack.c.h.b16 %v1177
        %v1799 = vunpack.c.l.b16 %v1178
        %v1800 = vunpack.c.h.b16 %v1178
        %v1801 = vunpack.c.l.b16 %v1179
        %v1802 = vunpack.c.h.b16 %v1179
        %v1803 = vunpack.c.l.b16 %v1180
        %v1804 = vunpack.c.h.b16 %v1180
        %v1805 = vunpack.c.l.b16 %v1181
        %v1806 = vunpack.c.h.b16 %v1181
        %v1807 = vunpack.c.l.b16 %v1182
        %v1808 = vunpack.c.h.b16 %v1182
        %v1809 = vunpack.c.l.b16 %v1183
        %v1810 = vunpack.c.h.b16 %v1183
        %v1811 = vunpack.c.l.b16 %v1184
        %v1812 = vunpack.c.h.b16 %v1184
        %v1813 = vunpack.c.l.b16 %v1185
        %v1814 = vunpack.c.h.b16 %v1185
        %v1815 = vunpack.c.l.b16 %v1186
        %v1816 = vunpack.c.h.b16 %v1186
        %v1817 = vunpack.c.l.b16 %v1187
        %v1818 = vunpack.c.h.b16 %v1187
        %v1819 = vunpack.c.l.b16 %v1188
        %v1820 = vunpack.c.h.b16 %v1188
        %v1821 = vunpack.c.l.b16 %v1189
        %v1822 = vunpack.c.h.b16 %v1189
        %v1823 = vunpack.c.l.b16 %v1190
        %v1824 = vunpack.c.h.b16 %v1190
        %v1825 = vunpack.c.l.b16 %v1191
        %v1826 = vunpack.c.h.b16 %v1191
        %v1827 = vunpack.c.l.b16 %v1192
        %v1828 = vunpack.c.h.b16 %v1192
        %v1829 = vunpack.c.l.b16 %v1193
        %v1830 = vunpack.c.h.b16 %v1193
        %v1831 = vunpack.c.l.b16 %v1194
        %v1832 = vunpack.c.h.b16 %v1194
        %v1833 = vunpack.c.l.b16 %v1195
        %v1834 = vunpack.c.h.b16 %v1195
        %v1835 = vunpack.c.l.b16 %v1196
        %v1836 = vunpack.c.h.b16 %v1196
        %v1837 = vunpack.c.l.b16 %v1197
        %v1838 = vunpack.c.h.b16 %v1197
        %v1839 = vunpack.c.l.b16 %v1198
        %v1840 = vunpack.c.h.b16 %v1198
        %v1841 = vunpack.c.l.b16 %v1199
        %v1842 = vunpack.c.h.b16 %v1199
        %v1843 = vunpack.c.l.b16 %v1200
        %v1844 = vunpack.c.h.b16 %v1200
        %v1845 = vunpack.c.l.b16 %v1201
        %v1846 = vunpack.c.h.b16 %v1201
        %v1847 = vunpack.c.l.b16 %v1202
        %v1848 = vunpack.c.h.b16 %v1202
        %v1849 = vunpack.c.l.b16 %v1203
        %v1850 = vunpack.c.h.b16 %v1203
        %v1851 = vunpack.c.l.b16 %v1204
        %v1852 = vunpack.c.h.b16 %v1204
        %v1853 = vunpack.c.l.b16 %v1205
        %v1854 = vunpack.c.h.b16 %v1205
        %v1855 = vunpack.c.l.b16 %v1206
        %v1856 = vunpack.c.h.b16 %v1206
        %v1857 = vunpack.c.l.b16 %v1207
        %v1858 = vunpack.c.h.b16 %v1207
        %v1859 = vunpack.c.l.b16 %v1208
        %v1860 = vunpack.c.h.b16 %v1208
        %v1861 = vunpack.c.l.b16 %v1209
        %v1862 = vunpack.c.h.b16 %v1209
        %v1863 = vunpack.c.l.b16 %v1210
        %v1864 = vunpack.c.h.b16 %v1210
        %v1865 = vunpack.c.l.b16 %v1211
        %v1866 = vunpack.c.h.b16 %v1211
        %v1867 = vunpack.c.l.b16 %v1212
        %v1868 = vunpack.c.h.b16 %v1212
        %v1869 = vunpack.c.l.b16 %v1213
        %v1870 = vunpack.c.h.b16 %v1213
        %v1871 = vunpack.c.l.b16 %v1214
        %v1872 = vunpack.c.h.b16 %v1214
        %v1873 = vunpack.c.l.b16 %v1215
        %v1874 = vunpack.c.h.b16 %v1215
        %v1875 = vunpack.c.l.b16 %v1216
        %v1876 = vunpack.c.h.b16 %v1216
        %v1877 = vunpack.c.l.b16 %v1217
        %v1878 = vunpack.c.h.b16 %v1217
        %v1879 = vunpack.c.l.b16 %v1218
        %v1880 = vunpack.c.h.b16 %v1218
        %v1881 = vunpack.c.l.b16 %v1219
        %v1882 = vunpack.c.h.b16 %v1219
        %v1883 = vunpack.c.l.b16 %v1220
        %v1884 = vunpack.c.h.b16 %v1220
        %v1885 = vunpack.c.l.b16 %v1221
        %v1886 = vunpack.c.h.b16 %v1221
        %v1887 = vunpack.c.l.b16 %v1222
        %v1888 = vunpack.c.h.b16 %v1222
        %v1889 = vunpack.c.l.b16 %v1223
        %v1890 = vunpack.c.h.b16 %v1223
        %v1891 = vunpack.c.l.b16 %v1224
        %v1892 = vunpack.c.h.b16 %v1224
        %v1893 = vunpack.c.l.b16 %v1225
        %v1894 = vunpack.c.h.b16 %v1225
        %v1895 = vunpack.c.l.b16 %v1226
        %v1896 = vunpack.c.h.b16 %v1226
        %v1897 = vunpack.c.l.b16 %v1227
        %v1898 = vunpack.c.h.b16 %v1227
        %v1899 = vunpack.c.l.b16 %v1228
        %v1900 = vunpack.c.h.b16 %v1228
        %v1901 = vunpack.c.l.b16 %v1229
        %v1902 = vunpack.c.h.b16 %v1229
        %v1903 = vunpack.c.l.b16 %v1230
        %v1904 = vunpack.c.h.b16 %v1230
        %v1905 = vunpack.c.l.b16 %v1231
        %v1906 = vunpack.c.h.b16 %v1231
        %v1907 = vunpack.c.l.b16 %v1232
        %v1908 = vunpack.c.h.b16 %v1232
        %v1909 = vunpack.c.l.b16 %v1233
        %v1910 = vunpack.c.h.b16 %v1233
        %v1911 = vunpack.c.l.b16 %v1234
        %v1912 = vunpack.c.h.b16 %v1234
        %v1913 = vunpack.c.l.b16 %v1235
        %v1914 = vunpack.c.h.b16 %v1235
        %v1915 = vunpack.c.l.b16 %v1236
        %v1916 = vunpack.c.h.b16 %v1236
        %v1917 = vunpack.c.l.b16 %v1237
        %v1918 = vunpack.c.h.b16 %v1237
        %v1919 = vunpack.c.l.b16 %v1238
        %v1920 = vunpack.c.h.b16 %v1238
        %v1921 = vunpack.c.l.b16 %v1239
        %v1922 = vunpack.c.h.b16 %v1239
        %v1923 = vunpack.c.l.b16 %v1240
        %v1924 = vunpack.c.h.b16 %v1240
        %v1925 = vunpack.c.l.b16 %v1241
        %v1926 = vunpack.c.h.b16 %v1241
        %v1927 = vunpack.c.l.b16 %v1242
        %v1928 = vunpack.c.h.b16 %v1242
        %v1929 = vunpack.c.l.b16 %v1243
        %v1930 = vunpack.c.h.b16 %v1243
        %v1931 = vunpack.c.l.b16 %v1244
        %v1932 = vunpack.c.h.b16 %v1244
        %v1933 = vunpack.c.l.b16 %v1245
        %v1934 = vunpack.c.h.b16 %v1245
        %v1935 = vunpack.c.l.b16 %v1246
        %v1936 = vunpack.c.h.b16 %v1246
        %v1937 = vunpack.c.l.b16 %v1247
        %v1938 = vunpack.c.h.b16 %v1247
        %v1939 = vunpack.c.l.b16 %v1248
        %v1940 = vunpack.c.h.b16 %v1248
        %v1941 = vunpack.c.l.b16 %v1249
        %v1942 = vunpack.c.h.b16 %v1249
        %v1943 = vunpack.c.l.b16 %v1250
        %v1944 = vunpack.c.h.b16 %v1250
        %v1945 = vunpack.c.l.b16 %v1251
        %v1946 = vunpack.c.h.b16 %v1251
        %v1947 = vunpack.c.l.b16 %v1252
        %v1948 = vunpack.c.h.b16 %v1252
        %v1949 = vunpack.c.l.b16 %v1253
        %v1950 = vunpack.c.h.b16 %v1253
        %v1951 = vunpack.c.l.b16 %v1254
        %v1952 = vunpack.c.h.b16 %v1254
        %v1953 = vunpack.c.l.b16 %v1255
        %v1954 = vunpack.c.h.b16 %v1255
        %v1955 = vunpack.c.l.b16 %v1256
        %v1956 = vunpack.c.h.b16 %v1256
        %v1957 = vunpack.c.l.b16 %v1257
        %v1958 = vunpack.c.h.b16 %v1257
        %v1959 = vunpack.c.l.b16 %v1258
        %v1960 = vunpack.c.h.b16 %v1258
        %v1961 = vunpack.c.l.b16 %v1259
        %v1962 = vunpack.c.h.b16 %v1259
        %v1963 = vunpack.c.l.b16 %v1260
        %v1964 = vunpack.c.h.b16 %v1260
        %v1965 = vunpack.c.l.b16 %v1261
        %v1966 = vunpack.c.h.b16 %v1261
        %v1967 = vunpack.c.l.b16 %v1262
        %v1968 = vunpack.c.h.b16 %v1262
        %v1969 = vunpack.c.l.b16 %v1263
        %v1970 = vunpack.c.h.b16 %v1263
        %v1971 = vunpack.c.l.b16 %v1264
        %v1972 = vunpack.c.h.b16 %v1264
        %v1973 = vunpack.c.l.b16 %v1265
        %v1974 = vunpack.c.h.b16 %v1265
        %v1975 = vunpack.c.l.b16 %v1266
        %v1976 = vunpack.c.h.b16 %v1266
        %v1977 = vunpack.c.l.b16 %v1267
        %v1978 = vunpack.c.h.b16 %v1267
        %v1979 = vunpack.c.l.b16 %v1268
        %v1980 = vunpack.c.h.b16 %v1268
        %v1981 = vunpack.c.l.b16 %v1269
        %v1982 = vunpack.c.h.b16 %v1269
        %v1983 = vunpack.c.l.b16 %v1270
        %v1984 = vunpack.c.h.b16 %v1270
        %v1985 = vunpack.c.l.b16 %v1271
        %v1986 = vunpack.c.h.b16 %v1271
        %v1987 = vunpack.c.l.b16 %v1272
        %v1988 = vunpack.c.h.b16 %v1272
        %v1989 = vunpack.c.l.b16 %v1273
        %v1990 = vunpack.c.h.b16 %v1273
        %v1991 = vunpack.c.l.b16 %v1274
        %v1992 = vunpack.c.h.b16 %v1274
        %v1993 = vunpack.c.l.b16 %v1275
        %v1994 = vunpack.c.h.b16 %v1275
        %v1995 = vunpack.c.l.b16 %v1276
        %v1996 = vunpack.c.h.b16 %v1276
        %v1997 = vunpack.c.l.b16 %v1277
        %v1998 = vunpack.c.h.b16 %v1277
        %v1999 = vunpack.c.l.b16 %v1278
        %v2000 = vunpack.c.h.b16 %v1278
        %v2001 = vunpack.c.l.b16 %v1279
        %v2002 = vunpack.c.h.b16 %v1279
        %v2003 = vunpack.c.l.b16 %v1280
        %v2004 = vunpack.c.h.b16 %v1280
        %v2005 = vunpack.c.l.b16 %v1281
        %v2006 = vunpack.c.h.b16 %v1281
        %v2007 = vunpack.c.l.b16 %v1282
        %v2008 = vunpack.c.h.b16 %v1282
        %v2009 = vunpack.c.l.b16 %v1283
        %v2010 = vunpack.c.h.b16 %v1283
        %v2011 = vunpack.c.l.b16 %v1284
        %v2012 = vunpack.c.h.b16 %v1284
        %v2013 = vunpack.c.l.b16 %v1285
        %v2014 = vunpack.c.h.b16 %v1285
        %v2015 = vunpack.c.l.b16 %v1286
        %v2016 = vunpack.c.h.b16 %v1286
        %v2017 = vunpack.c.l.b16 %v1287
        %v2018 = vunpack.c.h.b16 %v1287
        %v2019 = vunpack.c.l.b16 %v1288
        %v2020 = vunpack.c.h.b16 %v1288
        %v2021 = vunpack.c.l.b16 %v1289
        %v2022 = vunpack.c.h.b16 %v1289
        %v2023 = vunpack.c.l.b16 %v1290
        %v2024 = vunpack.c.h.b16 %v1290
        %v2025 = vunpack.c.l.b16 %v1291
        %v2026 = vunpack.c.h.b16 %v1291
        %v2027 = vunpack.c.l.b16 %v1292
        %v2028 = vunpack.c.h.b16 %v1292
        %v2029 = vunpack.c.l.b16 %v1293
        %v2030 = vunpack.c.h.b16 %v1293
        %v2031 = vunpack.c.l.b16 %v1294
        %v2032 = vunpack.c.h.b16 %v1294
        %v2033 = vunpack.c.l.b16 %v1295
        %v2034 = vunpack.c.h.b16 %v1295
        %v2035 = vunpack.c.l.b16 %v1296
        %v2036 = vunpack.c.h.b16 %v1296
        %v2037 = vunpack.c.l.b16 %v1297
        %v2038 = vunpack.c.h.b16 %v1297
        %v2039 = vunpack.c.l.b16 %v1298
        %v2040 = vunpack.c.h.b16 %v1298
        %v2041 = vunpack.c.l.b16 %v1299
        %v2042 = vunpack.c.h.b16 %v1299
        %v2043 = vunpack.c.l.b16 %v1300
        %v2044 = vunpack.c.h.b16 %v1300
        %v2045 = vunpack.c.l.b16 %v1301
        %v2046 = vunpack.c.h.b16 %v1301
        %v2047 = vunpack.c.l.b16 %v1302
        %v2048 = vunpack.c.h.b16 %v1302
        %v2049 = vunpack.c.l.b16 %v1303
        %v2050 = vunpack.c.h.b16 %v1303
        %v2051 = vunpack.c.l.b16 %v1304
        %v2052 = vunpack.c.h.b16 %v1304
        %v2053 = vunpack.c.l.b16 %v1305
        %v2054 = vunpack.c.h.b16 %v1305
        %v2055 = vunpack.c.l.b16 %v1306
        %v2056 = vunpack.c.h.b16 %v1306
        %v2057 = vunpack.c.l.b16 %v1307
        %v2058 = vunpack.c.h.b16 %v1307
        %v2059 = vunpack.c.l.b16 %v1308
        %v2060 = vunpack.c.h.b16 %v1308
        %v2061 = vunpack.c.l.b16 %v1309
        %v2062 = vunpack.c.h.b16 %v1309
        %v2063 = vunpack.c.l.b16 %v1310
        %v2064 = vunpack.c.h.b16 %v1310
        %v2065 = vunpack.c.l.b16 %v1311
        %v2066 = vunpack.c.h.b16 %v1311
        %v2067 = vunpack.c.l.b16 %v1312
        %v2068 = vunpack.c.h.b16 %v1312
        %v2069 = vunpack.c.l.b16 %v1313
        %v2070 = vunpack.c.h.b16 %v1313
        %v2071 = vunpack.c.l.b16 %v1314
        %v2072 = vunpack.c.h.b16 %v1314
        %v2073 = vunpack.c.l.b16 %v1315
        %v2074 = vunpack.c.h.b16 %v1315
        %v2075 = vunpack.c.l.b16 %v1316
        %v2076 = vunpack.c.h.b16 %v1316
        %v2077 = vunpack.c.l.b16 %v1317
        %v2078 = vunpack.c.h.b16 %v1317
        %v2079 = vunpack.c.l.b16 %v1318
        %v2080 = vunpack.c.h.b16 %v1318
        %v2081 = vunpack.c.l.b16 %v1319
        %v2082 = vunpack.c.h.b16 %v1319
        %v2083 = vunpack.c.l.b16 %v1320
        %v2084 = vunpack.c.h.b16 %v1320
        %v2085 = vunpack.c.l.b16 %v1321
        %v2086 = vunpack.c.h.b16 %v1321
        %v2087 = vunpack.c.l.b16 %v1322
        %v2088 = vunpack.c.h.b16 %v1322
        %v2089 = vunpack.c.l.b16 %v1323
        %v2090 = vunpack.c.h.b16 %v1323
        %v2091 = vunpack.c.l.b16 %v1324
        %v2092 = vunpack.c.h.b16 %v1324
        %v2093 = vunpack.c.l.b16 %v1325
        %v2094 = vunpack.c.h.b16 %v1325
        %v2095 = vunpack.c.l.b16 %v1326
        %v2096 = vunpack.c.h.b16 %v1326
        %v2097 = vunpack.c.l.b16 %v1327
        %v2098 = vunpack.c.h.b16 %v1327
        %v2099 = vunpack.c.l.b16 %v1328
        %v2100 = vunpack.c.h.b16 %v1328
        %v2101 = vunpack.c.l.b16 %v1329
        %v2102 = vunpack.c.h.b16 %v1329
        %v2103 = vunpack.c.l.b16 %v1330
        %v2104 = vunpack.c.h.b16 %v1330
        %v2105 = vunpack.c.l.b16 %v1331
        %v2106 = vunpack.c.h.b16 %v1331
        %v2107 = vunpack.c.l.b16 %v1332
        %v2108 = vunpack.c.h.b16 %v1332
        %v2109 = vunpack.c.l.b16 %v1333
        %v2110 = vunpack.c.h.b16 %v1333
        %v2111 = vunpack.c.l.b16 %v1334
        %v2112 = vunpack.c.h.b16 %v1334
        %v2113 = vunpack.c.l.b16 %v1335
        %v2114 = vunpack.c.h.b16 %v1335
        %v2115 = vunpack.c.l.b16 %v1336
        %v2116 = vunpack.c.h.b16 %v1336
        %v2117 = vunpack.c.l.b16 %v1337
        %v2118 = vunpack.c.h.b16 %v1337
        %v2119 = vunpack.c.l.b16 %v1338
        %v2120 = vunpack.c.h.b16 %v1338
        %v2121 = vunpack.c.l.b16 %v1339
        %v2122 = vunpack.c.h.b16 %v1339
        %v2123 = vunpack.c.l.b16 %v1340
        %v2124 = vunpack.c.h.b16 %v1340
        %v2125 = vunpack.c.l.b16 %v1341
        %v2126 = vunpack.c.h.b16 %v1341
        %v2127 = vunpack.c.l.b16 %v1342
        %v2128 = vunpack.c.h.b16 %v1342
        %v2129 = vunpack.c.l.b16 %v1343
        %v2130 = vunpack.c.h.b16 %v1343
        %v2131 = vunpack.c.l.b16 %v1344
        %v2132 = vunpack.c.h.b16 %v1344
        %v2133 = vunpack.c.l.b16 %v1345
        %v2134 = vunpack.c.h.b16 %v1345
        %v2135 = vunpack.c.l.b16 %v1346
        %v2136 = vunpack.c.h.b16 %v1346
        %v2137 = vunpack.c.l.b16 %v1347
        %v2138 = vunpack.c.h.b16 %v1347
        %v2139 = vunpack.c.l.b16 %v1348
        %v2140 = vunpack.c.h.b16 %v1348
        %v2141 = vunpack.c.l.b16 %v1349
        %v2142 = vunpack.c.h.b16 %v1349
        %v2143 = vunpack.c.l.b16 %v1350
        %v2144 = vunpack.c.h.b16 %v1350
        %v2145 = vunpack.c.l.b16 %v1351
        %v2146 = vunpack.c.h.b16 %v1351
        %v2147 = vunpack.c.l.b16 %v1352
        %v2148 = vunpack.c.h.b16 %v1352
        %v2149 = vunpack.c.l.b16 %v1353
        %v2150 = vunpack.c.h.b16 %v1353
        %v2151 = vunpack.c.l.b16 %v1354
        %v2152 = vunpack.c.h.b16 %v1354
        %v2153 = vunpack.c.l.b16 %v1355
        %v2154 = vunpack.c.h.b16 %v1355
        %v2155 = vunpack.c.l.b16 %v1356
        %v2156 = vunpack.c.h.b16 %v1356
        %v2157 = vunpack.c.l.b16 %v1357
        %v2158 = vunpack.c.h.b16 %v1357
        %v2159 = vunpack.c.l.b16 %v1358
        %v2160 = vunpack.c.h.b16 %v1358
        %v2161 = vunpack.c.l.b16 %v1359
        %v2162 = vunpack.c.h.b16 %v1359
        %v2163 = vunpack.c.l.b16 %v1360
        %v2164 = vunpack.c.h.b16 %v1360
        %v2165 = vunpack.c.l.b16 %v1361
        %v2166 = vunpack.c.h.b16 %v1361
        %v2167 = vunpack.c.l.b16 %v1362
        %v2168 = vunpack.c.h.b16 %v1362
        %v2169 = vunpack.c.l.b16 %v1363
        %v2170 = vunpack.c.h.b16 %v1363
        %v2171 = vunpack.c.l.b16 %v1364
        %v2172 = vunpack.c.h.b16 %v1364
        %v2173 = vunpack.c.l.b16 %v1365
        %v2174 = vunpack.c.h.b16 %v1365
        %v2175 = vunpack.c.l.b16 %v1366
        %v2176 = vunpack.c.h.b16 %v1366
        %v2177 = vpack.c.b16 %v1673, %v1665
        %v2178 = vpack.c.b16 %v1674, %v1666
        %v2179 = vpack.c.b16 %v1675, %v1667
        %v2180 = vpack.c.b16 %v1676, %v1668
        %v2181 = vpack.c.b16 %v1677, %v1669
        %v2182 = vpack.c.b16 %v1678, %v1670
        %v2183 = vpack.c.b16 %v1679, %v1671
        %v2184 = vpack.c.b16 %v1680, %v1672
        %v2185 = vpack.c.b16 %v1689, %v1681
        %v2186 = vpack.c.b16 %v1690, %v1682
        %v2187 = vpack.c.b16 %v1691, %v1683
        %v2188 = vpack.c.b16 %v1692, %v1684
        %v2189 = vpack.c.b16 %v1693, %v1685
        %v2190 = vpack.c.b16 %v1694, %v1686
        %v2191 = vpack.c.b16 %v1695, %v1687
        %v2192 = vpack.c.b16 %v1696, %v1688
        %v2193 = vpack.c.b16 %v1705, %v1697
        %v2194 = vpack.c.b16 %v1706, %v1698
        %v2195 = vpack.c.b16 %v1707, %v1699
        %v2196 = vpack.c.b16 %v1708, %v1700
        %v2197 = vpack.c.b16 %v1709, %v1701
        %v2198 = vpack.c.b16 %v1710, %v1702
        %v2199 = vpack.c.b16 %v1711, %v1703
        %v2200 = vpack.c.b16 %v1712, %v1704
        %v2201 = vpack.c.b16 %v1721, %v1713
        %v2202 = vpack.c.b16 %v1722, %v1714
        %v2203 = vpack.c.b16 %v1723, %v1715
        %v2204 = vpack.c.b16 %v1724, %v1716
        %v2205 = vpack.c.b16 %v1725, %v1717
        %v2206 = vpack.c.b16 %v1726, %v1718
        %v2207 = vpack.c.b16 %v1727, %v1719
        %v2208 = vpack.c.b16 %v1728, %v1720
        %v2209 = vpack.c.b16 %v1737, %v1729
        %v2210 = vpack.c.b16 %v1738, %v1730
        %v2211 = vpack.c.b16 %v1739, %v1731
        %v2212 = vpack.c.b16 %v1740, %v1732
        %v2213 = vpack.c.b16 %v1741, %v1733
        %v2214 = vpack.c.b16 %v1742, %v1734
        %v2215 = vpack.c.b16 %v1743, %v1735
        %v2216 = vpack.c.b16 %v1744, %v1736
        %v2217 = vpack.c.b16 %v1753, %v1745
        %v2218 = vpack.c.b16 %v1754, %v1746
        %v2219 = vpack.c.b16 %v1755, %v1747
        %v2220 = vpack.c.b16 %v1756, %v1748
        %v2221 = vpack.c.b16 %v1757, %v1749
        %v2222 = vpack.c.b16 %v1758, %v1750
        %v2223 = vpack.c.b16 %v1759, %v1751
        %v2224 = vpack.c.b16 %v1760, %v1752
        %v2225 = vpack.c.b16 %v1769, %v1761
        %v2226 = vpack.c.b16 %v1770, %v1762
        %v2227 = vpack.c.b16 %v1771, %v1763
        %v2228 = vpack.c.b16 %v1772, %v1764
        %v2229 = vpack.c.b16 %v1773, %v1765
        %v2230 = vpack.c.b16 %v1774, %v1766
        %v2231 = vpack.c.b16 %v1775, %v1767
        %v2232 = vpack.c.b16 %v1776, %v1768
        %v2233 = vpack.c.b16 %v1785, %v1777
        %v2234 = vpack.c.b16 %v1786, %v1778
        %v2235 = vpack.c.b16 %v1787, %v1779
        %v2236 = vpack.c.b16 %v1788, %v1780
        %v2237 = vpack.c.b16 %v1789, %v1781
        %v2238 = vpack.c.b16 %v1790, %v1782
        %v2239 = vpack.c.b16 %v1791, %v1783
        %v2240 = vpack.c.b16 %v1792, %v1784
        %v2241 = vpack.c.b16 %v1801, %v1793
        %v2242 = vpack.c.b16 %v1802, %v1794
        %v2243 = vpack.c.b16 %v1803, %v1795
        %v2244 = vpack.c.b16 %v1804, %v1796
        %v2245 = vpack.c.b16 %v1805, %v1797
        %v2246 = vpack.c.b16 %v1806, %v1798
        %v2247 = vpack.c.b16 %v1807, %v1799
        %v2248 = vpack.c.b16 %v1808, %v1800
        %v2249 = vpack.c.b16 %v1817, %v1809
        %v2250 = vpack.c.b16 %v1818, %v1810
        %v2251 = vpack.c.b16 %v1819, %v1811
        %v2252 = vpack.c.b16 %v1820, %v1812
        %v2253 = vpack.c.b16 %v1821, %v1813
        %v2254 = vpack.c.b16 %v1822, %v1814
        %v2255 = vpack.c.b16 %v1823, %v1815
        %v2256 = vpack.c.b16 %v1824, %v1816
        %v2257 = vpack.c.b16 %v1833, %v1825
        %v2258 = vpack.c.b16 %v1834, %v1826
        %v2259 = vpack.c.b16 %v1835, %v1827
        %v2260 = vpack.c.b16 %v1836, %v1828
        %v2261 = vpack.c.b16 %v1837, %v1829
        %v2262 = vpack.c.b16 %v1838, %v1830
        %v2263 = vpack.c.b16 %v1839, %v1831
        %v2264 = vpack.c.b16 %v1840, %v1832
        %v2265 = vpack.c.b16 %v1849, %v1841
        %v2266 = vpack.c.b16 %v1850, %v1842
        %v2267 = vpack.c.b16 %v1851, %v1843
        %v2268 = vpack.c.b16 %v1852, %v1844
        %v2269 = vpack.c.b16 %v1853, %v1845
        %v2270 = vpack.c.b16 %v1854, %v1846
        %v2271 = vpack.c.b16 %v1855, %v1847
        %v2272 = vpack.c.b16 %v1856, %v1848
        %v2273 = vpack.c.b16 %v1865, %v1857
        %v2274 = vpack.c.b16 %v1866, %v1858
        %v2275 = vpack.c.b16 %v1867, %v1859
        %v2276 = vpack.c.b16 %v1868, %v1860
        %v2277 = vpack.c.b16 %v1869, %v1861
        %v2278 = vpack.c.b16 %v1870, %v1862
        %v2279 = vpack.c.b16 %v1871, %v1863
        %v2280 = vpack.c.b16 %v1872, %v1864
        %v2281 = vpack.c.b16 %v1881, %v1873
        %v2282 = vpack.c.b16 %v1882, %v1874
        %v2283 = vpack.c.b16 %v1883, %v1875
        %v2284 = vpack.c.b16 %v1884, %v1876
        %v2285 = vpack.c.b16 %v1885, %v1877
        %v2286 = vpack.c.b16 %v1886, %v1878
        %v2287 = vpack.c.b16 %v1887, %v1879
        %v2288 = vpack.c.b16 %v1888, %v1880
        %v2289 = vpack.c.b16 %v1897, %v1889
        %v2290 = vpack.c.b16 %v1898, %v1890
        %v2291 = vpack.c.b16 %v1899, %v1891
        %v2292 = vpack.c.b16 %v1900, %v1892
        %v2293 = vpack.c.b16 %v1901, %v1893
        %v2294 = vpack.c.b16 %v1902, %v1894
        %v2295 = vpack.c.b16 %v1903, %v1895
        %v2296 = vpack.c.b16 %v1904, %v1896
        %v2297 = vpack.c.b16 %v1913, %v1905
        %v2298 = vpack.c.b16 %v1914, %v1906
        %v2299 = vpack.c.b16 %v1915, %v1907
        %v2300 = vpack.c.b16 %v1916, %v1908
        %v2301 = vpack.c.b16 %v1917, %v1909
        %v2302 = vpack.c.b16 %v1918, %v1910
        %v2303 = vpack.c.b16 %v1919, %v1911
        %v2304 = vpack.c.b16 %v1920, %v1912
        %v2305 = vpack.c.b16 %v1929, %v1921
        %v2306 = vpack.c.b16 %v1930, %v1922
        %v2307 = vpack.c.b16 %v1931, %v1923
        %v2308 = vpack.c.b16 %v1932, %v1924
        %v2309 = vpack.c.b16 %v1933, %v1925
        %v2310 = vpack.c.b16 %v1934, %v1926
        %v2311 = vpack.c.b16 %v1935, %v1927
        %v2312 = vpack.c.b16 %v1936, %v1928
        %v2313 = vpack.c.b16 %v1945, %v1937
        %v2314 = vpack.c.b16 %v1946, %v1938
        %v2315 = vpack.c.b16 %v1947, %v1939
        %v2316 = vpack.c.b16 %v1948, %v1940
        %v2317 = vpack.c.b16 %v1949, %v1941
        %v2318 = vpack.c.b16 %v1950, %v1942
        %v2319 = vpack.c.b16 %v1951, %v1943
        %v2320 = vpack.c.b16 %v1952, %v1944
        %v2321 = vpack.c.b16 %v1961, %v1953
        %v2322 = vpack.c.b16 %v1962, %v1954
        %v2323 = vpack.c.b16 %v1963, %v1955
        %v2324 = vpack.c.b16 %v1964, %v1956
        %v2325 = vpack.c.b16 %v1965, %v1957
        %v2326 = vpack.c.b16 %v1966, %v1958
        %v2327 = vpack.c.b16 %v1967, %v1959
        %v2328 = vpack.c.b16 %v1968, %v1960
        %v2329 = vpack.c.b16 %v1977, %v1969
        %v2330 = vpack.c.b16 %v1978, %v1970
        %v2331 = vpack.c.b16 %v1979, %v1971
        %v2332 = vpack.c.b16 %v1980, %v1972
        %v2333 = vpack.c.b16 %v1981, %v1973
        %v2334 = vpack.c.b16 %v1982, %v1974
        %v2335 = vpack.c.b16 %v1983, %v1975
        %v2336 = vpack.c.b16 %v1984, %v1976
        %v2337 = vpack.c.b16 %v1993, %v1985
        %v2338 = vpack.c.b16 %v1994, %v1986
        %v2339 = vpack.c.b16 %v1995, %v1987
        %v2340 = vpack.c.b16 %v1996, %v1988
        %v2341 = vpack.c.b16 %v1997, %v1989
        %v2342 = vpack.c.b16 %v1998, %v1990
        %v2343 = vpack.c.b16 %v1999, %v1991
        %v2344 = vpack.c.b16 %v2000, %v1992
        %v2345 = vpack.c.b16 %v2009, %v2001
        %v2346 = vpack.c.b16 %v2010, %v2002
        %v2347 = vpack.c.b16 %v2011, %v2003
        %v2348 = vpack.c.b16 %v2012, %v2004
        %v2349 = vpack.c.b16 %v2013, %v2005
        %v2350 = vpack.c.b16 %v2014, %v2006
        %v2351 = vpack.c.b16 %v2015, %v2007
        %v2352 = vpack.c.b16 %v2016, %v2008
        %v2353 = vpack.c.b16 %v2025, %v2017
        %v2354 = vpack.c.b16 %v2026, %v2018
        %v2355 = vpack.c.b16 %v2027, %v2019
        %v2356 = vpack.c.b16 %v2028, %v2020
        %v2357 = vpack.c.b16 %v2029, %v2021
        %v2358 = vpack.c.b16 %v2030, %v2022
        %v2359 = vpack.c.b16 %v2031, %v2023
        %v2360 = vpack.c.b16 %v2032, %v2024
        %v2361 = vpack.c.b16 %v2041, %v2033
        %v2362 = vpack.c.b16 %v2042, %v2034
        %v2363 = vpack.c.b16 %v2043, %v2035
        %v2364 = vpack.c.b16 %v2044, %v2036
        %v2365 = vpack.c.b16 %v2045, %v2037
        %v2366 = vpack.c.b16 %v2046, %v2038
        %v2367 = vpack.c.b16 %v2047, %v2039
        %v2368 = vpack.c.b16 %v2048, %v2040
        %v2369 = vpack.c.b16 %v2057, %v2049
        %v2370 = vpack.c.b16 %v2058, %v2050
        %v2371 = vpack.c.b16 %v2059, %v2051
        %v2372 = vpack.c.b16 %v2060, %v2052
        %v2373 = vpack.c.b16 %v2061, %v2053
        %v2374 = vpack.c.b16 %v2062, %v2054
        %v2375 = vpack.c.b16 %v2063, %v2055
        %v2376 = vpack.c.b16 %v2064, %v2056
        %v2377 = vpack.c.b16 %v2073, %v2065
        %v2378 = vpack.c.b16 %v2074, %v2066
        %v2379 = vpack.c.b16 %v2075, %v2067
        %v2380 = vpack.c.b16 %v2076, %v2068
        %v2381 = vpack.c.b16 %v2077, %v2069
        %v2382 = vpack.c.b16 %v2078, %v2070
        %v2383 = vpack.c.b16 %v2079, %v2071
        %v2384 = vpack.c.b16 %v2080, %v2072
        %v2385 = vpack.c.b16 %v2089, %v2081
        %v2386 = vpack.c.b16 %v2090, %v2082
        %v2387 = vpack.c.b16 %v2091, %v2083
        %v2388 = vpack.c.b16 %v2092, %v2084
        %v2389 = vpack.c.b16 %v2093, %v2085
        %v2390 = vpack.c.b16 %v2094, %v2086
        %v2391 = vpack.c.b16 %v2095, %v2087
        %v2392 = vpack.c.b16 %v2096, %v2088
        %v2393 = vpack.c.b16 %v2105, %v2097
        %v2394 = vpack.c.b16 %v2106, %v2098
        %v2395 = vpack.c.b16 %v2107, %v2099
        %v2396 = vpack.c.b16 %v2108, %v2100
        %v2397 = vpack.c.b16 %v2109, %v2101
        %v2398 = vpack.c.b16 %v2110, %v2102
        %v2399 = vpack.c.b16 %v2111, %v2103
        %v2400 = vpack.c.b16 %v2112, %v2104
        %v2401 = vpack.c.b16 %v2121, %v2113
        %v2402 = vpack.c.b16 %v2122, %v2114
        %v2403 = vpack.c.b16 %v2123, %v2115
        %v2404 = vpack.c.b16 %v2124, %v2116
        %v2405 = vpack.c.b16 %v2125, %v2117
        %v2406 = vpack.c.b16 %v2126, %v2118
        %v2407 = vpack.c.b16 %v2127, %v2119
        %v2408 = vpack.c.b16 %v2128, %v2120
        %v2409 = vpack.c.b16 %v2137, %v2129
        %v2410 = vpack.c.b16 %v2138, %v2130
        %v2411 = vpack.c.b16 %v2139, %v2131
        %v2412 = vpack.c.b16 %v2140, %v2132
        %v2413 = vpack.c.b16 %v2141, %v2133
        %v2414 = vpack.c.b16 %v2142, %v2134
        %v2415 = vpack.c.b16 %v2143, %v2135
        %v2416 = vpack.c.b16 %v2144, %v2136
        %v2417 = vpack.c.b16 %v2153, %v2145
        %v2418 = vpack.c.b16 %v2154, %v2146
        %v2419 = vpack.c.b16 %v2155, %v2147
        %v2420 = vpack.c.b16 %v2156, %v2148
        %v2421 = vpack.c.b16 %v2157, %v2149
        %v2422 = vpack.c.b16 %v2158, %v2150
        %v2423 = vpack.c.b16 %v2159, %v2151
        %v2424 = vpack.c.b16 %v2160, %v2152
        %v2425 = vpack.c.b16 %v2169, %v2161
        %v2426 = vpack.c.b16 %v2170, %v2162
        %v2427 = vpack.c.b16 %v2171, %v2163
        %v2428 = vpack.c.b16 %v2172, %v2164
        %v2429 = vpack.c.b16 %v2173, %v2165
        %v2430 = vpack.c.b16 %v2174, %v2166
        %v2431 = vpack.c.b16 %v2175, %v2167
        %v2432 = vpack.c.b16 %v2176, %v2168
        %2689 = vmatprep.subr.bf16.mxu0 %v2234
        %2690 = vmatpush1.bf16.msra.mxu0 %v2233
        %2691 = vmatprep.subr.bf16.mxu0 %v2226
        %2692 = vmatpush1.bf16.msra.mxu0 %v2225
        %2693 = vmatprep.subr.bf16.mxu0 %v2218
        %2694 = vmatpush1.bf16.msra.mxu0 %v2217
        %2695 = vmatprep.subr.bf16.mxu0 %v2210
        %2696 = vmatpush1.bf16.msra.mxu0 %v2209
        %2697 = vmatprep.subr.bf16.mxu0 %v2202
        %2698 = vmatpush1.bf16.msra.mxu0 %v2201
        %2699 = vmatprep.subr.bf16.mxu0 %v2194
        %2700 = vmatpush1.bf16.msra.mxu0 %v2193
        %2701 = vmatprep.subr.bf16.mxu0 %v2186
        %2702 = vmatpush1.bf16.msra.mxu0 %v2185
        %2703 = vmatprep.subr.bf16.mxu0 %v2178
        %2704 = vmatpush1.bf16.msra.mxu0 %v2177
        %2705 = vmatprep.subr.bf16.mxu0 %v2298
        %2706 = vmatpush2.bf16.msra.mxu0 %v2297
        %2707 = vmatprep.subr.bf16.mxu0 %v2290
        %2708 = vmatpush2.bf16.msra.mxu0 %v2289
        %2709 = vmatprep.subr.bf16.mxu0 %v2282
        %2710 = vmatpush2.bf16.msra.mxu0 %v2281
        %2711 = vmatprep.subr.bf16.mxu0 %v2274
        %2712 = vmatpush2.bf16.msra.mxu0 %v2273
        %2713 = vmatprep.subr.bf16.mxu0 %v2266
        %2714 = vmatpush2.bf16.msra.mxu0 %v2265
        %2715 = vmatprep.subr.bf16.mxu0 %v2258
        %2716 = vmatpush2.bf16.msra.mxu0 %v2257
        %2717 = vmatprep.subr.bf16.mxu0 %v2250
        %2718 = vmatpush2.bf16.msra.mxu0 %v2249
        %2719 = vmatprep.subr.bf16.mxu0 %v2242
        %2720 = vmatpush2.bf16.msra.mxu0 %v2241
        %2721 = vmatprep.mubr.bf16.mxu0 %v1108
        %2722 = vmatmul.mubr.bf16.gmra.mxu0 %v1107
        %v2723 = vpop.f32.mrf.mxu0
        %v2724 = vadd.f32 %v1372, %v2723
        %v2725 = vpop.f32.mrf.mxu0
        %v2726 = vadd.f32 %v1376, %v2725
        %v2727 = vpop.f32.mrf.mxu0
        %v2728 = vpop.f32.mrf.mxu0
        %2729 = vdwg.mxu0
        %2730 = vmatprep.subr.bf16.mxu0 %v2362
        %2731 = vmatpush1.bf16.msra.mxu0 %v2361
        %2732 = vmatprep.subr.bf16.mxu0 %v2354
        %2733 = vmatpush1.bf16.msra.mxu0 %v2353
        %2734 = vmatprep.subr.bf16.mxu0 %v2346
        %2735 = vmatpush1.bf16.msra.mxu0 %v2345
        %2736 = vmatprep.subr.bf16.mxu0 %v2338
        %2737 = vmatpush1.bf16.msra.mxu0 %v2337
        %2738 = vmatprep.subr.bf16.mxu0 %v2330
        %2739 = vmatpush1.bf16.msra.mxu0 %v2329
        %2740 = vmatprep.subr.bf16.mxu0 %v2322
        %2741 = vmatpush1.bf16.msra.mxu0 %v2321
        %2742 = vmatprep.subr.bf16.mxu0 %v2314
        %2743 = vmatpush1.bf16.msra.mxu0 %v2313
        %2744 = vmatprep.subr.bf16.mxu0 %v2306
        %2745 = vmatpush1.bf16.msra.mxu0 %v2305
        %2746 = vmatprep.subr.bf16.mxu0 %v2426
        %2747 = vmatpush2.bf16.msra.mxu0 %v2425
        %2748 = vmatprep.subr.bf16.mxu0 %v2418
        %2749 = vmatpush2.bf16.msra.mxu0 %v2417
        %2750 = vmatprep.subr.bf16.mxu0 %v2410
        %2751 = vmatpush2.bf16.msra.mxu0 %v2409
        %2752 = vmatprep.subr.bf16.mxu0 %v2402
        %2753 = vmatpush2.bf16.msra.mxu0 %v2401
        %2754 = vmatprep.subr.bf16.mxu0 %v2394
        %2755 = vmatpush2.bf16.msra.mxu0 %v2393
        %2756 = vmatprep.subr.bf16.mxu0 %v2386
        %2757 = vmatpush2.bf16.msra.mxu0 %v2385
        %2758 = vmatprep.subr.bf16.mxu0 %v2378
        %2759 = vmatpush2.bf16.msra.mxu0 %v2377
        %2760 = vmatprep.subr.bf16.mxu0 %v2370
        %2761 = vmatpush2.bf16.msra.mxu0 %v2369
        %2762 = vmatprep.mubr.bf16.mxu0 %v1110
        %2763 = vmatmul.mubr.bf16.gmra.mxu0 %v1109
        %v2764 = vpop.f32.mrf.mxu0
        %v2765 = vadd.f32 %v2724, %v2764
        %v2766 = vpop.f32.mrf.mxu0
        %v2767 = vadd.f32 %v2726, %v2766
        %v2768 = vpop.f32.mrf.mxu0
        %v2769 = vpop.f32.mrf.mxu0
        %2770 = vdwg.mxu0
        %2771 = vmatprep.subr.bf16.mxu0 %v2236
        %2772 = vmatpush1.bf16.msra.mxu0 %v2235
        %2773 = vmatprep.subr.bf16.mxu0 %v2228
        %2774 = vmatpush1.bf16.msra.mxu0 %v2227
        %2775 = vmatprep.subr.bf16.mxu0 %v2220
        %2776 = vmatpush1.bf16.msra.mxu0 %v2219
        %2777 = vmatprep.subr.bf16.mxu0 %v2212
        %2778 = vmatpush1.bf16.msra.mxu0 %v2211
        %2779 = vmatprep.subr.bf16.mxu0 %v2204
        %2780 = vmatpush1.bf16.msra.mxu0 %v2203
        %2781 = vmatprep.subr.bf16.mxu0 %v2196
        %2782 = vmatpush1.bf16.msra.mxu0 %v2195
        %2783 = vmatprep.subr.bf16.mxu0 %v2188
        %2784 = vmatpush1.bf16.msra.mxu0 %v2187
        %2785 = vmatprep.subr.bf16.mxu0 %v2180
        %2786 = vmatpush1.bf16.msra.mxu0 %v2179
        %2787 = vmatprep.subr.bf16.mxu0 %v2300
        %2788 = vmatpush2.bf16.msra.mxu0 %v2299
        %2789 = vmatprep.subr.bf16.mxu0 %v2292
        %2790 = vmatpush2.bf16.msra.mxu0 %v2291
        %2791 = vmatprep.subr.bf16.mxu0 %v2284
        %2792 = vmatpush2.bf16.msra.mxu0 %v2283
        %2793 = vmatprep.subr.bf16.mxu0 %v2276
        %2794 = vmatpush2.bf16.msra.mxu0 %v2275
        %2795 = vmatprep.subr.bf16.mxu0 %v2268
        %2796 = vmatpush2.bf16.msra.mxu0 %v2267
        %2797 = vmatprep.subr.bf16.mxu0 %v2260
        %2798 = vmatpush2.bf16.msra.mxu0 %v2259
        %2799 = vmatprep.subr.bf16.mxu0 %v2252
        %2800 = vmatpush2.bf16.msra.mxu0 %v2251
        %2801 = vmatprep.subr.bf16.mxu0 %v2244
        %2802 = vmatpush2.bf16.msra.mxu0 %v2243
        %2803 = vmatprep.mubr.bf16.mxu0 %v1108
        %2804 = vmatmul.mubr.bf16.gmra.mxu0 %v1107
        %v2805 = vpop.f32.mrf.mxu0
        %v2806 = vadd.f32 %v1380, %v2805
        %v2807 = vpop.f32.mrf.mxu0
        %v2808 = vadd.f32 %v1384, %v2807
        %v2809 = vpop.f32.mrf.mxu0
        %v2810 = vpop.f32.mrf.mxu0
        %2811 = vdwg.mxu0
        %2812 = vmatprep.subr.bf16.mxu0 %v2364
        %2813 = vmatpush1.bf16.msra.mxu0 %v2363
        %2814 = vmatprep.subr.bf16.mxu0 %v2356
        %2815 = vmatpush1.bf16.msra.mxu0 %v2355
        %2816 = vmatprep.subr.bf16.mxu0 %v2348
        %2817 = vmatpush1.bf16.msra.mxu0 %v2347
        %2818 = vmatprep.subr.bf16.mxu0 %v2340
        %2819 = vmatpush1.bf16.msra.mxu0 %v2339
        %2820 = vmatprep.subr.bf16.mxu0 %v2332
        %2821 = vmatpush1.bf16.msra.mxu0 %v2331
        %2822 = vmatprep.subr.bf16.mxu0 %v2324
        %2823 = vmatpush1.bf16.msra.mxu0 %v2323
        %2824 = vmatprep.subr.bf16.mxu0 %v2316
        %2825 = vmatpush1.bf16.msra.mxu0 %v2315
        %2826 = vmatprep.subr.bf16.mxu0 %v2308
        %2827 = vmatpush1.bf16.msra.mxu0 %v2307
        %2828 = vmatprep.subr.bf16.mxu0 %v2428
        %2829 = vmatpush2.bf16.msra.mxu0 %v2427
        %2830 = vmatprep.subr.bf16.mxu0 %v2420
        %2831 = vmatpush2.bf16.msra.mxu0 %v2419
        %2832 = vmatprep.subr.bf16.mxu0 %v2412
        %2833 = vmatpush2.bf16.msra.mxu0 %v2411
        %2834 = vmatprep.subr.bf16.mxu0 %v2404
        %2835 = vmatpush2.bf16.msra.mxu0 %v2403
        %2836 = vmatprep.subr.bf16.mxu0 %v2396
        %2837 = vmatpush2.bf16.msra.mxu0 %v2395
        %2838 = vmatprep.subr.bf16.mxu0 %v2388
        %2839 = vmatpush2.bf16.msra.mxu0 %v2387
        %2840 = vmatprep.subr.bf16.mxu0 %v2380
        %2841 = vmatpush2.bf16.msra.mxu0 %v2379
        %2842 = vmatprep.subr.bf16.mxu0 %v2372
        %2843 = vmatpush2.bf16.msra.mxu0 %v2371
        %2844 = vmatprep.mubr.bf16.mxu0 %v1110
        %2845 = vmatmul.mubr.bf16.gmra.mxu0 %v1109
        %v2846 = vpop.f32.mrf.mxu0
        %v2847 = vadd.f32 %v2806, %v2846
        %v2848 = vpop.f32.mrf.mxu0
        %v2849 = vadd.f32 %v2808, %v2848
        %v2850 = vpop.f32.mrf.mxu0
        %v2851 = vpop.f32.mrf.mxu0
        %2852 = vdwg.mxu0
        %2853 = vmatprep.subr.bf16.mxu0 %v2238
        %2854 = vmatpush1.bf16.msra.mxu0 %v2237
        %2855 = vmatprep.subr.bf16.mxu0 %v2230
        %2856 = vmatpush1.bf16.msra.mxu0 %v2229
        %2857 = vmatprep.subr.bf16.mxu0 %v2222
        %2858 = vmatpush1.bf16.msra.mxu0 %v2221
        %2859 = vmatprep.subr.bf16.mxu0 %v2214
        %2860 = vmatpush1.bf16.msra.mxu0 %v2213
        %2861 = vmatprep.subr.bf16.mxu0 %v2206
        %2862 = vmatpush1.bf16.msra.mxu0 %v2205
        %2863 = vmatprep.subr.bf16.mxu0 %v2198
        %2864 = vmatpush1.bf16.msra.mxu0 %v2197
        %2865 = vmatprep.subr.bf16.mxu0 %v2190
        %2866 = vmatpush1.bf16.msra.mxu0 %v2189
        %2867 = vmatprep.subr.bf16.mxu0 %v2182
        %2868 = vmatpush1.bf16.msra.mxu0 %v2181
        %2869 = vmatprep.subr.bf16.mxu0 %v2302
        %2870 = vmatpush2.bf16.msra.mxu0 %v2301
        %2871 = vmatprep.subr.bf16.mxu0 %v2294
        %2872 = vmatpush2.bf16.msra.mxu0 %v2293
        %2873 = vmatprep.subr.bf16.mxu0 %v2286
        %2874 = vmatpush2.bf16.msra.mxu0 %v2285
        %2875 = vmatprep.subr.bf16.mxu0 %v2278
        %2876 = vmatpush2.bf16.msra.mxu0 %v2277
        %2877 = vmatprep.subr.bf16.mxu0 %v2270
        %2878 = vmatpush2.bf16.msra.mxu0 %v2269
        %2879 = vmatprep.subr.bf16.mxu0 %v2262
        %2880 = vmatpush2.bf16.msra.mxu0 %v2261
        %2881 = vmatprep.subr.bf16.mxu0 %v2254
        %2882 = vmatpush2.bf16.msra.mxu0 %v2253
        %2883 = vmatprep.subr.bf16.mxu0 %v2246
        %2884 = vmatpush2.bf16.msra.mxu0 %v2245
        %2885 = vmatprep.mubr.bf16.mxu0 %v1108
        %2886 = vmatmul.mubr.bf16.gmra.mxu0 %v1107
        %v2887 = vpop.f32.mrf.mxu0
        %v2888 = vadd.f32 %v1388, %v2887
        %v2889 = vpop.f32.mrf.mxu0
        %v2890 = vadd.f32 %v1392, %v2889
        %v2891 = vpop.f32.mrf.mxu0
        %v2892 = vpop.f32.mrf.mxu0
        %2893 = vdwg.mxu0
        %2894 = vmatprep.subr.bf16.mxu0 %v2366
        %2895 = vmatpush1.bf16.msra.mxu0 %v2365
        %2896 = vmatprep.subr.bf16.mxu0 %v2358
        %2897 = vmatpush1.bf16.msra.mxu0 %v2357
        %2898 = vmatprep.subr.bf16.mxu0 %v2350
        %2899 = vmatpush1.bf16.msra.mxu0 %v2349
        %2900 = vmatprep.subr.bf16.mxu0 %v2342
        %2901 = vmatpush1.bf16.msra.mxu0 %v2341
        %2902 = vmatprep.subr.bf16.mxu0 %v2334
        %2903 = vmatpush1.bf16.msra.mxu0 %v2333
        %2904 = vmatprep.subr.bf16.mxu0 %v2326
        %2905 = vmatpush1.bf16.msra.mxu0 %v2325
        %2906 = vmatprep.subr.bf16.mxu0 %v2318
        %2907 = vmatpush1.bf16.msra.mxu0 %v2317
        %2908 = vmatprep.subr.bf16.mxu0 %v2310
        %2909 = vmatpush1.bf16.msra.mxu0 %v2309
        %2910 = vmatprep.subr.bf16.mxu0 %v2430
        %2911 = vmatpush2.bf16.msra.mxu0 %v2429
        %2912 = vmatprep.subr.bf16.mxu0 %v2422
        %2913 = vmatpush2.bf16.msra.mxu0 %v2421
        %2914 = vmatprep.subr.bf16.mxu0 %v2414
        %2915 = vmatpush2.bf16.msra.mxu0 %v2413
        %2916 = vmatprep.subr.bf16.mxu0 %v2406
        %2917 = vmatpush2.bf16.msra.mxu0 %v2405
        %2918 = vmatprep.subr.bf16.mxu0 %v2398
        %2919 = vmatpush2.bf16.msra.mxu0 %v2397
        %2920 = vmatprep.subr.bf16.mxu0 %v2390
        %2921 = vmatpush2.bf16.msra.mxu0 %v2389
        %2922 = vmatprep.subr.bf16.mxu0 %v2382
        %2923 = vmatpush2.bf16.msra.mxu0 %v2381
        %2924 = vmatprep.subr.bf16.mxu0 %v2374
        %2925 = vmatpush2.bf16.msra.mxu0 %v2373
        %2926 = vmatprep.mubr.bf16.mxu0 %v1110
        %2927 = vmatmul.mubr.bf16.gmra.mxu0 %v1109
        %v2928 = vpop.f32.mrf.mxu0
        %v2929 = vadd.f32 %v2888, %v2928
        %v2930 = vpop.f32.mrf.mxu0
        %v2931 = vadd.f32 %v2890, %v2930
        %v2932 = vpop.f32.mrf.mxu0
        %v2933 = vpop.f32.mrf.mxu0
        %2934 = vdwg.mxu0
        %2935 = vmatprep.subr.bf16.mxu0 %v2240
        %2936 = vmatpush1.bf16.msra.mxu0 %v2239
        %2937 = vmatprep.subr.bf16.mxu0 %v2232
        %2938 = vmatpush1.bf16.msra.mxu0 %v2231
        %2939 = vmatprep.subr.bf16.mxu0 %v2224
        %2940 = vmatpush1.bf16.msra.mxu0 %v2223
        %2941 = vmatprep.subr.bf16.mxu0 %v2216
        %2942 = vmatpush1.bf16.msra.mxu0 %v2215
        %2943 = vmatprep.subr.bf16.mxu0 %v2208
        %2944 = vmatpush1.bf16.msra.mxu0 %v2207
        %2945 = vmatprep.subr.bf16.mxu0 %v2200
        %2946 = vmatpush1.bf16.msra.mxu0 %v2199
        %2947 = vmatprep.subr.bf16.mxu0 %v2192
        %2948 = vmatpush1.bf16.msra.mxu0 %v2191
        %2949 = vmatprep.subr.bf16.mxu0 %v2184
        %2950 = vmatpush1.bf16.msra.mxu0 %v2183
        %2951 = vmatprep.subr.bf16.mxu0 %v2304
        %2952 = vmatpush2.bf16.msra.mxu0 %v2303
        %2953 = vmatprep.subr.bf16.mxu0 %v2296
        %2954 = vmatpush2.bf16.msra.mxu0 %v2295
        %2955 = vmatprep.subr.bf16.mxu0 %v2288
        %2956 = vmatpush2.bf16.msra.mxu0 %v2287
        %2957 = vmatprep.subr.bf16.mxu0 %v2280
        %2958 = vmatpush2.bf16.msra.mxu0 %v2279
        %2959 = vmatprep.subr.bf16.mxu0 %v2272
        %2960 = vmatpush2.bf16.msra.mxu0 %v2271
        %2961 = vmatprep.subr.bf16.mxu0 %v2264
        %2962 = vmatpush2.bf16.msra.mxu0 %v2263
        %2963 = vmatprep.subr.bf16.mxu0 %v2256
        %2964 = vmatpush2.bf16.msra.mxu0 %v2255
        %2965 = vmatprep.subr.bf16.mxu0 %v2248
        %2966 = vmatpush2.bf16.msra.mxu0 %v2247
        %2967 = vmatprep.mubr.bf16.mxu0 %v1108
        %2968 = vmatmul.mubr.bf16.gmra.mxu0 %v1107
        %v2969 = vpop.f32.mrf.mxu0
        %v2970 = vadd.f32 %v1396, %v2969
        %v2971 = vpop.f32.mrf.mxu0
        %v2972 = vadd.f32 %v1400, %v2971
        %v2973 = vpop.f32.mrf.mxu0
        %v2974 = vpop.f32.mrf.mxu0
        %2975 = vdwg.mxu0
        %2976 = vmatprep.subr.bf16.mxu0 %v2368
        %2977 = vmatpush1.bf16.msra.mxu0 %v2367
        %2978 = vmatprep.subr.bf16.mxu0 %v2360
        %2979 = vmatpush1.bf16.msra.mxu0 %v2359
        %2980 = vmatprep.subr.bf16.mxu0 %v2352
        %2981 = vmatpush1.bf16.msra.mxu0 %v2351
        %2982 = vmatprep.subr.bf16.mxu0 %v2344
        %2983 = vmatpush1.bf16.msra.mxu0 %v2343
        %2984 = vmatprep.subr.bf16.mxu0 %v2336
        %2985 = vmatpush1.bf16.msra.mxu0 %v2335
        %2986 = vmatprep.subr.bf16.mxu0 %v2328
        %2987 = vmatpush1.bf16.msra.mxu0 %v2327
        %2988 = vmatprep.subr.bf16.mxu0 %v2320
        %2989 = vmatpush1.bf16.msra.mxu0 %v2319
        %2990 = vmatprep.subr.bf16.mxu0 %v2312
        %2991 = vmatpush1.bf16.msra.mxu0 %v2311
        %2992 = vmatprep.subr.bf16.mxu0 %v2432
        %2993 = vmatpush2.bf16.msra.mxu0 %v2431
        %2994 = vmatprep.subr.bf16.mxu0 %v2424
        %2995 = vmatpush2.bf16.msra.mxu0 %v2423
        %2996 = vmatprep.subr.bf16.mxu0 %v2416
        %2997 = vmatpush2.bf16.msra.mxu0 %v2415
        %2998 = vmatprep.subr.bf16.mxu0 %v2408
        %2999 = vmatpush2.bf16.msra.mxu0 %v2407
        %3000 = vmatprep.subr.bf16.mxu0 %v2400
        %3001 = vmatpush2.bf16.msra.mxu0 %v2399
        %3002 = vmatprep.subr.bf16.mxu0 %v2392
        %3003 = vmatpush2.bf16.msra.mxu0 %v2391
        %3004 = vmatprep.subr.bf16.mxu0 %v2384
        %3005 = vmatpush2.bf16.msra.mxu0 %v2383
        %3006 = vmatprep.subr.bf16.mxu0 %v2376
        %3007 = vmatpush2.bf16.msra.mxu0 %v2375
        %3008 = vmatprep.mubr.bf16.mxu0 %v1110
        %3009 = vmatmul.mubr.bf16.gmra.mxu0 %v1109
        %v3010 = vpop.f32.mrf.mxu0
        %v3011 = vadd.f32 %v2970, %v3010
        %v3012 = vpop.f32.mrf.mxu0
        %v3013 = vadd.f32 %v2972, %v3012
        %v3014 = vpop.f32.mrf.mxu0
        %v3015 = vpop.f32.mrf.mxu0
        %3016 = vdwg.mxu0
        %v3017 = vmax.f32 %v2765, 0.0
        %v3018 = vmax.f32 %v2767, 0.0
        %v3019 = vmax.f32 %v2847, 0.0
        %v3020 = vmax.f32 %v2849, 0.0
        %v3021 = vmax.f32 %v2929, 0.0
        %v3022 = vmax.f32 %v2931, 0.0
        %v3023 = vmax.f32 %v3011, 0.0
        %v3024 = vmax.f32 %v3013, 0.0
        %v3025 = vmax.f32 %v3017, %v3021
        %v3026 = vmax.f32 %v3018, %v3022
        %v3027 = vmax.f32 %v3019, %v3023
        %v3028 = vmax.f32 %v3020, %v3024
        %v3029 = vpack.c.bf16 %v3025, %v3025
        %v3030 = vpack.c.bf16 %v3026, %v3026
        %v3031 = vpack.c.bf16 %v3027, %v3027
        %v3032 = vpack.c.bf16 %v3028, %v3028
        %v3033 = vld [vmem:[#allocation7] sm:$0xf]
        %v3034 = vld [vmem:[#allocation7 + $0x4] sm:$0xf]
        %v3035 = vld [vmem:[#allocation7 + $0x8] sm:$0xf]
        %v3036 = vld [vmem:[#allocation7 + $0xc] sm:$0xf]
        %v3037 = vld [vmem:[#allocation7 + $0x10] sm:$0xf]
        %v3038 = vld [vmem:[#allocation7 + $0x14] sm:$0xf]
        %v3039 = vld [vmem:[#allocation7 + $0x18] sm:$0xf]
        %v3040 = vld [vmem:[#allocation7 + $0x1c] sm:$0xf]
        %v3041 = vld [vmem:[#allocation7 + $0x20] sm:$0xf]
        %v3042 = vld [vmem:[#allocation7 + $0x24] sm:$0xf]
        %v3043 = vld [vmem:[#allocation7 + $0x28] sm:$0xf]
        %v3044 = vld [vmem:[#allocation7 + $0x2c] sm:$0xf]
        %v3045 = vld [vmem:[#allocation7 + $0x30] sm:$0xf]
        %v3046 = vld [vmem:[#allocation7 + $0x34] sm:$0xf]
        %v3047 = vld [vmem:[#allocation7 + $0x38] sm:$0xf]
        %v3048 = vld [vmem:[#allocation7 + $0x3c] sm:$0xf]
        %v3049 = vld [vmem:[#allocation7 + $0x40] sm:$0xf]
        %v3050 = vld [vmem:[#allocation7 + $0x44] sm:$0xf]
        %v3051 = vld [vmem:[#allocation7 + $0x48] sm:$0xf]
        %v3052 = vld [vmem:[#allocation7 + $0x4c] sm:$0xf]
        %v3053 = vld [vmem:[#allocation7 + $0x50] sm:$0xf]
        %v3054 = vld [vmem:[#allocation7 + $0x54] sm:$0xf]
        %v3055 = vld [vmem:[#allocation7 + $0x58] sm:$0xf]
        %v3056 = vld [vmem:[#allocation7 + $0x5c] sm:$0xf]
        %v3057 = vld [vmem:[#allocation7 + $0x60] sm:$0xf]
        %v3058 = vld [vmem:[#allocation7 + $0x64] sm:$0xf]
        %v3059 = vld [vmem:[#allocation7 + $0x68] sm:$0xf]
        %v3060 = vld [vmem:[#allocation7 + $0x6c] sm:$0xf]
        %v3061 = vld [vmem:[#allocation7 + $0x70] sm:$0xf]
        %v3062 = vld [vmem:[#allocation7 + $0x74] sm:$0xf]
        %v3063 = vld [vmem:[#allocation7 + $0x78] sm:$0xf]
        %v3064 = vld [vmem:[#allocation7 + $0x7c] sm:$0xf]
        %v3065 = vld [vmem:[#allocation7 + $0x80] sm:$0xf]
        %v3066 = vld [vmem:[#allocation7 + $0x84] sm:$0xf]
        %v3067 = vld [vmem:[#allocation7 + $0x88] sm:$0xf]
        %v3068 = vld [vmem:[#allocation7 + $0x8c] sm:$0xf]
        %v3069 = vld [vmem:[#allocation7 + $0x90] sm:$0xf]
        %v3070 = vld [vmem:[#allocation7 + $0x94] sm:$0xf]
        %v3071 = vld [vmem:[#allocation7 + $0x98] sm:$0xf]
        %v3072 = vld [vmem:[#allocation7 + $0x9c] sm:$0xf]
        %v3073 = vld [vmem:[#allocation7 + $0xa0] sm:$0xf]
        %v3074 = vld [vmem:[#allocation7 + $0xa4] sm:$0xf]
        %v3075 = vld [vmem:[#allocation7 + $0xa8] sm:$0xf]
        %v3076 = vld [vmem:[#allocation7 + $0xac] sm:$0xf]
        %v3077 = vld [vmem:[#allocation7 + $0xb0] sm:$0xf]
        %v3078 = vld [vmem:[#allocation7 + $0xb4] sm:$0xf]
        %v3079 = vld [vmem:[#allocation7 + $0xb8] sm:$0xf]
        %v3080 = vld [vmem:[#allocation7 + $0xbc] sm:$0xf]
        %v3081 = vld [vmem:[#allocation7 + $0xc0] sm:$0xf]
        %v3082 = vld [vmem:[#allocation7 + $0xc4] sm:$0xf]
        %v3083 = vld [vmem:[#allocation7 + $0xc8] sm:$0xf]
        %v3084 = vld [vmem:[#allocation7 + $0xcc] sm:$0xf]
        %v3085 = vld [vmem:[#allocation7 + $0xd0] sm:$0xf]
        %v3086 = vld [vmem:[#allocation7 + $0xd4] sm:$0xf]
        %v3087 = vld [vmem:[#allocation7 + $0xd8] sm:$0xf]
        %v3088 = vld [vmem:[#allocation7 + $0xdc] sm:$0xf]
        %v3089 = vld [vmem:[#allocation7 + $0xe0] sm:$0xf]
        %v3090 = vld [vmem:[#allocation7 + $0xe4] sm:$0xf]
        %v3091 = vld [vmem:[#allocation7 + $0xe8] sm:$0xf]
        %v3092 = vld [vmem:[#allocation7 + $0xec] sm:$0xf]
        %v3093 = vld [vmem:[#allocation7 + $0xf0] sm:$0xf]
        %v3094 = vld [vmem:[#allocation7 + $0xf4] sm:$0xf]
        %v3095 = vld [vmem:[#allocation7 + $0xf8] sm:$0xf]
        %v3096 = vld [vmem:[#allocation7 + $0xfc] sm:$0xf]
        %v3097 = vld [vmem:[%s6] sm:$0x1]
        %v3099 = vlaneseq
        %v3100 = vshrl.u32 %v3099, 7
        %v3101 = vsub.s32 0, %v3100
        %v3102 = vrot.slane %v3097, %v3101
        %v3168 = vunpack.c.l.b16 %v3033
        %v3169 = vunpack.c.l.b16 %v3034
        %v3170 = vunpack.c.l.b16 %v3035
        %v3171 = vunpack.c.l.b16 %v3036
        %v3172 = vunpack.c.l.b16 %v3037
        %v3173 = vunpack.c.l.b16 %v3038
        %v3174 = vunpack.c.l.b16 %v3039
        %v3175 = vunpack.c.l.b16 %v3040
        %v3176 = vunpack.c.l.b16 %v3041
        %v3177 = vunpack.c.l.b16 %v3042
        %v3178 = vunpack.c.l.b16 %v3043
        %v3179 = vunpack.c.l.b16 %v3044
        %v3180 = vunpack.c.l.b16 %v3045
        %v3181 = vunpack.c.l.b16 %v3046
        %v3182 = vunpack.c.l.b16 %v3047
        %v3183 = vunpack.c.l.b16 %v3048
        %v3184 = vunpack.c.l.b16 %v3049
        %v3185 = vunpack.c.l.b16 %v3050
        %v3186 = vunpack.c.l.b16 %v3051
        %v3187 = vunpack.c.l.b16 %v3052
        %v3188 = vunpack.c.l.b16 %v3053
        %v3189 = vunpack.c.l.b16 %v3054
        %v3190 = vunpack.c.l.b16 %v3055
        %v3191 = vunpack.c.l.b16 %v3056
        %v3192 = vunpack.c.l.b16 %v3057
        %v3193 = vunpack.c.l.b16 %v3058
        %v3194 = vunpack.c.l.b16 %v3059
        %v3195 = vunpack.c.l.b16 %v3060
        %v3196 = vunpack.c.l.b16 %v3061
        %v3197 = vunpack.c.l.b16 %v3062
        %v3198 = vunpack.c.l.b16 %v3063
        %v3199 = vunpack.c.l.b16 %v3064
        %v3200 = vunpack.c.l.b16 %v3065
        %v3201 = vunpack.c.l.b16 %v3066
        %v3202 = vunpack.c.l.b16 %v3067
        %v3203 = vunpack.c.l.b16 %v3068
        %v3204 = vunpack.c.l.b16 %v3069
        %v3205 = vunpack.c.l.b16 %v3070
        %v3206 = vunpack.c.l.b16 %v3071
        %v3207 = vunpack.c.l.b16 %v3072
        %v3208 = vunpack.c.l.b16 %v3073
        %v3209 = vunpack.c.l.b16 %v3074
        %v3210 = vunpack.c.l.b16 %v3075
        %v3211 = vunpack.c.l.b16 %v3076
        %v3212 = vunpack.c.l.b16 %v3077
        %v3213 = vunpack.c.l.b16 %v3078
        %v3214 = vunpack.c.l.b16 %v3079
        %v3215 = vunpack.c.l.b16 %v3080
        %v3216 = vunpack.c.l.b16 %v3081
        %v3217 = vunpack.c.l.b16 %v3082
        %v3218 = vunpack.c.l.b16 %v3083
        %v3219 = vunpack.c.l.b16 %v3084
        %v3220 = vunpack.c.l.b16 %v3085
        %v3221 = vunpack.c.l.b16 %v3086
        %v3222 = vunpack.c.l.b16 %v3087
        %v3223 = vunpack.c.l.b16 %v3088
        %v3224 = vunpack.c.l.b16 %v3089
        %v3225 = vunpack.c.l.b16 %v3090
        %v3226 = vunpack.c.l.b16 %v3091
        %v3227 = vunpack.c.l.b16 %v3092
        %v3228 = vunpack.c.l.b16 %v3093
        %v3229 = vunpack.c.l.b16 %v3094
        %v3230 = vunpack.c.l.b16 %v3095
        %v3231 = vunpack.c.l.b16 %v3096
        %v3232 = vpack.c.b16 %v3169, %v3168
        %v3233 = vpack.c.b16 %v3171, %v3170
        %v3234 = vpack.c.b16 %v3173, %v3172
        %v3235 = vpack.c.b16 %v3175, %v3174
        %v3236 = vpack.c.b16 %v3177, %v3176
        %v3237 = vpack.c.b16 %v3179, %v3178
        %v3238 = vpack.c.b16 %v3181, %v3180
        %v3239 = vpack.c.b16 %v3183, %v3182
        %v3240 = vpack.c.b16 %v3185, %v3184
        %v3241 = vpack.c.b16 %v3187, %v3186
        %v3242 = vpack.c.b16 %v3189, %v3188
        %v3243 = vpack.c.b16 %v3191, %v3190
        %v3244 = vpack.c.b16 %v3193, %v3192
        %v3245 = vpack.c.b16 %v3195, %v3194
        %v3246 = vpack.c.b16 %v3197, %v3196
        %v3247 = vpack.c.b16 %v3199, %v3198
        %v3248 = vpack.c.b16 %v3201, %v3200
        %v3249 = vpack.c.b16 %v3203, %v3202
        %v3250 = vpack.c.b16 %v3205, %v3204
        %v3251 = vpack.c.b16 %v3207, %v3206
        %v3252 = vpack.c.b16 %v3209, %v3208
        %v3253 = vpack.c.b16 %v3211, %v3210
        %v3254 = vpack.c.b16 %v3213, %v3212
        %v3255 = vpack.c.b16 %v3215, %v3214
        %v3256 = vpack.c.b16 %v3217, %v3216
        %v3257 = vpack.c.b16 %v3219, %v3218
        %v3258 = vpack.c.b16 %v3221, %v3220
        %v3259 = vpack.c.b16 %v3223, %v3222
        %v3260 = vpack.c.b16 %v3225, %v3224
        %v3261 = vpack.c.b16 %v3227, %v3226
        %v3262 = vpack.c.b16 %v3229, %v3228
        %v3263 = vpack.c.b16 %v3231, %v3230
        %3296 = vmatprep.subr.bf16.mxu0 0
        %3297 = vmatpush1.bf16.msra.mxu0 %v3239
        %3298 = vmatprep.subr.bf16.mxu0 0
        %3299 = vmatpush1.bf16.msra.mxu0 %v3238
        %3300 = vmatprep.subr.bf16.mxu0 0
        %3301 = vmatpush1.bf16.msra.mxu0 %v3237
        %3302 = vmatprep.subr.bf16.mxu0 0
        %3303 = vmatpush1.bf16.msra.mxu0 %v3236
        %3304 = vmatprep.subr.bf16.mxu0 0
        %3305 = vmatpush1.bf16.msra.mxu0 %v3235
        %3306 = vmatprep.subr.bf16.mxu0 0
        %3307 = vmatpush1.bf16.msra.mxu0 %v3234
        %3308 = vmatprep.subr.bf16.mxu0 0
        %3309 = vmatpush1.bf16.msra.mxu0 %v3233
        %3310 = vmatprep.subr.bf16.mxu0 0
        %3311 = vmatpush1.bf16.msra.mxu0 %v3232
        %3312 = vmatprep.subr.bf16.mxu0 0
        %3313 = vmatpush2.bf16.msra.mxu0 %v3247
        %3314 = vmatprep.subr.bf16.mxu0 0
        %3315 = vmatpush2.bf16.msra.mxu0 %v3246
        %3316 = vmatprep.subr.bf16.mxu0 0
        %3317 = vmatpush2.bf16.msra.mxu0 %v3245
        %3318 = vmatprep.subr.bf16.mxu0 0
        %3319 = vmatpush2.bf16.msra.mxu0 %v3244
        %3320 = vmatprep.subr.bf16.mxu0 0
        %3321 = vmatpush2.bf16.msra.mxu0 %v3243
        %3322 = vmatprep.subr.bf16.mxu0 0
        %3323 = vmatpush2.bf16.msra.mxu0 %v3242
        %3324 = vmatprep.subr.bf16.mxu0 0
        %3325 = vmatpush2.bf16.msra.mxu0 %v3241
        %3326 = vmatprep.subr.bf16.mxu0 0
        %3327 = vmatpush2.bf16.msra.mxu0 %v3240
        %3328 = vmatprep.mubr.bf16.mxu0 %v3030
        %3329 = vmatmul.mubr.bf16.gmra.mxu0 %v3029
        %v3330 = vpop.f32.mrf.mxu0
        %v3331 = vadd.f32 %v3102, %v3330
        %v3332 = vpop.f32.mrf.mxu0
        %v3333 = vpop.f32.mrf.mxu0
        %v3334 = vpop.f32.mrf.mxu0
        %3335 = vdwg.mxu0
        %3336 = vmatprep.subr.bf16.mxu0 0
        %3337 = vmatpush1.bf16.msra.mxu0 %v3255
        %3338 = vmatprep.subr.bf16.mxu0 0
        %3339 = vmatpush1.bf16.msra.mxu0 %v3254
        %3340 = vmatprep.subr.bf16.mxu0 0
        %3341 = vmatpush1.bf16.msra.mxu0 %v3253
        %3342 = vmatprep.subr.bf16.mxu0 0
        %3343 = vmatpush1.bf16.msra.mxu0 %v3252
        %3344 = vmatprep.subr.bf16.mxu0 0
        %3345 = vmatpush1.bf16.msra.mxu0 %v3251
        %3346 = vmatprep.subr.bf16.mxu0 0
        %3347 = vmatpush1.bf16.msra.mxu0 %v3250
        %3348 = vmatprep.subr.bf16.mxu0 0
        %3349 = vmatpush1.bf16.msra.mxu0 %v3249
        %3350 = vmatprep.subr.bf16.mxu0 0
        %3351 = vmatpush1.bf16.msra.mxu0 %v3248
        %3352 = vmatprep.subr.bf16.mxu0 0
        %3353 = vmatpush2.bf16.msra.mxu0 %v3263
        %3354 = vmatprep.subr.bf16.mxu0 0
        %3355 = vmatpush2.bf16.msra.mxu0 %v3262
        %3356 = vmatprep.subr.bf16.mxu0 0
        %3357 = vmatpush2.bf16.msra.mxu0 %v3261
        %3358 = vmatprep.subr.bf16.mxu0 0
        %3359 = vmatpush2.bf16.msra.mxu0 %v3260
        %3360 = vmatprep.subr.bf16.mxu0 0
        %3361 = vmatpush2.bf16.msra.mxu0 %v3259
        %3362 = vmatprep.subr.bf16.mxu0 0
        %3363 = vmatpush2.bf16.msra.mxu0 %v3258
        %3364 = vmatprep.subr.bf16.mxu0 0
        %3365 = vmatpush2.bf16.msra.mxu0 %v3257
        %3366 = vmatprep.subr.bf16.mxu0 0
        %3367 = vmatpush2.bf16.msra.mxu0 %v3256
        %3368 = vmatprep.mubr.bf16.mxu0 %v3032
        %3369 = vmatmul.mubr.bf16.gmra.mxu0 %v3031
        %v3370 = vpop.f32.mrf.mxu0
        %v3371 = vadd.f32 %v3331, %v3370
        %v3372 = vpop.f32.mrf.mxu0
        %v3373 = vpop.f32.mrf.mxu0
        %v3374 = vpop.f32.mrf.mxu0
        %3375 = vdwg.mxu0
        %v3376 = vmax.f32 %v3371, 0.0
        %v3377 = vpack.c.bf16 %v3376, %v3376
        %v3378 = vld [vmem:[%s7] sm:$0xf]
        %v3379 = vld [vmem:[%s7 + $0x4] sm:$0xf]
        %v3380 = vld [vmem:[%s7 + $0x8] sm:$0xf]
        %v3381 = vld [vmem:[%s7 + $0xc] sm:$0xf]
        %v3382 = vld [vmem:[%s7 + $0x10] sm:$0xf]
        %v3383 = vld [vmem:[%s7 + $0x14] sm:$0xf]
        %v3384 = vld [vmem:[%s7 + $0x18] sm:$0xf]
        %v3385 = vld [vmem:[%s7 + $0x1c] sm:$0xf]
        %v3386 = vld [vmem:[%s7 + $0x20] sm:$0xf]
        %v3387 = vld [vmem:[%s7 + $0x24] sm:$0xf]
        %v3388 = vld [vmem:[%s7 + $0x28] sm:$0xf]
        %v3389 = vld [vmem:[%s7 + $0x2c] sm:$0xf]
        %v3390 = vld [vmem:[%s7 + $0x30] sm:$0xf]
        %v3391 = vld [vmem:[%s7 + $0x34] sm:$0xf]
        %v3392 = vld [vmem:[%s7 + $0x38] sm:$0xf]
        %v3393 = vld [vmem:[%s7 + $0x3c] sm:$0xf]
        %v3394 = vld [vmem:[%s8] sm:$0x1]
        %v3396 = vlaneseq
        %v3397 = vshrl.u32 %v3396, 7
        %v3398 = vsub.s32 0, %v3397
        %v3399 = vrot.slane %v3394, %v3398
        %v3417 = vunpack.c.l.b16 %v3378
        %v3418 = vunpack.c.l.b16 %v3379
        %v3419 = vunpack.c.l.b16 %v3380
        %v3420 = vunpack.c.l.b16 %v3381
        %v3421 = vunpack.c.l.b16 %v3382
        %v3422 = vunpack.c.l.b16 %v3383
        %v3423 = vunpack.c.l.b16 %v3384
        %v3424 = vunpack.c.l.b16 %v3385
        %v3425 = vunpack.c.l.b16 %v3386
        %v3426 = vunpack.c.l.b16 %v3387
        %v3427 = vunpack.c.l.b16 %v3388
        %v3428 = vunpack.c.l.b16 %v3389
        %v3429 = vunpack.c.l.b16 %v3390
        %v3430 = vunpack.c.l.b16 %v3391
        %v3431 = vunpack.c.l.b16 %v3392
        %v3432 = vunpack.c.l.b16 %v3393
        %v3433 = vpack.c.b16 %v3418, %v3417
        %v3434 = vpack.c.b16 %v3420, %v3419
        %v3435 = vpack.c.b16 %v3422, %v3421
        %v3436 = vpack.c.b16 %v3424, %v3423
        %v3437 = vpack.c.b16 %v3426, %v3425
        %v3438 = vpack.c.b16 %v3428, %v3427
        %v3439 = vpack.c.b16 %v3430, %v3429
        %v3440 = vpack.c.b16 %v3432, %v3431
        %3449 = vmatprep.subr.bf16.mxu0 0
        %3450 = vmatpush1.bf16.msra.mxu0 %v3440
        %3451 = vmatprep.subr.bf16.mxu0 0
        %3452 = vmatpush1.bf16.msra.mxu0 %v3439
        %3453 = vmatprep.subr.bf16.mxu0 0
        %3454 = vmatpush1.bf16.msra.mxu0 %v3438
        %3455 = vmatprep.subr.bf16.mxu0 0
        %3456 = vmatpush1.bf16.msra.mxu0 %v3437
        %3457 = vmatprep.subr.bf16.mxu0 0
        %3458 = vmatpush1.bf16.msra.mxu0 %v3436
        %3459 = vmatprep.subr.bf16.mxu0 0
        %3460 = vmatpush1.bf16.msra.mxu0 %v3435
        %3461 = vmatprep.subr.bf16.mxu0 0
        %3462 = vmatpush1.bf16.msra.mxu0 %v3434
        %3463 = vmatprep.subr.bf16.mxu0 0
        %3464 = vmatpush1.bf16.msra.mxu0 %v3433
        %3465 = vmatprep.subr.bf16.mxu0 0
        %3466 = vmatpush2.bf16.msra.mxu0 0
        %3467 = vmatprep.subr.bf16.mxu0 0
        %3468 = vmatpush2.bf16.msra.mxu0 0
        %3469 = vmatprep.subr.bf16.mxu0 0
        %3470 = vmatpush2.bf16.msra.mxu0 0
        %3471 = vmatprep.subr.bf16.mxu0 0
        %3472 = vmatpush2.bf16.msra.mxu0 0
        %3473 = vmatprep.subr.bf16.mxu0 0
        %3474 = vmatpush2.bf16.msra.mxu0 0
        %3475 = vmatprep.subr.bf16.mxu0 0
        %3476 = vmatpush2.bf16.msra.mxu0 0
        %3477 = vmatprep.subr.bf16.mxu0 0
        %3478 = vmatpush2.bf16.msra.mxu0 0
        %3479 = vmatprep.subr.bf16.mxu0 0
        %3480 = vmatpush2.bf16.msra.mxu0 0
        %3481 = vmatprep.mubr.bf16.mxu0 0
        %3482 = vmatmul.mubr.bf16.gmra.mxu0 %v3377
        %v3483 = vpop.f32.mrf.mxu0
        %v3484 = vadd.f32 %v3399, %v3483
        %v3485 = vpop.f32.mrf.mxu0
        %v3486 = vpop.f32.mrf.mxu0
        %v3487 = vpop.f32.mrf.mxu0
        %3488 = vdwg.mxu0
        %v3489 = vmax.f32 %v3484, 0.0
        %v3490 = vpack.c.bf16 %v3489, %v3489
        %v3491 = vld [vmem:[%s9] sm:$0xf]
        %v3492 = vld [vmem:[%s9 + $0x4] sm:$0xf]
        %v3493 = vld [vmem:[%s9 + $0x8] sm:$0xf]
        %v3494 = vld [vmem:[%s9 + $0xc] sm:$0xf]
        %v3495 = vld [vmem:[%s9 + $0x10] sm:$0xf]
        %v3496 = vld [vmem:[%s9 + $0x14] sm:$0xf]
        %v3497 = vld [vmem:[%s9 + $0x18] sm:$0xf]
        %v3498 = vld [vmem:[%s9 + $0x1c] sm:$0xf]
        %v3499 = vld [vmem:[%s10] sm:$0x1]
        %v3501 = vlaneseq
        %v3502 = vshrl.u32 %v3501, 7
        %v3503 = vsub.s32 0, %v3502
        %v3504 = vrot.slane %v3499, %v3503
        %v3514 = vunpack.c.l.b16 %v3491
        %v3515 = vunpack.c.l.b16 %v3492
        %v3516 = vunpack.c.l.b16 %v3493
        %v3517 = vunpack.c.l.b16 %v3494
        %v3518 = vunpack.c.l.b16 %v3495
        %v3519 = vunpack.c.l.b16 %v3496
        %v3520 = vunpack.c.l.b16 %v3497
        %v3521 = vunpack.c.l.b16 %v3498
        %v3522 = vpack.c.b16 %v3515, %v3514
        %v3523 = vpack.c.b16 %v3517, %v3516
        %v3524 = vpack.c.b16 %v3519, %v3518
        %v3525 = vpack.c.b16 %v3521, %v3520
        %v3531 = vsel %vm837, %v3490, 0
        %3533 = vmatprep.subr.bf16.mxu0 0
        %3534 = vmatpush1.bf16.msra.mxu0 0
        %3535 = vmatprep.subr.bf16.mxu0 0
        %3536 = vmatpush1.bf16.msra.mxu0 0
        %3537 = vmatprep.subr.bf16.mxu0 0
        %3538 = vmatpush1.bf16.msra.mxu0 0
        %3539 = vmatprep.subr.bf16.mxu0 0
        %3540 = vmatpush1.bf16.msra.mxu0 0
        %3541 = vmatprep.subr.bf16.mxu0 0
        %3542 = vmatpush1.bf16.msra.mxu0 %v3525
        %3543 = vmatprep.subr.bf16.mxu0 0
        %3544 = vmatpush1.bf16.msra.mxu0 %v3524
        %3545 = vmatprep.subr.bf16.mxu0 0
        %3546 = vmatpush1.bf16.msra.mxu0 %v3523
        %3547 = vmatprep.subr.bf16.mxu0 0
        %3548 = vmatpush1.bf16.msra.mxu0 %v3522
        %3549 = vmatprep.subr.bf16.mxu0 0
        %3550 = vmatpush2.bf16.msra.mxu0 0
        %3551 = vmatprep.subr.bf16.mxu0 0
        %3552 = vmatpush2.bf16.msra.mxu0 0
        %3553 = vmatprep.subr.bf16.mxu0 0
        %3554 = vmatpush2.bf16.msra.mxu0 0
        %3555 = vmatprep.subr.bf16.mxu0 0
        %3556 = vmatpush2.bf16.msra.mxu0 0
        %3557 = vmatprep.subr.bf16.mxu0 0
        %3558 = vmatpush2.bf16.msra.mxu0 0
        %3559 = vmatprep.subr.bf16.mxu0 0
        %3560 = vmatpush2.bf16.msra.mxu0 0
        %3561 = vmatprep.subr.bf16.mxu0 0
        %3562 = vmatpush2.bf16.msra.mxu0 0
        %3563 = vmatprep.subr.bf16.mxu0 0
        %3564 = vmatpush2.bf16.msra.mxu0 0
        %3565 = vmatprep.mubr.bf16.mxu0 0
        %3566 = vmatmul.mubr.bf16.gmra.mxu0 %v3531
        %v3567 = vpop.f32.mrf.mxu0
        %v3568 = vadd.f32 %v3504, %v3567
        %v3569 = vpop.f32.mrf.mxu0
        %v3570 = vpop.f32.mrf.mxu0
        %v3571 = vpop.f32.mrf.mxu0
        %3572 = vdwg.mxu0
        %v3573 = vmax.f32 %v3568, 0.0
        %v3574 = vld [vmem:[%s11] sm:$0x1]
        %v3576 = vlaneseq
        %v3577 = vshrl.u32 %v3576, 7
        %v3578 = vsub.s32 0, %v3577
        %v3579 = vrot.slane %v3574, %v3578
        %v3581 = vmul.f32 %v3573, %v3579
        %vm3582 = vcmask 261120
        %v3583 = vsel %vm3582, %v3581, 0.0
        %3584 = vadd.xlane.f32.xlu0 %v3583
        %v3585 = vpop.xlane.xlu0 %3584
        %v3586 = vld [vmem:[#allocation2] sm:$0x1]
        %v3588 = vlaneseq
        %v3589 = vshrl.u32 %v3588, 7
        %v3590 = vsub.s32 0, %v3589
        %v3591 = vrot.slane %v3586, %v3590
        %v3593 = vadd.f32 %v3585, %v3591
        %vm3594 = vcmask 7168
        %3595 = vst.msk [vmem:[%s481] sm:$0xff] %vm3594, %v3593
        %p3596 = scmp.lt.s32.totalorder %s28, 2
        %s3597 = scalar_select %p3596, %s28, 2
        %s3598 = smul.addr %s3597, 8
        %s3599 = scalar_lea.vmem %s13, %s3598
        // Predicated region
        $region85: #{tpu_custom_call.1} parent=71 // pred_check
          %p3600 = pneg %p324
        $region86: #{tpu_custom_call.1} parent=71 // pred_check_branch
          %3602 = sbr.rel (%p3600) target = $region88
        $region87: #{tpu_custom_call.1} parent=71 // pred_region
          _
        $region88: #{tpu_custom_call.1} parent=71 // pred_fallthru
          _
      $region72: #{tpu_custom_call.1} parent=5 // pred_fallthru
        _
      %p3603 = scmp.le.s32.totalorder 2, %s23
      // Predicated region
      $region89: #{tpu_custom_call.1} parent=5 // pred_check
        %p3604 = pneg %p3603
      $region90: #{tpu_custom_call.1} parent=5 // pred_check_branch
        %3606 = sbr.rel (%p3604) target = $region92
      $region91: #{tpu_custom_call.1} parent=5 // pred_region
        %s3607 = ssub.s32 %s23, 2
        // Predicated region
        $region93: #{tpu_custom_call.1} parent=91 // pred_check
          %p3608 = pneg %p330
        $region94: #{tpu_custom_call.1} parent=91 // pred_check_branch
          %3610 = sbr.rel (%p3608) target = $region96
        $region95: #{tpu_custom_call.1} parent=91 // pred_region
          %p3611 = scmp.lt.s32.totalorder %s29, 2
          %s3612 = scalar_select %p3611, %s29, 2
          %s3613 = smul.addr %s3612, 8
          %s3614 = scalar_lea.vmem %s13, %s3613
        $region96: #{tpu_custom_call.1} parent=91 // pred_fallthru
          _
      $region92: #{tpu_custom_call.1} parent=5 // pred_fallthru
        _
    $region6: #{tpu_custom_call.1} parent=1 // loop_footer
      %s27 = sadd.s32 1, %s23
    $region7: #{tpu_custom_call.1} parent=1 // loop_footer_branch
      %22 = sbr.rel target = $region3
    $region8: #{tpu_custom_call.1} parent=1 // loop_exit
      _
    %3615 = vsyncpa [#allocation4], 1
    %s3616 = scalar_lea.sflag [#allocation4], 1
    %3617 = vsyncpa %s3616, 1
    %3618 = vsyncpa [#allocation6], 1

</llo_original>
